<compile_context>
chip_gen: v7x
topology: tpu7x:2x2x1
jax: 0.10.0
libtpu: 0.0.40
codegen_flags: <defaults>
</compile_context>

<pallas_src>
import functools

import jax
import jax.numpy as jnp
from jax.experimental import pallas as pl
from jax.experimental.pallas import tpu as pltpu

_EPS = 1e-5

# Raise on v5e (e.g. 100 << 20) when running full-size IR-SE activations; the default
# scoped-VMEM limit is plenty for the shapes exercised in this test.
_VMEM_LIMIT_BYTES = None


def _compiler_params():
    kwargs = dict(dimension_semantics=("parallel",))
    if _VMEM_LIMIT_BYTES is not None:
        kwargs["vmem_limit_bytes"] = _VMEM_LIMIT_BYTES
    return pltpu.CompilerParams(**kwargs)


def _bn_fold(gamma, beta, mean, var):
    """Inference BatchNorm -> per-channel (scale, shift)."""
    s = gamma / jnp.sqrt(var + _EPS)
    return s, beta - mean * s


# ---------------------------------------------------------------------------
# Kernel 1: conv3x3 (stride 1, pad 1) + fused PReLU.
# Input is already BN1-affine'd and zero-padded (done in one XLA pass).
# ---------------------------------------------------------------------------
def _conv3x3_prelu_kernel(xp_ref, w_ref, alpha_ref, o_ref, *, h, w, cin, cout):
    # xp_ref : (1, h+2, w+2, cin) bf16   w_ref: (9, cin, cout) bf16
    # alpha  : (1, cout) f32 PReLU slopes
    m = h * w
    acc = jnp.zeros((m, cout), jnp.float32)
    for t in range(9):                      # static unrolled tap loop
        dy, dx = divmod(t, 3)
        win = xp_ref[0, dy:dy + h, dx:dx + w, :]                # (h, w, cin) bf16
        acc = acc + jax.lax.dot_general(
            win.reshape(m, cin), w_ref[t],
            (((1,), (0,)), ((), ())),
            preferred_element_type=jnp.float32)                 # bf16 x bf16 -> f32
    alpha = alpha_ref[...]
    y = jnp.where(acc >= 0.0, acc, alpha * acc)                 # PReLU epilogue
    o_ref[...] = y.reshape(1, h, w, cout).astype(o_ref.dtype)


def _conv1_bn_prelu(x_nhwc, conv_w, bn_scale, bn_shift, prelu_alpha):
    """BN1 (folded, fused with the zero-pad) -> conv3x3 s=1 -> PReLU. Output bf16."""
    n, h, w, cin = x_nhwc.shape
    cout = conv_w.shape[0]
    # BN1 affine fused with the conv zero-pad: one XLA pass, no standalone kernel.
    xa = x_nhwc * bn_scale + bn_shift
    xp = jnp.pad(xa, ((0, 0), (1, 1), (1, 1), (0, 0))).astype(jnp.bfloat16)
    # torch (Cout, Cin, 3, 3) -> (9, Cin, Cout): lane-dim contraction, no transposes
    # inside the kernel.
    w_taps = jnp.transpose(conv_w, (2, 3, 1, 0)).reshape(9, cin, cout).astype(jnp.bfloat16)
    alpha = prelu_alpha.reshape(1, cout).astype(jnp.float32)

    kernel = functools.partial(_conv3x3_prelu_kernel, h=h, w=w, cin=cin, cout=cout)
    out_bytes = n * h * w * cout * 2
    cost = pl.CostEstimate(
        flops=2 * n * h * w * 9 * cin * cout,
        transcendentals=0,
        bytes_accessed=int(xp.size * xp.dtype.itemsize
                           + w_taps.size * w_taps.dtype.itemsize
                           + alpha.size * alpha.dtype.itemsize + out_bytes))
    return pl.pallas_call(
        kernel,
        out_shape=jax.ShapeDtypeStruct((n, h, w, cout), jnp.bfloat16),
        grid_spec=pltpu.PrefetchScalarGridSpec(
            num_scalar_prefetch=0,
            grid=(n,),
            in_specs=[
                pl.BlockSpec((1, h + 2, w + 2, cin), lambda i: (i, 0, 0, 0)),
                pl.BlockSpec((9, cin, cout), lambda i: (0, 0, 0)),
                pl.BlockSpec((1, cout), lambda i: (0, 0)),
            ],
            out_specs=pl.BlockSpec((1, h, w, cout), lambda i: (i, 0, 0, 0)),
        ),
        compiler_params=_compiler_params(),
        cost_estimate=cost,
    )(xp, w_taps, alpha)


# ---------------------------------------------------------------------------
# Kernel 2: conv3x3(stride) + BN2 + SE (pool/fc1/relu/fc2/sigmoid/gate)
#           + shortcut (identity OR 1x1-conv+BN) + residual add, fully fused.
# ---------------------------------------------------------------------------
def _conv3x3_bn_se_add_kernel(*refs, stride, hr, hout, wout, cmid, cout, c_sc,
                              has_sc_conv):
    if has_sc_conv:
        (ph_ref, w_ref, s2_ref, b2_ref, w1_ref, w2_ref, xs_ref,
         wsc_ref, ssc_ref, bsc_ref, o_ref) = refs
    else:
        (ph_ref, w_ref, s2_ref, b2_ref, w1_ref, w2_ref, xs_ref, o_ref) = refs
        wsc_ref = ssc_ref = bsc_ref = None

    s = stride
    m = hout * wout

    # --- conv2: 9 shifted bf16 matmuls over the phase-decomposed padded input ---
    acc = jnp.zeros((m, cout), jnp.float32)
    for t in range(9):
        dy, dx = divmod(t, 3)
        p = (dy % s) * s + (dx % s)           # which phase block holds this tap
        oy, ox = dy // s, dx // s             # offset inside that phase block
        row0 = p * hr + oy
        win = ph_ref[0, row0:row0 + hout, ox:ox + wout, :]      # (hout, wout, cmid)
        acc = acc + jax.lax.dot_general(
            win.reshape(m, cmid), w_ref[t],
            (((1,), (0,)), ((), ())),
            preferred_element_type=jnp.float32)
    y = acc * s2_ref[...] + b2_ref[...]                          # fused BN2 (f32)

    # --- SE: global average pool -> fc1 -> relu -> fc2 -> sigmoid ---
    pooled = (jnp.sum(y, axis=0, keepdims=True) * (1.0 / m)).astype(jnp.bfloat16)
    hid = jax.lax.dot_general(pooled, w1_ref[...], (((1,), (0,)), ((), ())),
                              preferred_element_type=jnp.float32)        # (1, cr)
    hid = jnp.maximum(hid, 0.0).astype(jnp.bfloat16)
    logit = jax.lax.dot_general(hid, w2_ref[...], (((1,), (0,)), ((), ())),
                                preferred_element_type=jnp.float32)      # (1, cout)
    gate = pl.reciprocal(1.0 + jnp.exp(-logit), approx=True)             # sigmoid

    # --- shortcut: identity (MaxPool2d(1, stride) == subsample) or 1x1-conv + BN ---
    xs = xs_ref[...].reshape(m, c_sc)
    if has_sc_conv:
        sc = jax.lax.dot_general(xs, wsc_ref[...], (((1,), (0,)), ((), ())),
                                 preferred_element_type=jnp.float32)
        sc = sc * ssc_ref[...] + bsc_ref[...]
    else:
        sc = xs.astype(jnp.float32)

    out = y * gate + sc                                          # SE gate + residual
    o_ref[...] = out.reshape(1, hout, wout, cout).astype(o_ref.dtype)


def _conv2_bn_se_shortcut(y, conv_w, s2, b2, se_fc1, se_fc2, xs, shortcut, *,
                          stride, out_dtype):
    """conv3x3(stride) + BN2 + SE + shortcut + add, one pallas_call.

    y        : (n, h, w, cmid) bf16 NHWC (conv1 output)
    xs       : shortcut input, already subsampled to (n, hout, wout, c_sc)
    shortcut : None (identity, c_sc == cout) or (w_1x1_oihw, bn_scale, bn_shift)
    """
    n, h, w, cmid = y.shape
    cout = conv_w.shape[0]
    s = stride
    assert s in (1, 2), "phase decomposition written/validated for stride in {1, 2}"
    hout = (h - 1) // s + 1
    wout = (w - 1) // s + 1
    hr = hout + (2 // s)          # rows per phase block (parenthesised on purpose)
    wr = wout + (2 // s)

    # Zero-pad (padding=1) and phase-decompose so every in-kernel tap window is a
    # contiguous static slice even for stride 2 (single XLA relayout pass over bf16).
    # TODO(synk): have conv1 emit this layout directly to drop this extra pass.
    yp = jnp.pad(y, ((0, 0),
                     (1, 1 + s * hr - (h + 2)),
                     (1, 1 + s * wr - (w + 2)),
                     (0, 0)))
    ph = yp.reshape(n, hr, s, wr, s, cmid)
    ph = jnp.transpose(ph, (0, 2, 4, 1, 3, 5)).reshape(n, s * s * hr, wr, cmid)

    w_taps = jnp.transpose(conv_w, (2, 3, 1, 0)).reshape(9, cmid, cout).astype(jnp.bfloat16)
    cr = se_fc1.shape[0]
    w1 = jnp.transpose(se_fc1[:, :, 0, 0], (1, 0)).astype(jnp.bfloat16)   # (cout, cr)
    w2 = jnp.transpose(se_fc2[:, :, 0, 0], (1, 0)).astype(jnp.bfloat16)   # (cr, cout)
    s2 = s2.reshape(1, cout).astype(jnp.float32)
    b2 = b2.reshape(1, cout).astype(jnp.float32)

    has_sc_conv = shortcut is not None
    c_sc = xs.shape[-1]

    in_specs = [
        pl.BlockSpec((1, s * s * hr, wr, cmid), lambda i: (i, 0, 0, 0)),
        pl.BlockSpec((9, cmid, cout), lambda i: (0, 0, 0)),
        pl.BlockSpec((1, cout), lambda i: (0, 0)),
        pl.BlockSpec((1, cout), lambda i: (0, 0)),
        pl.BlockSpec((cout, cr), lambda i: (0, 0)),
        pl.BlockSpec((cr, cout), lambda i: (0, 0)),
        pl.BlockSpec((1, hout, wout, c_sc), lambda i: (i, 0, 0, 0)),
    ]
    inputs = [ph, w_taps, s2, b2, w1, w2, xs]
    flops = 2 * n * hout * wout * 9 * cmid * cout + 4 * n * cout * cr
    if has_sc_conv:
        wsc, ssc, bsc = shortcut
        wsc = jnp.transpose(wsc[:, :, 0, 0], (1, 0)).astype(jnp.bfloat16)  # (c_sc, cout)
        in_specs += [
            pl.BlockSpec((c_sc, cout), lambda i: (0, 0)),
            pl.BlockSpec((1, cout), lambda i: (0, 0)),
            pl.BlockSpec((1, cout), lambda i: (0, 0)),
        ]
        inputs += [wsc, ssc.reshape(1, cout).astype(jnp.float32),
                   bsc.reshape(1, cout).astype(jnp.float32)]
        flops += 2 * n * hout * wout * c_sc * cout

    kernel = functools.partial(
        _conv3x3_bn_se_add_kernel, stride=s, hr=hr, hout=hout, wout=wout,
        cmid=cmid, cout=cout, c_sc=c_sc, has_sc_conv=has_sc_conv)

    out_bytes = n * hout * wout * cout * jnp.dtype(out_dtype).itemsize
    cost = pl.CostEstimate(
        flops=flops,
        transcendentals=n * cout,
        bytes_accessed=int(sum(a.size * a.dtype.itemsize for a in inputs) + out_bytes))

    return pl.pallas_call(
        kernel,
        out_shape=jax.ShapeDtypeStruct((n, hout, wout, cout), out_dtype),
        grid_spec=pltpu.PrefetchScalarGridSpec(
            num_scalar_prefetch=0,
            grid=(n,),
            in_specs=in_specs,
            out_specs=pl.BlockSpec((1, hout, wout, cout), lambda i: (i, 0, 0, 0)),
        ),
        compiler_params=_compiler_params(),
        cost_estimate=cost,
    )(*inputs)


# ---------------------------------------------------------------------------
# Full bottleneck_IR_SE forward (inference)
# ---------------------------------------------------------------------------
def bottleneck_ir_se_forward(x_nchw, params, *, stride):
    """x_nchw: (N, Cin, H, W), same layout as the PyTorch module."""
    n, cin, h, w = x_nchw.shape
    depth = params["conv1_w"].shape[0]
    assert stride in (1, 2)
    x = jnp.transpose(x_nchw, (0, 2, 3, 1))            # NHWC: channels on lanes

    # residual stage 1: BN1 (folded, fused with pad) -> conv3x3 s=1 -> PReLU
    s1, b1 = _bn_fold(params["bn1_gamma"], params["bn1_beta"],
                      params["bn1_mean"], params["bn1_var"])
    y = _conv1_bn_prelu(x, params["conv1_w"], s1, b1, params["prelu_alpha"])

    # shortcut input (MaxPool2d(1, stride) == strided subsample)
    xs = x[:, ::stride, ::stride, :]
    if cin == depth:
        shortcut = None                                 # identity shortcut
    else:
        ssc, bsc = _bn_fold(params["short_bn_gamma"], params["short_bn_beta"],
                            params["short_bn_mean"], params["short_bn_var"])
        shortcut = (params["short_conv_w"], ssc, bsc)
        xs = xs.astype(jnp.bfloat16)                    # MXU operand for the 1x1 conv

    # residual stage 2 + BN2 + SE + shortcut + residual add, all fused in one kernel
    s2, b2 = _bn_fold(params["bn2_gamma"], params["bn2_beta"],
                      params["bn2_mean"], params["bn2_var"])
    out = _conv2_bn_se_shortcut(y, params["conv2_w"], s2, b2,
                                params["se_fc1_w"], params["se_fc2_w"],
                                xs, shortcut, stride=stride,
                                out_dtype=x_nchw.dtype)
    return jnp.transpose(out, (0, 3, 1, 2))             # back to NCHW


# ---------------------------------------------------------------------------
# Pure-JAX (XLA, f32) reference mirroring the PyTorch module, for verification.
# ---------------------------------------------------------------------------
def _reference(x, params, *, stride):
    def bn(t, g, b, m, v):
        s = (g / jnp.sqrt(v + _EPS))[None, :, None, None]
        return (t - m[None, :, None, None]) * s + b[None, :, None, None]

    def conv(t, w, s, p):
        return jax.lax.conv_general_dilated(
            t, w, window_strides=(s, s), padding=((p, p), (p, p)),
            dimension_numbers=("NCHW", "OIHW", "NCHW"),
            precision=jax.lax.Precision.HIGHEST)

    cin = x.shape[1]
    depth = params["conv1_w"].shape[0]
    y = bn(x, params["bn1_gamma"], params["bn1_beta"], params["bn1_mean"], params["bn1_var"])
    y = conv(y, params["conv1_w"], 1, 1)
    a = params["prelu_alpha"][None, :, None, None]
    y = jnp.where(y >= 0, y, a * y)
    y = conv(y, params["conv2_w"], stride, 1)
    y = bn(y, params["bn2_gamma"], params["bn2_beta"], params["bn2_mean"], params["bn2_var"])
    pooled = jnp.mean(y, axis=(2, 3), keepdims=True)
    hid = jnp.maximum(conv(pooled, params["se_fc1_w"], 1, 0), 0.0)
    gate = jax.nn.sigmoid(conv(hid, params["se_fc2_w"], 1, 0))
    res = y * gate
    if cin == depth:
        sc = x[:, :, ::stride, ::stride]
    else:
        sc = bn(conv(x, params["short_conv_w"], stride, 0),
                params["short_bn_gamma"], params["short_bn_beta"],
                params["short_bn_mean"], params["short_bn_var"])
    return res + sc


if __name__ == "__main__":
    key = jax.random.PRNGKey(0)

    def make_params(k, cin, depth, reduction=16):
        ks = jax.random.split(k, 18)

        def normal(kk, shape, s=1.0):
            return s * jax.random.normal(kk, shape, dtype=jnp.float32)

        cr = depth // reduction
        return {
            "bn1_gamma": 1.0 + 0.1 * normal(ks[0], (cin,)),
            "bn1_beta": 0.1 * normal(ks[1], (cin,)),
            "bn1_mean": 0.1 * normal(ks[2], (cin,)),
            "bn1_var": jax.random.uniform(ks[3], (cin,), jnp.float32, 0.5, 1.5),
            "conv1_w": normal(ks[4], (depth, cin, 3, 3), 0.1),
            "prelu_alpha": 0.25 + 0.1 * jax.random.uniform(ks[5], (depth,), jnp.float32),
            "conv2_w": normal(ks[6], (depth, depth, 3, 3), 0.1),
            "bn2_gamma": 1.0 + 0.1 * normal(ks[7], (depth,)),
            "bn2_beta": 0.1 * normal(ks[8], (depth,)),
            "bn2_mean": 0.1 * normal(ks[9], (depth,)),
            "bn2_var": jax.random.uniform(ks[10], (depth,), jnp.float32, 0.5, 1.5),
            "se_fc1_w": normal(ks[11], (cr, depth, 1, 1), 0.1),
            "se_fc2_w": normal(ks[12], (depth, cr, 1, 1), 0.1),
            "short_conv_w": normal(ks[13], (depth, cin, 1, 1), 0.1),
            "short_bn_gamma": 1.0 + 0.1 * normal(ks[14], (depth,)),
            "short_bn_beta": 0.1 * normal(ks[15], (depth,)),
            "short_bn_mean": 0.1 * normal(ks[16], (depth,)),
            "short_bn_var": jax.random.uniform(ks[17], (depth,), jnp.float32, 0.5, 1.5),
        }

    def run_case(k, n, cin, depth, hw, stride):
        kx, kp = jax.random.split(k)
        x = jax.random.normal(kx, (n, cin, hw, hw), dtype=jnp.float32)
        params = make_params(kp, cin, depth)
        out = jax.block_until_ready(bottleneck_ir_se_forward(x, params, stride=stride))
        ref = _reference(x, params, stride=stride)
        hout = (hw - 1) // stride + 1
        assert out.shape == ref.shape == (n, depth, hout, hout), (out.shape, ref.shape)
        max_err = float(jnp.max(jnp.abs(out - ref)))
        rel_err = float(jnp.linalg.norm(out - ref) / jnp.linalg.norm(ref))
        # bf16 MXU operands (per the perf review) -> tolerance is bf16-level, not f32.
        assert rel_err < 5e-2 and max_err < 3.5e-1, (rel_err, max_err)

    # conv+BN shortcut branch (in_channel != depth), stride 2
    run_case(jax.random.fold_in(key, 0), n=2, cin=32, depth=64, hw=16, stride=2)
    # identity (MaxPool2d(1, 1)) shortcut branch (in_channel == depth), stride 1
    run_case(jax.random.fold_in(key, 1), n=2, cin=64, depth=64, hw=16, stride=1)

    print("KERNEL_OK")
</pallas_src>

<mosaic_0001>
module attributes {stable_mosaic.version = 11 : i64} {
  func.func @_conv3x3_prelu_kernel(%arg0: i32, %arg1: memref<1x18x18x32xbf16, #tpu.memory_space<vmem>>, %arg2: memref<9x32x64xbf16, #tpu.memory_space<vmem>>, %arg3: memref<1x64xf32, #tpu.memory_space<vmem>>, %arg4: memref<1x16x16x64xbf16, #tpu.memory_space<vmem>>) attributes {dimension_semantics = [#tpu.dimension_semantics<parallel>], iteration_bounds = array<i64: 2>, scalar_prefetch = 0 : i64, scratch_operands = 0 : i64, tpu.core_type = #tpu.core_type<tc>, window_params = [{transform_indices = @transform_0, window_bounds = array<i64: 1, 18, 18, 32>}, {pipeline_mode = #tpu.pipeline_mode<synchronous>, transform_indices = @transform_1, window_bounds = array<i64: 9, 32, 64>}, {pipeline_mode = #tpu.pipeline_mode<synchronous>, transform_indices = @transform_2, window_bounds = array<i64: 1, 64>}, {transform_indices = @transform_3, window_bounds = array<i64: 1, 16, 16, 64>}]} {
    %cst = arith.constant 0.000000e+00 : f32
    %0 = vector.broadcast %cst : f32 to vector<256x64xf32>
    %c0 = arith.constant 0 : index
    %c0_0 = arith.constant 0 : index
    %c0_1 = arith.constant 0 : index
    %c0_2 = arith.constant 0 : index
    %1 = vector.load %arg1[%c0, %c0_0, %c0_1, %c0_2] : memref<1x18x18x32xbf16, #tpu.memory_space<vmem>>, vector<1x16x16x32xbf16>
    %2 = vector.shape_cast %1 : vector<1x16x16x32xbf16> to vector<16x16x32xbf16>
    %3 = vector.shape_cast %2 : vector<16x16x32xbf16> to vector<256x32xbf16>
    %c0_3 = arith.constant 0 : index
    %c0_4 = arith.constant 0 : index
    %c0_5 = arith.constant 0 : index
    %4 = vector.load %arg2[%c0_3, %c0_4, %c0_5] : memref<9x32x64xbf16, #tpu.memory_space<vmem>>, vector<1x32x64xbf16>
    %5 = vector.shape_cast %4 : vector<1x32x64xbf16> to vector<32x64xbf16>
    %cst_6 = arith.constant dense<0.000000e+00> : vector<256x64xf32>
    %6 = tpu.matmul %3, %5, %cst_6 {dimension_numbers = #tpu.dot_dimension_numbers<[1], [0], [0], [1], [0, 0, 1, 1], [], []>} : vector<256x32xbf16>, vector<32x64xbf16>, vector<256x64xf32> -> vector<256x64xf32>
    %7 = arith.addf %0, %6 : vector<256x64xf32>
    %c0_7 = arith.constant 0 : index
    %c0_8 = arith.constant 0 : index
    %c1 = arith.constant 1 : index
    %c0_9 = arith.constant 0 : index
    %8 = vector.load %arg1[%c0_7, %c0_8, %c1, %c0_9] : memref<1x18x18x32xbf16, #tpu.memory_space<vmem>>, vector<1x16x16x32xbf16>
    %9 = vector.shape_cast %8 : vector<1x16x16x32xbf16> to vector<16x16x32xbf16>
    %10 = vector.shape_cast %9 : vector<16x16x32xbf16> to vector<256x32xbf16>
    %c1_10 = arith.constant 1 : index
    %c0_11 = arith.constant 0 : index
    %c0_12 = arith.constant 0 : index
    %11 = vector.load %arg2[%c1_10, %c0_11, %c0_12] : memref<9x32x64xbf16, #tpu.memory_space<vmem>>, vector<1x32x64xbf16>
    %12 = vector.shape_cast %11 : vector<1x32x64xbf16> to vector<32x64xbf16>
    %cst_13 = arith.constant dense<0.000000e+00> : vector<256x64xf32>
    %13 = tpu.matmul %10, %12, %cst_13 {dimension_numbers = #tpu.dot_dimension_numbers<[1], [0], [0], [1], [0, 0, 1, 1], [], []>} : vector<256x32xbf16>, vector<32x64xbf16>, vector<256x64xf32> -> vector<256x64xf32>
    %14 = arith.addf %7, %13 : vector<256x64xf32>
    %c0_14 = arith.constant 0 : index
    %c0_15 = arith.constant 0 : index
    %c2 = arith.constant 2 : index
    %c0_16 = arith.constant 0 : index
    %15 = vector.load %arg1[%c0_14, %c0_15, %c2, %c0_16] : memref<1x18x18x32xbf16, #tpu.memory_space<vmem>>, vector<1x16x16x32xbf16>
    %16 = vector.shape_cast %15 : vector<1x16x16x32xbf16> to vector<16x16x32xbf16>
    %17 = vector.shape_cast %16 : vector<16x16x32xbf16> to vector<256x32xbf16>
    %c2_17 = arith.constant 2 : index
    %c0_18 = arith.constant 0 : index
    %c0_19 = arith.constant 0 : index
    %18 = vector.load %arg2[%c2_17, %c0_18, %c0_19] : memref<9x32x64xbf16, #tpu.memory_space<vmem>>, vector<1x32x64xbf16>
    %19 = vector.shape_cast %18 : vector<1x32x64xbf16> to vector<32x64xbf16>
    %cst_20 = arith.constant dense<0.000000e+00> : vector<256x64xf32>
    %20 = tpu.matmul %17, %19, %cst_20 {dimension_numbers = #tpu.dot_dimension_numbers<[1], [0], [0], [1], [0, 0, 1, 1], [], []>} : vector<256x32xbf16>, vector<32x64xbf16>, vector<256x64xf32> -> vector<256x64xf32>
    %21 = arith.addf %14, %20 : vector<256x64xf32>
    %c0_21 = arith.constant 0 : index
    %c1_22 = arith.constant 1 : index
    %c0_23 = arith.constant 0 : index
    %c0_24 = arith.constant 0 : index
    %22 = vector.load %arg1[%c0_21, %c1_22, %c0_23, %c0_24] : memref<1x18x18x32xbf16, #tpu.memory_space<vmem>>, vector<1x16x16x32xbf16>
    %23 = vector.shape_cast %22 : vector<1x16x16x32xbf16> to vector<16x16x32xbf16>
    %24 = vector.shape_cast %23 : vector<16x16x32xbf16> to vector<256x32xbf16>
    %c3 = arith.constant 3 : index
    %c0_25 = arith.constant 0 : index
    %c0_26 = arith.constant 0 : index
    %25 = vector.load %arg2[%c3, %c0_25, %c0_26] : memref<9x32x64xbf16, #tpu.memory_space<vmem>>, vector<1x32x64xbf16>
    %26 = vector.shape_cast %25 : vector<1x32x64xbf16> to vector<32x64xbf16>
    %cst_27 = arith.constant dense<0.000000e+00> : vector<256x64xf32>
    %27 = tpu.matmul %24, %26, %cst_27 {dimension_numbers = #tpu.dot_dimension_numbers<[1], [0], [0], [1], [0, 0, 1, 1], [], []>} : vector<256x32xbf16>, vector<32x64xbf16>, vector<256x64xf32> -> vector<256x64xf32>
    %28 = arith.addf %21, %27 : vector<256x64xf32>
    %c0_28 = arith.constant 0 : index
    %c1_29 = arith.constant 1 : index
    %c1_30 = arith.constant 1 : index
    %c0_31 = arith.constant 0 : index
    %29 = vector.load %arg1[%c0_28, %c1_29, %c1_30, %c0_31] : memref<1x18x18x32xbf16, #tpu.memory_space<vmem>>, vector<1x16x16x32xbf16>
    %30 = vector.shape_cast %29 : vector<1x16x16x32xbf16> to vector<16x16x32xbf16>
    %31 = vector.shape_cast %30 : vector<16x16x32xbf16> to vector<256x32xbf16>
    %c4 = arith.constant 4 : index
    %c0_32 = arith.constant 0 : index
    %c0_33 = arith.constant 0 : index
    %32 = vector.load %arg2[%c4, %c0_32, %c0_33] : memref<9x32x64xbf16, #tpu.memory_space<vmem>>, vector<1x32x64xbf16>
    %33 = vector.shape_cast %32 : vector<1x32x64xbf16> to vector<32x64xbf16>
    %cst_34 = arith.constant dense<0.000000e+00> : vector<256x64xf32>
    %34 = tpu.matmul %31, %33, %cst_34 {dimension_numbers = #tpu.dot_dimension_numbers<[1], [0], [0], [1], [0, 0, 1, 1], [], []>} : vector<256x32xbf16>, vector<32x64xbf16>, vector<256x64xf32> -> vector<256x64xf32>
    %35 = arith.addf %28, %34 : vector<256x64xf32>
    %c0_35 = arith.constant 0 : index
    %c1_36 = arith.constant 1 : index
    %c2_37 = arith.constant 2 : index
    %c0_38 = arith.constant 0 : index
    %36 = vector.load %arg1[%c0_35, %c1_36, %c2_37, %c0_38] : memref<1x18x18x32xbf16, #tpu.memory_space<vmem>>, vector<1x16x16x32xbf16>
    %37 = vector.shape_cast %36 : vector<1x16x16x32xbf16> to vector<16x16x32xbf16>
    %38 = vector.shape_cast %37 : vector<16x16x32xbf16> to vector<256x32xbf16>
    %c5 = arith.constant 5 : index
    %c0_39 = arith.constant 0 : index
    %c0_40 = arith.constant 0 : index
    %39 = vector.load %arg2[%c5, %c0_39, %c0_40] : memref<9x32x64xbf16, #tpu.memory_space<vmem>>, vector<1x32x64xbf16>
    %40 = vector.shape_cast %39 : vector<1x32x64xbf16> to vector<32x64xbf16>
    %cst_41 = arith.constant dense<0.000000e+00> : vector<256x64xf32>
    %41 = tpu.matmul %38, %40, %cst_41 {dimension_numbers = #tpu.dot_dimension_numbers<[1], [0], [0], [1], [0, 0, 1, 1], [], []>} : vector<256x32xbf16>, vector<32x64xbf16>, vector<256x64xf32> -> vector<256x64xf32>
    %42 = arith.addf %35, %41 : vector<256x64xf32>
    %c0_42 = arith.constant 0 : index
    %c2_43 = arith.constant 2 : index
    %c0_44 = arith.constant 0 : index
    %c0_45 = arith.constant 0 : index
    %43 = vector.load %arg1[%c0_42, %c2_43, %c0_44, %c0_45] : memref<1x18x18x32xbf16, #tpu.memory_space<vmem>>, vector<1x16x16x32xbf16>
    %44 = vector.shape_cast %43 : vector<1x16x16x32xbf16> to vector<16x16x32xbf16>
    %45 = vector.shape_cast %44 : vector<16x16x32xbf16> to vector<256x32xbf16>
    %c6 = arith.constant 6 : index
    %c0_46 = arith.constant 0 : index
    %c0_47 = arith.constant 0 : index
    %46 = vector.load %arg2[%c6, %c0_46, %c0_47] : memref<9x32x64xbf16, #tpu.memory_space<vmem>>, vector<1x32x64xbf16>
    %47 = vector.shape_cast %46 : vector<1x32x64xbf16> to vector<32x64xbf16>
    %cst_48 = arith.constant dense<0.000000e+00> : vector<256x64xf32>
    %48 = tpu.matmul %45, %47, %cst_48 {dimension_numbers = #tpu.dot_dimension_numbers<[1], [0], [0], [1], [0, 0, 1, 1], [], []>} : vector<256x32xbf16>, vector<32x64xbf16>, vector<256x64xf32> -> vector<256x64xf32>
    %49 = arith.addf %42, %48 : vector<256x64xf32>
    %c0_49 = arith.constant 0 : index
    %c2_50 = arith.constant 2 : index
    %c1_51 = arith.constant 1 : index
    %c0_52 = arith.constant 0 : index
    %50 = vector.load %arg1[%c0_49, %c2_50, %c1_51, %c0_52] : memref<1x18x18x32xbf16, #tpu.memory_space<vmem>>, vector<1x16x16x32xbf16>
    %51 = vector.shape_cast %50 : vector<1x16x16x32xbf16> to vector<16x16x32xbf16>
    %52 = vector.shape_cast %51 : vector<16x16x32xbf16> to vector<256x32xbf16>
    %c7 = arith.constant 7 : index
    %c0_53 = arith.constant 0 : index
    %c0_54 = arith.constant 0 : index
    %53 = vector.load %arg2[%c7, %c0_53, %c0_54] : memref<9x32x64xbf16, #tpu.memory_space<vmem>>, vector<1x32x64xbf16>
    %54 = vector.shape_cast %53 : vector<1x32x64xbf16> to vector<32x64xbf16>
    %cst_55 = arith.constant dense<0.000000e+00> : vector<256x64xf32>
    %55 = tpu.matmul %52, %54, %cst_55 {dimension_numbers = #tpu.dot_dimension_numbers<[1], [0], [0], [1], [0, 0, 1, 1], [], []>} : vector<256x32xbf16>, vector<32x64xbf16>, vector<256x64xf32> -> vector<256x64xf32>
    %56 = arith.addf %49, %55 : vector<256x64xf32>
    %c0_56 = arith.constant 0 : index
    %c2_57 = arith.constant 2 : index
    %c2_58 = arith.constant 2 : index
    %c0_59 = arith.constant 0 : index
    %57 = vector.load %arg1[%c0_56, %c2_57, %c2_58, %c0_59] : memref<1x18x18x32xbf16, #tpu.memory_space<vmem>>, vector<1x16x16x32xbf16>
    %58 = vector.shape_cast %57 : vector<1x16x16x32xbf16> to vector<16x16x32xbf16>
    %59 = vector.shape_cast %58 : vector<16x16x32xbf16> to vector<256x32xbf16>
    %c8 = arith.constant 8 : index
    %c0_60 = arith.constant 0 : index
    %c0_61 = arith.constant 0 : index
    %60 = vector.load %arg2[%c8, %c0_60, %c0_61] : memref<9x32x64xbf16, #tpu.memory_space<vmem>>, vector<1x32x64xbf16>
    %61 = vector.shape_cast %60 : vector<1x32x64xbf16> to vector<32x64xbf16>
    %cst_62 = arith.constant dense<0.000000e+00> : vector<256x64xf32>
    %62 = tpu.matmul %59, %61, %cst_62 {dimension_numbers = #tpu.dot_dimension_numbers<[1], [0], [0], [1], [0, 0, 1, 1], [], []>} : vector<256x32xbf16>, vector<32x64xbf16>, vector<256x64xf32> -> vector<256x64xf32>
    %63 = arith.addf %56, %62 : vector<256x64xf32>
    %c0_63 = arith.constant 0 : index
    %c0_64 = arith.constant 0 : index
    %64 = vector.load %arg3[%c0_63, %c0_64] : memref<1x64xf32, #tpu.memory_space<vmem>>, vector<1x64xf32>
    %cst_65 = arith.constant 0.000000e+00 : f32
    %65 = vector.broadcast %cst_65 : f32 to vector<256x64xf32>
    %66 = arith.cmpf oge, %63, %65 : vector<256x64xf32>
    %67 = vector.broadcast %64 : vector<1x64xf32> to vector<256x64xf32>
    %68 = arith.mulf %67, %63 : vector<256x64xf32>
    %69 = arith.select %66, %63, %68 : vector<256x64xi1>, vector<256x64xf32>
    %70 = vector.shape_cast %69 : vector<256x64xf32> to vector<1x16x16x64xf32>
    %71 = arith.truncf %70 : vector<1x16x16x64xf32> to vector<1x16x16x64xbf16>
    %c0_66 = arith.constant 0 : index
    %c0_67 = arith.constant 0 : index
    %c0_68 = arith.constant 0 : index
    %c0_69 = arith.constant 0 : index
    %72 = vector.load %arg4[%c0_66, %c0_67, %c0_68, %c0_69] : memref<1x16x16x64xbf16, #tpu.memory_space<vmem>>, vector<1x16x16x64xbf16>
    tpu.vector_store %arg4[%c0_66, %c0_67, %c0_68, %c0_69], %71 {strides = array<i32>} : memref<1x16x16x64xbf16, #tpu.memory_space<vmem>>, vector<1x16x16x64xbf16>,
    return
  }
  func.func @transform_0(%arg0: i32) -> (i32, i32, i32, i32) {
    %c0_i32 = arith.constant 0 : i32
    %c0_i32_0 = arith.constant 0 : i32
    %c0_i32_1 = arith.constant 0 : i32
    %c0_i32_2 = arith.constant 0 : i32
    return %arg0, %c0_i32, %c0_i32_0, %c0_i32_1 : i32, i32, i32, i32
  }
  func.func @transform_1(%arg0: i32) -> (i32, i32, i32) {
    %c0_i32 = arith.constant 0 : i32
    %c0_i32_0 = arith.constant 0 : i32
    %c0_i32_1 = arith.constant 0 : i32
    %c0_i32_2 = arith.constant 0 : i32
    return %c0_i32, %c0_i32_0, %c0_i32_1 : i32, i32, i32
  }
  func.func @transform_2(%arg0: i32) -> (i32, i32) {
    %c0_i32 = arith.constant 0 : i32
    %c0_i32_0 = arith.constant 0 : i32
    %c0_i32_1 = arith.constant 0 : i32
    return %c0_i32, %c0_i32_0 : i32, i32
  }
  func.func @transform_3(%arg0: i32) -> (i32, i32, i32, i32) {
    %c0_i32 = arith.constant 0 : i32
    %c0_i32_0 = arith.constant 0 : i32
    %c0_i32_1 = arith.constant 0 : i32
    %c0_i32_2 = arith.constant 0 : i32
    return %arg0, %c0_i32, %c0_i32_0, %c0_i32_1 : i32, i32, i32, i32
  }
}

</mosaic_0001>

<llo_original>
// kernel: tpu_custom_call.1
$region0: #{tpu_custom_call.1}
  #allocation0 [shape = 'u32[]', space=smem, size = 0x4, offset = 0x4, fixed_abs, tag = 'smem constant byte address 0x4 - core index']
  #allocation1 [shape = 'u32[144,128]{1,0:T(1,128)}', space=vmem, size = 0x12000, scoped, tag = 'internal scratch']
  %s0 = inlined_call_operand.vmem [shape: bf16[2,18,18,32], index: 0, kind: input, shape index: {}]
  %s1 = inlined_call_operand.vmem [shape: bf16[9,32,64], index: 1, kind: input, shape index: {}]
  %s2 = inlined_call_operand.vmem [shape: f32[1,64], index: 2, kind: input, shape index: {}]
  %s3 = inlined_call_operand.hbm [shape: bf16[2,16,16,64], index: 3, kind: output, shape index: {}]
  %s4 = sld [smem:[#allocation0]]
  $region45: #{tpu_custom_call.1} parent=0
    _
  %s6 = ssub.s32 1, %s4
  %s7 = scalar_select 0, %s6, %s4
  $region1: #{tpu_custom_call.1} parent=0
    #allocation2 [shape = 'u8[131072]{0}', space=vmem, size = 0x20000, scoped, tag = 'output window, operand 0']
    #allocation3 [shape = 's32[2]{0}', space=sflag, size = 0x8, scoped, tag = 'scoped memory for tpu_custom_call.1']
    %8 = vsyncpa [#allocation3], 0
    %s9 = scalar_lea.sflag [#allocation3], 1
    %10 = vsyncpa %s9, 0
    loop: start=0, step=1, limit=4
    $region2: #{tpu_custom_call.1} parent=1 // loop_pre_header
      _
    $region3: #{tpu_custom_call.1} parent=1 // loop_header
      %s12 = sphi 0, %s16
      %p13 = scmp.ge.s32.totalorder %s12, 4
      %s22 = sphi 0, %s24
      %s25 = sphi 0, %s22
      %s26 = sphi 0, %s25
      %s42 = sphi 0, %s26
      %s46 = sphi 0, %s46
      %s48 = sphi 0, %s46
      %s49 = sphi 0, %s48
      %s63 = sphi 0, %s49
      %s67 = sphi 0, %s67
      %s69 = sphi 0, %s67
      %s70 = sphi 0, %s69
      %s84 = sphi 0, %s70
      %s90 = sphi 0, %s92
      %s93 = sphi 0, %s90
      %s94 = sphi 0, %s93
      %s110 = sphi 0, %s94
    $region4: #{tpu_custom_call.1} parent=1 // loop_header_branch
      %15 = sbr.rel (%p13) target = $region8
    $region5: #{tpu_custom_call.1} parent=1 // loop_body
      %s17 = ssub.s32 %s12, 1
      %s18 = ssub.s32 %s12, 2
      %s19 = sadd.s32 %s12, 1
      %s20 = ssub.s32 %s12, %s19
      %p21 = scmp.eq.s32.totalorder %s20, 0
      %s23 = sadd.s32 %s22, 1
      %s24 = scalar_select %p21, %s22, %s23
      %p27 = pneg %p21
      %p28 = scmp.eq.s32.totalorder %s12, 1
      %p29 = por %p27, %p28
      %p30 = scmp.ne.s32.totalorder %s22, %s25
      %p31 = scmp.eq.s32.totalorder %s12, 0
      %p32 = por %p30, %p31
      %p33 = scmp.ne.s32.totalorder %s22, %s25
      %p34 = scmp.eq.s32.totalorder %s17, 1
      %p35 = por %p33, %p34
      %p36 = scmp.ne.s32.totalorder %s25, %s26
      %p37 = scmp.eq.s32.totalorder %s17, 0
      %p38 = por %p36, %p37
      %p39 = scmp.ne.s32.totalorder %s25, %s26
      %p40 = scmp.eq.s32.totalorder %s18, 1
      %p41 = por %p39, %p40
      %p43 = scmp.ne.s32.totalorder %s26, %s42
      %p44 = scmp.eq.s32.totalorder %s18, 0
      %p45 = por %p43, %p44
      %s47 = sadd.s32 %s46, 1
      %p50 = scmp.eq.s32.totalorder %s12, 1
      %p51 = scmp.ne.s32.totalorder %s46, %s48
      %p52 = scmp.eq.s32.totalorder %s12, 0
      %p53 = por %p51, %p52
      %p54 = scmp.ne.s32.totalorder %s46, %s48
      %p55 = scmp.eq.s32.totalorder %s17, 1
      %p56 = por %p54, %p55
      %p57 = scmp.ne.s32.totalorder %s48, %s49
      %p58 = scmp.eq.s32.totalorder %s17, 0
      %p59 = por %p57, %p58
      %p60 = scmp.ne.s32.totalorder %s48, %s49
      %p61 = scmp.eq.s32.totalorder %s18, 1
      %p62 = por %p60, %p61
      %p64 = scmp.ne.s32.totalorder %s49, %s63
      %p65 = scmp.eq.s32.totalorder %s18, 0
      %p66 = por %p64, %p65
      %s68 = sadd.s32 %s67, 1
      %p71 = scmp.eq.s32.totalorder %s12, 1
      %p72 = scmp.ne.s32.totalorder %s67, %s69
      %p73 = scmp.eq.s32.totalorder %s12, 0
      %p74 = por %p72, %p73
      %p75 = scmp.ne.s32.totalorder %s67, %s69
      %p76 = scmp.eq.s32.totalorder %s17, 1
      %p77 = por %p75, %p76
      %p78 = scmp.ne.s32.totalorder %s69, %s70
      %p79 = scmp.eq.s32.totalorder %s17, 0
      %p80 = por %p78, %p79
      %p81 = scmp.ne.s32.totalorder %s69, %s70
      %p82 = scmp.eq.s32.totalorder %s18, 1
      %p83 = por %p81, %p82
      %p85 = scmp.ne.s32.totalorder %s70, %s84
      %p86 = scmp.eq.s32.totalorder %s18, 0
      %p87 = por %p85, %p86
      %s88 = ssub.s32 %s12, %s19
      %p89 = scmp.eq.s32.totalorder %s88, 0
      %s91 = sadd.s32 %s90, 1
      %s92 = scalar_select %p89, %s90, %s91
      %p95 = pneg %p89
      %p96 = scmp.eq.s32.totalorder %s12, 1
      %p97 = por %p95, %p96
      %p98 = scmp.ne.s32.totalorder %s90, %s93
      %p99 = scmp.eq.s32.totalorder %s12, 0
      %p100 = por %p98, %p99
      %p101 = scmp.ne.s32.totalorder %s90, %s93
      %p102 = scmp.eq.s32.totalorder %s17, 1
      %p103 = por %p101, %p102
      %p104 = scmp.ne.s32.totalorder %s93, %s94
      %p105 = scmp.eq.s32.totalorder %s17, 0
      %p106 = por %p104, %p105
      %p107 = scmp.ne.s32.totalorder %s93, %s94
      %p108 = scmp.eq.s32.totalorder %s18, 1
      %p109 = por %p107, %p108
      %p111 = scmp.ne.s32.totalorder %s94, %s110
      %p112 = scmp.eq.s32.totalorder %s18, 0
      %p113 = por %p111, %p112
      %p114 = scmp.le.s32.totalorder 1, %s12
      %p115 = scmp.lt.s32.totalorder %s12, 3
      %p116 = pnand %p114, %p115
      %p117 = pneg %p116
      // Predicated region
      $region9: #{tpu_custom_call.1} parent=5 // pred_check
        _
      $region10: #{tpu_custom_call.1} parent=5 // pred_check_branch
        %119 = sbr.rel (%p116) target = $region12
      $region11: #{tpu_custom_call.1} parent=5 // pred_region
        %s120 = ssub.s32 %s12, 1
        // Predicated region
        $region13: #{tpu_custom_call.1} parent=11 // pred_check
          %p121 = pneg %p59
        $region14: #{tpu_custom_call.1} parent=11 // pred_check_branch
          %123 = sbr.rel (%p121) target = $region16
        $region15: #{tpu_custom_call.1} parent=11 // pred_region
          _
        $region16: #{tpu_custom_call.1} parent=11 // pred_fallthru
          _
        // Predicated region
        $region17: #{tpu_custom_call.1} parent=11 // pred_check
          %p124 = pneg %p80
        $region18: #{tpu_custom_call.1} parent=11 // pred_check_branch
          %126 = sbr.rel (%p124) target = $region20
        $region19: #{tpu_custom_call.1} parent=11 // pred_region
          _
        $region20: #{tpu_custom_call.1} parent=11 // pred_fallthru
          _
      $region12: #{tpu_custom_call.1} parent=5 // pred_fallthru
        _
      %p127 = scmp.lt.s32.totalorder %s12, 2
      // Predicated region
      $region21: #{tpu_custom_call.1} parent=5 // pred_check
        %p128 = pneg %p127
      $region22: #{tpu_custom_call.1} parent=5 // pred_check_branch
        %130 = sbr.rel (%p128) target = $region24
      $region23: #{tpu_custom_call.1} parent=5 // pred_region
        // Predicated region
        $region25: #{tpu_custom_call.1} parent=23 // pred_check
          %p131 = pneg %p32
        $region26: #{tpu_custom_call.1} parent=23 // pred_check_branch
          %133 = sbr.rel (%p131) target = $region28
        $region27: #{tpu_custom_call.1} parent=23 // pred_region
          %p134 = scmp.lt.s32.totalorder %s12, 1
          %s135 = scalar_select %p134, %s12, 1
          %s136 = smul.addr %s135, 54
          %s137 = smul.addr %s136, 4
          %s138 = scalar_lea.vmem %s0, %s137
        $region28: #{tpu_custom_call.1} parent=23 // pred_fallthru
          _
      $region24: #{tpu_custom_call.1} parent=5 // pred_fallthru
        _
      %p139 = scmp.le.s32.totalorder 1, %s12
      %p140 = scmp.lt.s32.totalorder %s12, 3
      %p141 = pnand %p139, %p140
      %p142 = pneg %p141
      // Predicated region
      $region29: #{tpu_custom_call.1} parent=5 // pred_check
        _
      $region30: #{tpu_custom_call.1} parent=5 // pred_check_branch
        %144 = sbr.rel (%p141) target = $region32
      $region31: #{tpu_custom_call.1} parent=5 // pred_region
        %s145 = ssub.s32 %s12, 1
        %p146 = scmp.lt.s32.totalorder %s17, 1
        %s147 = scalar_select %p146, %s17, 1
        %s148 = smul.addr %s147, 54
        %s149 = smul.addr %s148, 4
        %s150 = scalar_lea.vmem %s0, %s149
        %p151 = pneg %p38
        %p152 = pneg %p35
        %p153 = pneg %p59
        %p154 = pneg %p56
        %p155 = pneg %p80
        %p156 = pneg %p77
        %p157 = pneg %p106
        %p158 = pneg %p103
        %s159 = sand.u32 %s93, 1
        %s160 = scalar_lea.sflag [#allocation3], %s159
        %s161 = sand.u32 %s93, 1
        %s162 = smul.addr %s161, 128
        %s163 = scalar_lea.vmem [#allocation2], %s162
        %p164 = scmp.lt.s32.totalorder %s17, 1
        %s165 = scalar_select %p164, %s17, 1
        %s166 = smul.addr %s165, 54
        %s167 = smul.addr %s166, 4
        %s168 = scalar_lea.vmem %s0, %s167
        %v170 = vld [vmem:[%s168] sm:$0xf]
        %v171 = vld [vmem:[%s168 + $0x4] sm:$0xf]
        %v172 = vld [vmem:[%s168 + $0xc] sm:$0xf]
        %v173 = vld [vmem:[%s168 + $0x10] sm:$0xf]
        %v174 = vld [vmem:[%s168 + $0x18] sm:$0xf]
        %v175 = vld [vmem:[%s168 + $0x1c] sm:$0xf]
        %v176 = vld [vmem:[%s168 + $0x24] sm:$0xf]
        %v177 = vld [vmem:[%s168 + $0x28] sm:$0xf]
        %v178 = vld [vmem:[%s168 + $0x30] sm:$0xf]
        %v179 = vld [vmem:[%s168 + $0x34] sm:$0xf]
        %v180 = vld [vmem:[%s168 + $0x3c] sm:$0xf]
        %v181 = vld [vmem:[%s168 + $0x40] sm:$0xf]
        %v182 = vld [vmem:[%s168 + $0x48] sm:$0xf]
        %v183 = vld [vmem:[%s168 + $0x4c] sm:$0xf]
        %v184 = vld [vmem:[%s168 + $0x54] sm:$0xf]
        %v185 = vld [vmem:[%s168 + $0x58] sm:$0xf]
        %v186 = vld [vmem:[%s168 + $0x60] sm:$0xf]
        %v187 = vld [vmem:[%s168 + $0x64] sm:$0xf]
        %v188 = vld [vmem:[%s168 + $0x6c] sm:$0xf]
        %v189 = vld [vmem:[%s168 + $0x70] sm:$0xf]
        %v190 = vld [vmem:[%s168 + $0x78] sm:$0xf]
        %v191 = vld [vmem:[%s168 + $0x7c] sm:$0xf]
        %v192 = vld [vmem:[%s168 + $0x84] sm:$0xf]
        %v193 = vld [vmem:[%s168 + $0x88] sm:$0xf]
        %v194 = vld [vmem:[%s168 + $0x90] sm:$0xf]
        %v195 = vld [vmem:[%s168 + $0x94] sm:$0xf]
        %v196 = vld [vmem:[%s168 + $0x9c] sm:$0xf]
        %v197 = vld [vmem:[%s168 + $0xa0] sm:$0xf]
        %v198 = vld [vmem:[%s168 + $0xa8] sm:$0xf]
        %v199 = vld [vmem:[%s168 + $0xac] sm:$0xf]
        %v200 = vld [vmem:[%s168 + $0xb4] sm:$0xf]
        %v201 = vld [vmem:[%s168 + $0xb8] sm:$0xf]
        %v202 = vld [vmem:[%s1] sm:$0xf]
        %v203 = vld [vmem:[%s1 + $0x4] sm:$0xf]
        %v204 = vld [vmem:[%s1 + $0x8] sm:$0xf]
        %v205 = vld [vmem:[%s1 + $0xc] sm:$0xf]
        %v206 = vld [vmem:[%s168 + $0x8] sm:$0x1]
        %v207 = vld [vmem:[%s168 + $0x14] sm:$0x1]
        %v208 = vld [vmem:[%s168 + $0x20] sm:$0x1]
        %v209 = vld [vmem:[%s168 + $0x2c] sm:$0x1]
        %v210 = vld [vmem:[%s168 + $0x38] sm:$0x1]
        %v211 = vld [vmem:[%s168 + $0x44] sm:$0x1]
        %v212 = vld [vmem:[%s168 + $0x50] sm:$0x1]
        %v213 = vld [vmem:[%s168 + $0x5c] sm:$0x1]
        %v214 = vld [vmem:[%s168 + $0x68] sm:$0x1]
        %v215 = vld [vmem:[%s168 + $0x74] sm:$0x1]
        %v216 = vld [vmem:[%s168 + $0x80] sm:$0x1]
        %v217 = vld [vmem:[%s168 + $0x8c] sm:$0x1]
        %v218 = vld [vmem:[%s168 + $0x98] sm:$0x1]
        %v219 = vld [vmem:[%s168 + $0xa4] sm:$0x1]
        %v220 = vld [vmem:[%s168 + $0xb0] sm:$0x1]
        %v221 = vld [vmem:[%s168 + $0xbc] sm:$0x1]
        %vm222 = vsmask.f32 3328
        %vm223 = vsmask.f32 7440
        %vm224 = vmor %vm222, %vm223
        %v226 = vshrl.u32 %v170, 16
        %v228 = vrot.slane %v226, 4
        %v229 = vshll.u32 %v170, 16
        %v231 = vrot.slane %v229, 5
        %v232 = vor.u32 %v228, %v231
        %v233 = vrot.slane %v232, 4
        %v235 = vshll.u32 %v171, 16
        %v237 = vrot.slane %v235, 5
        %v238 = vsel %vm224, %v233, %v237
        %v239 = vshrl.u32 %v171, 16
        %v241 = vrot.slane %v239, 4
        %v242 = vor.u32 %v241, %v237
        %v243 = vrot.slane %v242, 4
        %v245 = vshll.u32 %v206, 16
        %v247 = vrot.slane %v245, 5
        %v248 = vsel %vm224, %v243, %v247
        %v250 = vshrl.u32 %v172, 16
        %v252 = vrot.slane %v250, 4
        %v253 = vshll.u32 %v172, 16
        %v255 = vrot.slane %v253, 5
        %v256 = vor.u32 %v252, %v255
        %v257 = vrot.slane %v256, 4
        %v259 = vshll.u32 %v173, 16
        %v261 = vrot.slane %v259, 5
        %v262 = vsel %vm224, %v257, %v261
        %v263 = vshrl.u32 %v173, 16
        %v265 = vrot.slane %v263, 4
        %v266 = vor.u32 %v265, %v261
        %v267 = vrot.slane %v266, 4
        %v269 = vshll.u32 %v207, 16
        %v271 = vrot.slane %v269, 5
        %v272 = vsel %vm224, %v267, %v271
        %v274 = vshrl.u32 %v174, 16
        %v276 = vrot.slane %v274, 4
        %v277 = vshll.u32 %v174, 16
        %v279 = vrot.slane %v277, 5
        %v280 = vor.u32 %v276, %v279
        %v281 = vrot.slane %v280, 4
        %v283 = vshll.u32 %v175, 16
        %v285 = vrot.slane %v283, 5
        %v286 = vsel %vm224, %v281, %v285
        %v287 = vshrl.u32 %v175, 16
        %v289 = vrot.slane %v287, 4
        %v290 = vor.u32 %v289, %v285
        %v291 = vrot.slane %v290, 4
        %v293 = vshll.u32 %v208, 16
        %v295 = vrot.slane %v293, 5
        %v296 = vsel %vm224, %v291, %v295
        %v298 = vshrl.u32 %v176, 16
        %v300 = vrot.slane %v298, 4
        %v301 = vshll.u32 %v176, 16
        %v303 = vrot.slane %v301, 5
        %v304 = vor.u32 %v300, %v303
        %v305 = vrot.slane %v304, 4
        %v307 = vshll.u32 %v177, 16
        %v309 = vrot.slane %v307, 5
        %v310 = vsel %vm224, %v305, %v309
        %v311 = vshrl.u32 %v177, 16
        %v313 = vrot.slane %v311, 4
        %v314 = vor.u32 %v313, %v309
        %v315 = vrot.slane %v314, 4
        %v317 = vshll.u32 %v209, 16
        %v319 = vrot.slane %v317, 5
        %v320 = vsel %vm224, %v315, %v319
        %v322 = vshrl.u32 %v178, 16
        %v324 = vrot.slane %v322, 4
        %v325 = vshll.u32 %v178, 16
        %v327 = vrot.slane %v325, 5
        %v328 = vor.u32 %v324, %v327
        %v329 = vrot.slane %v328, 4
        %v331 = vshll.u32 %v179, 16
        %v333 = vrot.slane %v331, 5
        %v334 = vsel %vm224, %v329, %v333
        %v335 = vshrl.u32 %v179, 16
        %v337 = vrot.slane %v335, 4
        %v338 = vor.u32 %v337, %v333
        %v339 = vrot.slane %v338, 4
        %v341 = vshll.u32 %v210, 16
        %v343 = vrot.slane %v341, 5
        %v344 = vsel %vm224, %v339, %v343
        %v346 = vshrl.u32 %v180, 16
        %v348 = vrot.slane %v346, 4
        %v349 = vshll.u32 %v180, 16
        %v351 = vrot.slane %v349, 5
        %v352 = vor.u32 %v348, %v351
        %v353 = vrot.slane %v352, 4
        %v355 = vshll.u32 %v181, 16
        %v357 = vrot.slane %v355, 5
        %v358 = vsel %vm224, %v353, %v357
        %v359 = vshrl.u32 %v181, 16
        %v361 = vrot.slane %v359, 4
        %v362 = vor.u32 %v361, %v357
        %v363 = vrot.slane %v362, 4
        %v365 = vshll.u32 %v211, 16
        %v367 = vrot.slane %v365, 5
        %v368 = vsel %vm224, %v363, %v367
        %v370 = vshrl.u32 %v182, 16
        %v372 = vrot.slane %v370, 4
        %v373 = vshll.u32 %v182, 16
        %v375 = vrot.slane %v373, 5
        %v376 = vor.u32 %v372, %v375
        %v377 = vrot.slane %v376, 4
        %v379 = vshll.u32 %v183, 16
        %v381 = vrot.slane %v379, 5
        %v382 = vsel %vm224, %v377, %v381
        %v383 = vshrl.u32 %v183, 16
        %v385 = vrot.slane %v383, 4
        %v386 = vor.u32 %v385, %v381
        %v387 = vrot.slane %v386, 4
        %v389 = vshll.u32 %v212, 16
        %v391 = vrot.slane %v389, 5
        %v392 = vsel %vm224, %v387, %v391
        %v394 = vshrl.u32 %v184, 16
        %v396 = vrot.slane %v394, 4
        %v397 = vshll.u32 %v184, 16
        %v399 = vrot.slane %v397, 5
        %v400 = vor.u32 %v396, %v399
        %v401 = vrot.slane %v400, 4
        %v403 = vshll.u32 %v185, 16
        %v405 = vrot.slane %v403, 5
        %v406 = vsel %vm224, %v401, %v405
        %v407 = vshrl.u32 %v185, 16
        %v409 = vrot.slane %v407, 4
        %v410 = vor.u32 %v409, %v405
        %v411 = vrot.slane %v410, 4
        %v413 = vshll.u32 %v213, 16
        %v415 = vrot.slane %v413, 5
        %v416 = vsel %vm224, %v411, %v415
        %v418 = vshrl.u32 %v186, 16
        %v420 = vrot.slane %v418, 4
        %v421 = vshll.u32 %v186, 16
        %v423 = vrot.slane %v421, 5
        %v424 = vor.u32 %v420, %v423
        %v425 = vrot.slane %v424, 4
        %v427 = vshll.u32 %v187, 16
        %v429 = vrot.slane %v427, 5
        %v430 = vsel %vm224, %v425, %v429
        %v431 = vshrl.u32 %v187, 16
        %v433 = vrot.slane %v431, 4
        %v434 = vor.u32 %v433, %v429
        %v435 = vrot.slane %v434, 4
        %v437 = vshll.u32 %v214, 16
        %v439 = vrot.slane %v437, 5
        %v440 = vsel %vm224, %v435, %v439
        %v442 = vshrl.u32 %v188, 16
        %v444 = vrot.slane %v442, 4
        %v445 = vshll.u32 %v188, 16
        %v447 = vrot.slane %v445, 5
        %v448 = vor.u32 %v444, %v447
        %v449 = vrot.slane %v448, 4
        %v451 = vshll.u32 %v189, 16
        %v453 = vrot.slane %v451, 5
        %v454 = vsel %vm224, %v449, %v453
        %v455 = vshrl.u32 %v189, 16
        %v457 = vrot.slane %v455, 4
        %v458 = vor.u32 %v457, %v453
        %v459 = vrot.slane %v458, 4
        %v461 = vshll.u32 %v215, 16
        %v463 = vrot.slane %v461, 5
        %v464 = vsel %vm224, %v459, %v463
        %v466 = vshrl.u32 %v190, 16
        %v468 = vrot.slane %v466, 4
        %v469 = vshll.u32 %v190, 16
        %v471 = vrot.slane %v469, 5
        %v472 = vor.u32 %v468, %v471
        %v473 = vrot.slane %v472, 4
        %v475 = vshll.u32 %v191, 16
        %v477 = vrot.slane %v475, 5
        %v478 = vsel %vm224, %v473, %v477
        %v479 = vshrl.u32 %v191, 16
        %v481 = vrot.slane %v479, 4
        %v482 = vor.u32 %v481, %v477
        %v483 = vrot.slane %v482, 4
        %v485 = vshll.u32 %v216, 16
        %v487 = vrot.slane %v485, 5
        %v488 = vsel %vm224, %v483, %v487
        %v490 = vshrl.u32 %v192, 16
        %v492 = vrot.slane %v490, 4
        %v493 = vshll.u32 %v192, 16
        %v495 = vrot.slane %v493, 5
        %v496 = vor.u32 %v492, %v495
        %v497 = vrot.slane %v496, 4
        %v499 = vshll.u32 %v193, 16
        %v501 = vrot.slane %v499, 5
        %v502 = vsel %vm224, %v497, %v501
        %v503 = vshrl.u32 %v193, 16
        %v505 = vrot.slane %v503, 4
        %v506 = vor.u32 %v505, %v501
        %v507 = vrot.slane %v506, 4
        %v509 = vshll.u32 %v217, 16
        %v511 = vrot.slane %v509, 5
        %v512 = vsel %vm224, %v507, %v511
        %v514 = vshrl.u32 %v194, 16
        %v516 = vrot.slane %v514, 4
        %v517 = vshll.u32 %v194, 16
        %v519 = vrot.slane %v517, 5
        %v520 = vor.u32 %v516, %v519
        %v521 = vrot.slane %v520, 4
        %v523 = vshll.u32 %v195, 16
        %v525 = vrot.slane %v523, 5
        %v526 = vsel %vm224, %v521, %v525
        %v527 = vshrl.u32 %v195, 16
        %v529 = vrot.slane %v527, 4
        %v530 = vor.u32 %v529, %v525
        %v531 = vrot.slane %v530, 4
        %v533 = vshll.u32 %v218, 16
        %v535 = vrot.slane %v533, 5
        %v536 = vsel %vm224, %v531, %v535
        %v538 = vshrl.u32 %v196, 16
        %v540 = vrot.slane %v538, 4
        %v541 = vshll.u32 %v196, 16
        %v543 = vrot.slane %v541, 5
        %v544 = vor.u32 %v540, %v543
        %v545 = vrot.slane %v544, 4
        %v547 = vshll.u32 %v197, 16
        %v549 = vrot.slane %v547, 5
        %v550 = vsel %vm224, %v545, %v549
        %v551 = vshrl.u32 %v197, 16
        %v553 = vrot.slane %v551, 4
        %v554 = vor.u32 %v553, %v549
        %v555 = vrot.slane %v554, 4
        %v557 = vshll.u32 %v219, 16
        %v559 = vrot.slane %v557, 5
        %v560 = vsel %vm224, %v555, %v559
        %v562 = vshrl.u32 %v198, 16
        %v564 = vrot.slane %v562, 4
        %v565 = vshll.u32 %v198, 16
        %v567 = vrot.slane %v565, 5
        %v568 = vor.u32 %v564, %v567
        %v569 = vrot.slane %v568, 4
        %v571 = vshll.u32 %v199, 16
        %v573 = vrot.slane %v571, 5
        %v574 = vsel %vm224, %v569, %v573
        %v575 = vshrl.u32 %v199, 16
        %v577 = vrot.slane %v575, 4
        %v578 = vor.u32 %v577, %v573
        %v579 = vrot.slane %v578, 4
        %v581 = vshll.u32 %v220, 16
        %v583 = vrot.slane %v581, 5
        %v584 = vsel %vm224, %v579, %v583
        %v586 = vshrl.u32 %v200, 16
        %v588 = vrot.slane %v586, 4
        %v589 = vshll.u32 %v200, 16
        %v591 = vrot.slane %v589, 5
        %v592 = vor.u32 %v588, %v591
        %v593 = vrot.slane %v592, 4
        %v595 = vshll.u32 %v201, 16
        %v597 = vrot.slane %v595, 5
        %v598 = vsel %vm224, %v593, %v597
        %v599 = vshrl.u32 %v201, 16
        %v601 = vrot.slane %v599, 4
        %v602 = vor.u32 %v601, %v597
        %v603 = vrot.slane %v602, 4
        %v605 = vshll.u32 %v221, 16
        %v607 = vrot.slane %v605, 5
        %v608 = vsel %vm224, %v603, %v607
        %s609 = scalar_lea.vmem %s1, 16
        %v610 = vld [vmem:[%s609] sm:$0xf]
        %v611 = vld [vmem:[%s609 + $0x4] sm:$0xf]
        %v612 = vld [vmem:[%s609 + $0x8] sm:$0xf]
        %v613 = vld [vmem:[%s609 + $0xc] sm:$0xf]
        %v614 = vunpack.c.l.b16 %v238
        %v615 = vunpack.c.l.b16 %v248
        %v616 = vunpack.c.l.b16 %v262
        %v617 = vunpack.c.l.b16 %v272
        %v618 = vunpack.c.l.b16 %v286
        %v619 = vunpack.c.l.b16 %v296
        %v620 = vunpack.c.l.b16 %v310
        %v621 = vunpack.c.l.b16 %v320
        %v622 = vunpack.c.l.b16 %v334
        %v623 = vunpack.c.l.b16 %v344
        %v624 = vunpack.c.l.b16 %v358
        %v625 = vunpack.c.l.b16 %v368
        %v626 = vunpack.c.l.b16 %v382
        %v627 = vunpack.c.l.b16 %v392
        %v628 = vunpack.c.l.b16 %v406
        %v629 = vunpack.c.l.b16 %v416
        %v630 = vunpack.c.l.b16 %v430
        %v631 = vunpack.c.l.b16 %v440
        %v632 = vunpack.c.l.b16 %v454
        %v633 = vunpack.c.l.b16 %v464
        %v634 = vunpack.c.l.b16 %v478
        %v635 = vunpack.c.l.b16 %v488
        %v636 = vunpack.c.l.b16 %v502
        %v637 = vunpack.c.l.b16 %v512
        %v638 = vunpack.c.l.b16 %v526
        %v639 = vunpack.c.l.b16 %v536
        %v640 = vunpack.c.l.b16 %v550
        %v641 = vunpack.c.l.b16 %v560
        %v642 = vunpack.c.l.b16 %v574
        %v643 = vunpack.c.l.b16 %v584
        %v644 = vunpack.c.l.b16 %v598
        %v645 = vunpack.c.l.b16 %v608
        %v646 = vpack.c.b16 %v615, %v614
        %v647 = vpack.c.b16 %v617, %v616
        %v648 = vpack.c.b16 %v619, %v618
        %v649 = vpack.c.b16 %v621, %v620
        %v650 = vpack.c.b16 %v623, %v622
        %v651 = vpack.c.b16 %v625, %v624
        %v652 = vpack.c.b16 %v627, %v626
        %v653 = vpack.c.b16 %v629, %v628
        %v654 = vpack.c.b16 %v631, %v630
        %v655 = vpack.c.b16 %v633, %v632
        %v656 = vpack.c.b16 %v635, %v634
        %v657 = vpack.c.b16 %v637, %v636
        %v658 = vpack.c.b16 %v639, %v638
        %v659 = vpack.c.b16 %v641, %v640
        %v660 = vpack.c.b16 %v643, %v642
        %v661 = vpack.c.b16 %v645, %v644
        %v666 = vunpack.c.l.b16 %v610
        %v667 = vunpack.c.l.b16 %v611
        %v668 = vunpack.c.l.b16 %v612
        %v669 = vunpack.c.l.b16 %v613
        %v670 = vpack.c.b16 %v667, %v666
        %v671 = vpack.c.b16 %v669, %v668
        %vm674 = vcmask 261120
        %v676 = vsel %vm674, %v646, 0
        %v679 = vsel %vm674, %v647, 0
        %v682 = vsel %vm674, %v648, 0
        %v685 = vsel %vm674, %v649, 0
        %v688 = vsel %vm674, %v650, 0
        %v691 = vsel %vm674, %v651, 0
        %v694 = vsel %vm674, %v652, 0
        %v697 = vsel %vm674, %v653, 0
        %v700 = vsel %vm674, %v654, 0
        %v703 = vsel %vm674, %v655, 0
        %v706 = vsel %vm674, %v656, 0
        %v709 = vsel %vm674, %v657, 0
        %v712 = vsel %vm674, %v658, 0
        %v715 = vsel %vm674, %v659, 0
        %v718 = vsel %vm674, %v660, 0
        %v721 = vsel %vm674, %v661, 0
        %723 = vmatprep.subr.bf16.mxu0 0
        %724 = vmatpush1.bf16.msra.mxu0 %v670
        %725 = vmatprep.subr.bf16.mxu0 0
        %726 = vmatpush1.bf16.msra.mxu0 %v671
        %727 = vmatprep.subr.bf16.mxu0 0
        %728 = vmatpush1.bf16.msra.mxu0 0
        %729 = vmatprep.subr.bf16.mxu0 0
        %730 = vmatpush1.bf16.msra.mxu0 0
        %731 = vmatprep.subr.bf16.mxu0 0
        %732 = vmatpush1.bf16.msra.mxu0 0
        %733 = vmatprep.subr.bf16.mxu0 0
        %734 = vmatpush1.bf16.msra.mxu0 0
        %735 = vmatprep.subr.bf16.mxu0 0
        %736 = vmatpush1.bf16.msra.mxu0 0
        %737 = vmatprep.subr.bf16.mxu0 0
        %738 = vmatpush1.bf16.msra.mxu0 0
        %739 = vmatprep.subr.bf16.mxu0 0
        %740 = vmatpush1.bf16.msra.mxu0 0
        %741 = vmatprep.subr.bf16.mxu0 0
        %742 = vmatpush1.bf16.msra.mxu0 0
        %743 = vmatprep.subr.bf16.mxu0 0
        %744 = vmatpush1.bf16.msra.mxu0 0
        %745 = vmatprep.subr.bf16.mxu0 0
        %746 = vmatpush1.bf16.msra.mxu0 0
        %747 = vmatprep.subr.bf16.mxu0 0
        %748 = vmatpush1.bf16.msra.mxu0 0
        %749 = vmatprep.subr.bf16.mxu0 0
        %750 = vmatpush1.bf16.msra.mxu0 0
        %751 = vmatprep.subr.bf16.mxu0 0
        %752 = vmatpush1.bf16.msra.mxu0 0
        %753 = vmatprep.subr.bf16.mxu0 0
        %754 = vmatpush1.bf16.msra.mxu0 0
        %755 = vmatprep.mubr.bf16.mxu0 0
        %756 = vmatmul.mubr.bf16.gmra.mrb[0].mxu0 %v676
        %v757 = vpop.f32.mrb[0].mxu0
        %v758 = vadd.f32 0.0, %v757
        %v759 = vpop.f32.mrb[0].mxu0
        %v760 = vpop.f32.mrb[0].mxu0
        %v761 = vadd.f32 0.0, %v760
        %v762 = vpop.f32.mrb[0].mxu0
        %763 = vmatprep.mubr.bf16.mxu0 0
        %764 = vmatmul.mubr.bf16.gmra.mrb[0].mxu0 %v679
        %v765 = vpop.f32.mrb[0].mxu0
        %v766 = vadd.f32 0.0, %v765
        %v767 = vpop.f32.mrb[0].mxu0
        %v768 = vpop.f32.mrb[0].mxu0
        %v769 = vadd.f32 0.0, %v768
        %v770 = vpop.f32.mrb[0].mxu0
        %771 = vmatprep.mubr.bf16.mxu0 0
        %772 = vmatmul.mubr.bf16.gmra.mrb[0].mxu0 %v682
        %v773 = vpop.f32.mrb[0].mxu0
        %v774 = vadd.f32 0.0, %v773
        %v775 = vpop.f32.mrb[0].mxu0
        %v776 = vpop.f32.mrb[0].mxu0
        %v777 = vadd.f32 0.0, %v776
        %v778 = vpop.f32.mrb[0].mxu0
        %779 = vmatprep.mubr.bf16.mxu0 0
        %780 = vmatmul.mubr.bf16.gmra.mrb[0].mxu0 %v685
        %v781 = vpop.f32.mrb[0].mxu0
        %v782 = vadd.f32 0.0, %v781
        %v783 = vpop.f32.mrb[0].mxu0
        %v784 = vpop.f32.mrb[0].mxu0
        %v785 = vadd.f32 0.0, %v784
        %v786 = vpop.f32.mrb[0].mxu0
        %787 = vmatprep.mubr.bf16.mxu0 0
        %788 = vmatmul.mubr.bf16.gmra.mrb[0].mxu0 %v688
        %v789 = vpop.f32.mrb[0].mxu0
        %v790 = vadd.f32 0.0, %v789
        %v791 = vpop.f32.mrb[0].mxu0
        %v792 = vpop.f32.mrb[0].mxu0
        %v793 = vadd.f32 0.0, %v792
        %v794 = vpop.f32.mrb[0].mxu0
        %795 = vmatprep.mubr.bf16.mxu0 0
        %796 = vmatmul.mubr.bf16.gmra.mrb[0].mxu0 %v691
        %v797 = vpop.f32.mrb[0].mxu0
        %v798 = vadd.f32 0.0, %v797
        %v799 = vpop.f32.mrb[0].mxu0
        %v800 = vpop.f32.mrb[0].mxu0
        %v801 = vadd.f32 0.0, %v800
        %v802 = vpop.f32.mrb[0].mxu0
        %803 = vmatprep.mubr.bf16.mxu0 0
        %804 = vmatmul.mubr.bf16.gmra.mrb[0].mxu0 %v694
        %v805 = vpop.f32.mrb[0].mxu0
        %v806 = vadd.f32 0.0, %v805
        %v807 = vpop.f32.mrb[0].mxu0
        %v808 = vpop.f32.mrb[0].mxu0
        %v809 = vadd.f32 0.0, %v808
        %v810 = vpop.f32.mrb[0].mxu0
        %811 = vmatprep.mubr.bf16.mxu0 0
        %812 = vmatmul.mubr.bf16.gmra.mrb[0].mxu0 %v697
        %v813 = vpop.f32.mrb[0].mxu0
        %v814 = vadd.f32 0.0, %v813
        %v815 = vpop.f32.mrb[0].mxu0
        %v816 = vpop.f32.mrb[0].mxu0
        %v817 = vadd.f32 0.0, %v816
        %v818 = vpop.f32.mrb[0].mxu0
        %819 = vmatprep.mubr.bf16.mxu0 0
        %820 = vmatmul.mubr.bf16.gmra.mrb[0].mxu0 %v700
        %v821 = vpop.f32.mrb[0].mxu0
        %v822 = vadd.f32 0.0, %v821
        %v823 = vpop.f32.mrb[0].mxu0
        %v824 = vpop.f32.mrb[0].mxu0
        %v825 = vadd.f32 0.0, %v824
        %v826 = vpop.f32.mrb[0].mxu0
        %827 = vmatprep.mubr.bf16.mxu0 0
        %828 = vmatmul.mubr.bf16.gmra.mrb[0].mxu0 %v703
        %v829 = vpop.f32.mrb[0].mxu0
        %v830 = vadd.f32 0.0, %v829
        %v831 = vpop.f32.mrb[0].mxu0
        %v832 = vpop.f32.mrb[0].mxu0
        %v833 = vadd.f32 0.0, %v832
        %v834 = vpop.f32.mrb[0].mxu0
        %835 = vmatprep.mubr.bf16.mxu0 0
        %836 = vmatmul.mubr.bf16.gmra.mrb[0].mxu0 %v706
        %v837 = vpop.f32.mrb[0].mxu0
        %v838 = vadd.f32 0.0, %v837
        %v839 = vpop.f32.mrb[0].mxu0
        %v840 = vpop.f32.mrb[0].mxu0
        %v841 = vadd.f32 0.0, %v840
        %v842 = vpop.f32.mrb[0].mxu0
        %843 = vmatprep.mubr.bf16.mxu0 0
        %844 = vmatmul.mubr.bf16.gmra.mrb[0].mxu0 %v709
        %v845 = vpop.f32.mrb[0].mxu0
        %v846 = vadd.f32 0.0, %v845
        %v847 = vpop.f32.mrb[0].mxu0
        %v848 = vpop.f32.mrb[0].mxu0
        %v849 = vadd.f32 0.0, %v848
        %v850 = vpop.f32.mrb[0].mxu0
        %851 = vmatprep.mubr.bf16.mxu0 0
        %852 = vmatmul.mubr.bf16.gmra.mrb[0].mxu0 %v712
        %v853 = vpop.f32.mrb[0].mxu0
        %v854 = vadd.f32 0.0, %v853
        %v855 = vpop.f32.mrb[0].mxu0
        %v856 = vpop.f32.mrb[0].mxu0
        %v857 = vadd.f32 0.0, %v856
        %v858 = vpop.f32.mrb[0].mxu0
        %859 = vmatprep.mubr.bf16.mxu0 0
        %860 = vmatmul.mubr.bf16.gmra.mrb[0].mxu0 %v715
        %v861 = vpop.f32.mrb[0].mxu0
        %v862 = vadd.f32 0.0, %v861
        %v863 = vpop.f32.mrb[0].mxu0
        %v864 = vpop.f32.mrb[0].mxu0
        %v865 = vadd.f32 0.0, %v864
        %v866 = vpop.f32.mrb[0].mxu0
        %867 = vmatprep.mubr.bf16.mxu0 0
        %868 = vmatmul.mubr.bf16.gmra.mrb[0].mxu0 %v718
        %v869 = vpop.f32.mrb[0].mxu0
        %v870 = vadd.f32 0.0, %v869
        %v871 = vpop.f32.mrb[0].mxu0
        %v872 = vpop.f32.mrb[0].mxu0
        %v873 = vadd.f32 0.0, %v872
        %v874 = vpop.f32.mrb[0].mxu0
        %875 = vmatprep.mubr.bf16.mxu0 0
        %876 = vmatmul.mubr.bf16.gmra.mrb[0].mxu0 %v721
        %v877 = vpop.f32.mrb[0].mxu0
        %v878 = vadd.f32 0.0, %v877
        %v879 = vpop.f32.mrb[0].mxu0
        %v880 = vpop.f32.mrb[0].mxu0
        %v881 = vadd.f32 0.0, %v880
        %v882 = vpop.f32.mrb[0].mxu0
        %883 = vdwg.mxu0
        %v916 = vunpack.c.l.b16 %v170
        %v917 = vunpack.c.l.b16 %v171
        %v918 = vunpack.c.l.b16 %v172
        %v919 = vunpack.c.l.b16 %v173
        %v920 = vunpack.c.l.b16 %v174
        %v921 = vunpack.c.l.b16 %v175
        %v922 = vunpack.c.l.b16 %v176
        %v923 = vunpack.c.l.b16 %v177
        %v924 = vunpack.c.l.b16 %v178
        %v925 = vunpack.c.l.b16 %v179
        %v926 = vunpack.c.l.b16 %v180
        %v927 = vunpack.c.l.b16 %v181
        %v928 = vunpack.c.l.b16 %v182
        %v929 = vunpack.c.l.b16 %v183
        %v930 = vunpack.c.l.b16 %v184
        %v931 = vunpack.c.l.b16 %v185
        %v932 = vunpack.c.l.b16 %v186
        %v933 = vunpack.c.l.b16 %v187
        %v934 = vunpack.c.l.b16 %v188
        %v935 = vunpack.c.l.b16 %v189
        %v936 = vunpack.c.l.b16 %v190
        %v937 = vunpack.c.l.b16 %v191
        %v938 = vunpack.c.l.b16 %v192
        %v939 = vunpack.c.l.b16 %v193
        %v940 = vunpack.c.l.b16 %v194
        %v941 = vunpack.c.l.b16 %v195
        %v942 = vunpack.c.l.b16 %v196
        %v943 = vunpack.c.l.b16 %v197
        %v944 = vunpack.c.l.b16 %v198
        %v945 = vunpack.c.l.b16 %v199
        %v946 = vunpack.c.l.b16 %v200
        %v947 = vunpack.c.l.b16 %v201
        %v948 = vpack.c.b16 %v917, %v916
        %v949 = vpack.c.b16 %v919, %v918
        %v950 = vpack.c.b16 %v921, %v920
        %v951 = vpack.c.b16 %v923, %v922
        %v952 = vpack.c.b16 %v925, %v924
        %v953 = vpack.c.b16 %v927, %v926
        %v954 = vpack.c.b16 %v929, %v928
        %v955 = vpack.c.b16 %v931, %v930
        %v956 = vpack.c.b16 %v933, %v932
        %v957 = vpack.c.b16 %v935, %v934
        %v958 = vpack.c.b16 %v937, %v936
        %v959 = vpack.c.b16 %v939, %v938
        %v960 = vpack.c.b16 %v941, %v940
        %v961 = vpack.c.b16 %v943, %v942
        %v962 = vpack.c.b16 %v945, %v944
        %v963 = vpack.c.b16 %v947, %v946
        %v968 = vunpack.c.l.b16 %v202
        %v969 = vunpack.c.l.b16 %v203
        %v970 = vunpack.c.l.b16 %v204
        %v971 = vunpack.c.l.b16 %v205
        %v972 = vpack.c.b16 %v969, %v968
        %v973 = vpack.c.b16 %v971, %v970
        %v977 = vsel %vm674, %v948, 0
        %v980 = vsel %vm674, %v949, 0
        %v983 = vsel %vm674, %v950, 0
        %v986 = vsel %vm674, %v951, 0
        %v989 = vsel %vm674, %v952, 0
        %v992 = vsel %vm674, %v953, 0
        %v995 = vsel %vm674, %v954, 0
        %v998 = vsel %vm674, %v955, 0
        %v1001 = vsel %vm674, %v956, 0
        %v1004 = vsel %vm674, %v957, 0
        %v1007 = vsel %vm674, %v958, 0
        %v1010 = vsel %vm674, %v959, 0
        %v1013 = vsel %vm674, %v960, 0
        %v1016 = vsel %vm674, %v961, 0
        %v1019 = vsel %vm674, %v962, 0
        %v1022 = vsel %vm674, %v963, 0
        %1024 = vmatprep.subr.bf16.mxu0 0
        %1025 = vmatpush1.bf16.msra.mxu0 %v972
        %1026 = vmatprep.subr.bf16.mxu0 0
        %1027 = vmatpush1.bf16.msra.mxu0 %v973
        %1028 = vmatprep.subr.bf16.mxu0 0
        %1029 = vmatpush1.bf16.msra.mxu0 0
        %1030 = vmatprep.subr.bf16.mxu0 0
        %1031 = vmatpush1.bf16.msra.mxu0 0
        %1032 = vmatprep.subr.bf16.mxu0 0
        %1033 = vmatpush1.bf16.msra.mxu0 0
        %1034 = vmatprep.subr.bf16.mxu0 0
        %1035 = vmatpush1.bf16.msra.mxu0 0
        %1036 = vmatprep.subr.bf16.mxu0 0
        %1037 = vmatpush1.bf16.msra.mxu0 0
        %1038 = vmatprep.subr.bf16.mxu0 0
        %1039 = vmatpush1.bf16.msra.mxu0 0
        %1040 = vmatprep.subr.bf16.mxu0 0
        %1041 = vmatpush1.bf16.msra.mxu0 0
        %1042 = vmatprep.subr.bf16.mxu0 0
        %1043 = vmatpush1.bf16.msra.mxu0 0
        %1044 = vmatprep.subr.bf16.mxu0 0
        %1045 = vmatpush1.bf16.msra.mxu0 0
        %1046 = vmatprep.subr.bf16.mxu0 0
        %1047 = vmatpush1.bf16.msra.mxu0 0
        %1048 = vmatprep.subr.bf16.mxu0 0
        %1049 = vmatpush1.bf16.msra.mxu0 0
        %1050 = vmatprep.subr.bf16.mxu0 0
        %1051 = vmatpush1.bf16.msra.mxu0 0
        %1052 = vmatprep.subr.bf16.mxu0 0
        %1053 = vmatpush1.bf16.msra.mxu0 0
        %1054 = vmatprep.subr.bf16.mxu0 0
        %1055 = vmatpush1.bf16.msra.mxu0 0
        %1056 = vmatprep.mubr.bf16.mxu0 0
        %1057 = vmatmul.mubr.bf16.gmra.mrb[0].mxu0 %v977
        %v1058 = vpop.f32.mrb[0].mxu0
        %v1059 = vadd.f32 %v758, %v1058
        %v1060 = vpop.f32.mrb[0].mxu0
        %v1061 = vpop.f32.mrb[0].mxu0
        %v1062 = vadd.f32 %v761, %v1061
        %v1063 = vpop.f32.mrb[0].mxu0
        %1064 = vmatprep.mubr.bf16.mxu0 0
        %1065 = vmatmul.mubr.bf16.gmra.mrb[0].mxu0 %v980
        %v1066 = vpop.f32.mrb[0].mxu0
        %v1067 = vadd.f32 %v766, %v1066
        %v1068 = vpop.f32.mrb[0].mxu0
        %v1069 = vpop.f32.mrb[0].mxu0
        %v1070 = vadd.f32 %v769, %v1069
        %v1071 = vpop.f32.mrb[0].mxu0
        %1072 = vmatprep.mubr.bf16.mxu0 0
        %1073 = vmatmul.mubr.bf16.gmra.mrb[0].mxu0 %v983
        %v1074 = vpop.f32.mrb[0].mxu0
        %v1075 = vadd.f32 %v774, %v1074
        %v1076 = vpop.f32.mrb[0].mxu0
        %v1077 = vpop.f32.mrb[0].mxu0
        %v1078 = vadd.f32 %v777, %v1077
        %v1079 = vpop.f32.mrb[0].mxu0
        %1080 = vmatprep.mubr.bf16.mxu0 0
        %1081 = vmatmul.mubr.bf16.gmra.mrb[0].mxu0 %v986
        %v1082 = vpop.f32.mrb[0].mxu0
        %v1083 = vadd.f32 %v782, %v1082
        %v1084 = vpop.f32.mrb[0].mxu0
        %v1085 = vpop.f32.mrb[0].mxu0
        %v1086 = vadd.f32 %v785, %v1085
        %v1087 = vpop.f32.mrb[0].mxu0
        %1088 = vmatprep.mubr.bf16.mxu0 0
        %1089 = vmatmul.mubr.bf16.gmra.mrb[0].mxu0 %v989
        %v1090 = vpop.f32.mrb[0].mxu0
        %v1091 = vadd.f32 %v790, %v1090
        %v1092 = vpop.f32.mrb[0].mxu0
        %v1093 = vpop.f32.mrb[0].mxu0
        %v1094 = vadd.f32 %v793, %v1093
        %v1095 = vpop.f32.mrb[0].mxu0
        %1096 = vmatprep.mubr.bf16.mxu0 0
        %1097 = vmatmul.mubr.bf16.gmra.mrb[0].mxu0 %v992
        %v1098 = vpop.f32.mrb[0].mxu0
        %v1099 = vadd.f32 %v798, %v1098
        %v1100 = vpop.f32.mrb[0].mxu0
        %v1101 = vpop.f32.mrb[0].mxu0
        %v1102 = vadd.f32 %v801, %v1101
        %v1103 = vpop.f32.mrb[0].mxu0
        %1104 = vmatprep.mubr.bf16.mxu0 0
        %1105 = vmatmul.mubr.bf16.gmra.mrb[0].mxu0 %v995
        %v1106 = vpop.f32.mrb[0].mxu0
        %v1107 = vadd.f32 %v806, %v1106
        %v1108 = vpop.f32.mrb[0].mxu0
        %v1109 = vpop.f32.mrb[0].mxu0
        %v1110 = vadd.f32 %v809, %v1109
        %v1111 = vpop.f32.mrb[0].mxu0
        %1112 = vmatprep.mubr.bf16.mxu0 0
        %1113 = vmatmul.mubr.bf16.gmra.mrb[0].mxu0 %v998
        %v1114 = vpop.f32.mrb[0].mxu0
        %v1115 = vadd.f32 %v814, %v1114
        %v1116 = vpop.f32.mrb[0].mxu0
        %v1117 = vpop.f32.mrb[0].mxu0
        %v1118 = vadd.f32 %v817, %v1117
        %v1119 = vpop.f32.mrb[0].mxu0
        %1120 = vmatprep.mubr.bf16.mxu0 0
        %1121 = vmatmul.mubr.bf16.gmra.mrb[0].mxu0 %v1001
        %v1122 = vpop.f32.mrb[0].mxu0
        %v1123 = vadd.f32 %v822, %v1122
        %v1124 = vpop.f32.mrb[0].mxu0
        %v1125 = vpop.f32.mrb[0].mxu0
        %v1126 = vadd.f32 %v825, %v1125
        %v1127 = vpop.f32.mrb[0].mxu0
        %1128 = vmatprep.mubr.bf16.mxu0 0
        %1129 = vmatmul.mubr.bf16.gmra.mrb[0].mxu0 %v1004
        %v1130 = vpop.f32.mrb[0].mxu0
        %v1131 = vadd.f32 %v830, %v1130
        %v1132 = vpop.f32.mrb[0].mxu0
        %v1133 = vpop.f32.mrb[0].mxu0
        %v1134 = vadd.f32 %v833, %v1133
        %v1135 = vpop.f32.mrb[0].mxu0
        %1136 = vmatprep.mubr.bf16.mxu0 0
        %1137 = vmatmul.mubr.bf16.gmra.mrb[0].mxu0 %v1007
        %v1138 = vpop.f32.mrb[0].mxu0
        %v1139 = vadd.f32 %v838, %v1138
        %v1140 = vpop.f32.mrb[0].mxu0
        %v1141 = vpop.f32.mrb[0].mxu0
        %v1142 = vadd.f32 %v841, %v1141
        %v1143 = vpop.f32.mrb[0].mxu0
        %1144 = vmatprep.mubr.bf16.mxu0 0
        %1145 = vmatmul.mubr.bf16.gmra.mrb[0].mxu0 %v1010
        %v1146 = vpop.f32.mrb[0].mxu0
        %v1147 = vadd.f32 %v846, %v1146
        %v1148 = vpop.f32.mrb[0].mxu0
        %v1149 = vpop.f32.mrb[0].mxu0
        %v1150 = vadd.f32 %v849, %v1149
        %v1151 = vpop.f32.mrb[0].mxu0
        %1152 = vmatprep.mubr.bf16.mxu0 0
        %1153 = vmatmul.mubr.bf16.gmra.mrb[0].mxu0 %v1013
        %v1154 = vpop.f32.mrb[0].mxu0
        %v1155 = vadd.f32 %v854, %v1154
        %v1156 = vpop.f32.mrb[0].mxu0
        %v1157 = vpop.f32.mrb[0].mxu0
        %v1158 = vadd.f32 %v857, %v1157
        %v1159 = vpop.f32.mrb[0].mxu0
        %1160 = vmatprep.mubr.bf16.mxu0 0
        %1161 = vmatmul.mubr.bf16.gmra.mrb[0].mxu0 %v1016
        %v1162 = vpop.f32.mrb[0].mxu0
        %v1163 = vadd.f32 %v862, %v1162
        %v1164 = vpop.f32.mrb[0].mxu0
        %v1165 = vpop.f32.mrb[0].mxu0
        %v1166 = vadd.f32 %v865, %v1165
        %v1167 = vpop.f32.mrb[0].mxu0
        %1168 = vmatprep.mubr.bf16.mxu0 0
        %1169 = vmatmul.mubr.bf16.gmra.mrb[0].mxu0 %v1019
        %v1170 = vpop.f32.mrb[0].mxu0
        %v1171 = vadd.f32 %v870, %v1170
        %v1172 = vpop.f32.mrb[0].mxu0
        %v1173 = vpop.f32.mrb[0].mxu0
        %v1174 = vadd.f32 %v873, %v1173
        %v1175 = vpop.f32.mrb[0].mxu0
        %1176 = vmatprep.mubr.bf16.mxu0 0
        %1177 = vmatmul.mubr.bf16.gmra.mrb[0].mxu0 %v1022
        %v1178 = vpop.f32.mrb[0].mxu0
        %v1179 = vadd.f32 %v878, %v1178
        %v1180 = vpop.f32.mrb[0].mxu0
        %v1181 = vpop.f32.mrb[0].mxu0
        %v1182 = vadd.f32 %v881, %v1181
        %v1183 = vpop.f32.mrb[0].mxu0
        %1184 = vdwg.mxu0
        %v1185 = vld [vmem:[%s168] sm:$0xe]
        %v1186 = vld [vmem:[%s168 + $0xc] sm:$0xe]
        %v1187 = vld [vmem:[%s168 + $0x18] sm:$0xe]
        %v1188 = vld [vmem:[%s168 + $0x24] sm:$0xe]
        %v1189 = vld [vmem:[%s168 + $0x30] sm:$0xe]
        %v1190 = vld [vmem:[%s168 + $0x3c] sm:$0xe]
        %v1191 = vld [vmem:[%s168 + $0x48] sm:$0xe]
        %v1192 = vld [vmem:[%s168 + $0x54] sm:$0xe]
        %v1193 = vld [vmem:[%s168 + $0x60] sm:$0xe]
        %v1194 = vld [vmem:[%s168 + $0x6c] sm:$0xe]
        %v1195 = vld [vmem:[%s168 + $0x78] sm:$0xe]
        %v1196 = vld [vmem:[%s168 + $0x84] sm:$0xe]
        %v1197 = vld [vmem:[%s168 + $0x90] sm:$0xe]
        %v1198 = vld [vmem:[%s168 + $0x9c] sm:$0xe]
        %v1199 = vld [vmem:[%s168 + $0xa8] sm:$0xe]
        %v1200 = vld [vmem:[%s168 + $0xb4] sm:$0xe]
        %vm1233 = vcmask 1042432
        %vm1234 = vcmask 1046532
        %vm1235 = vmor %vm1233, %vm1234
        %v1236 = vrot.slane %v1185, 5
        %v1237 = vrot.slane %v1236, 4
        %v1238 = vrot.slane %v171, 5
        %v1239 = vsel %vm1235, %v1237, %v1238
        %v1240 = vrot.slane %v1238, 4
        %v1241 = vrot.slane %v206, 5
        %v1242 = vsel %vm1235, %v1240, %v1241
        %v1243 = vrot.slane %v1186, 5
        %v1244 = vrot.slane %v1243, 4
        %v1245 = vrot.slane %v173, 5
        %v1246 = vsel %vm1235, %v1244, %v1245
        %v1247 = vrot.slane %v1245, 4
        %v1248 = vrot.slane %v207, 5
        %v1249 = vsel %vm1235, %v1247, %v1248
        %v1250 = vrot.slane %v1187, 5
        %v1251 = vrot.slane %v1250, 4
        %v1252 = vrot.slane %v175, 5
        %v1253 = vsel %vm1235, %v1251, %v1252
        %v1254 = vrot.slane %v1252, 4
        %v1255 = vrot.slane %v208, 5
        %v1256 = vsel %vm1235, %v1254, %v1255
        %v1257 = vrot.slane %v1188, 5
        %v1258 = vrot.slane %v1257, 4
        %v1259 = vrot.slane %v177, 5
        %v1260 = vsel %vm1235, %v1258, %v1259
        %v1261 = vrot.slane %v1259, 4
        %v1262 = vrot.slane %v209, 5
        %v1263 = vsel %vm1235, %v1261, %v1262
        %v1264 = vrot.slane %v1189, 5
        %v1265 = vrot.slane %v1264, 4
        %v1266 = vrot.slane %v179, 5
        %v1267 = vsel %vm1235, %v1265, %v1266
        %v1268 = vrot.slane %v1266, 4
        %v1269 = vrot.slane %v210, 5
        %v1270 = vsel %vm1235, %v1268, %v1269
        %v1271 = vrot.slane %v1190, 5
        %v1272 = vrot.slane %v1271, 4
        %v1273 = vrot.slane %v181, 5
        %v1274 = vsel %vm1235, %v1272, %v1273
        %v1275 = vrot.slane %v1273, 4
        %v1276 = vrot.slane %v211, 5
        %v1277 = vsel %vm1235, %v1275, %v1276
        %v1278 = vrot.slane %v1191, 5
        %v1279 = vrot.slane %v1278, 4
        %v1280 = vrot.slane %v183, 5
        %v1281 = vsel %vm1235, %v1279, %v1280
        %v1282 = vrot.slane %v1280, 4
        %v1283 = vrot.slane %v212, 5
        %v1284 = vsel %vm1235, %v1282, %v1283
        %v1285 = vrot.slane %v1192, 5
        %v1286 = vrot.slane %v1285, 4
        %v1287 = vrot.slane %v185, 5
        %v1288 = vsel %vm1235, %v1286, %v1287
        %v1289 = vrot.slane %v1287, 4
        %v1290 = vrot.slane %v213, 5
        %v1291 = vsel %vm1235, %v1289, %v1290
        %v1292 = vrot.slane %v1193, 5
        %v1293 = vrot.slane %v1292, 4
        %v1294 = vrot.slane %v187, 5
        %v1295 = vsel %vm1235, %v1293, %v1294
        %v1296 = vrot.slane %v1294, 4
        %v1297 = vrot.slane %v214, 5
        %v1298 = vsel %vm1235, %v1296, %v1297
        %v1299 = vrot.slane %v1194, 5
        %v1300 = vrot.slane %v1299, 4
        %v1301 = vrot.slane %v189, 5
        %v1302 = vsel %vm1235, %v1300, %v1301
        %v1303 = vrot.slane %v1301, 4
        %v1304 = vrot.slane %v215, 5
        %v1305 = vsel %vm1235, %v1303, %v1304
        %v1306 = vrot.slane %v1195, 5
        %v1307 = vrot.slane %v1306, 4
        %v1308 = vrot.slane %v191, 5
        %v1309 = vsel %vm1235, %v1307, %v1308
        %v1310 = vrot.slane %v1308, 4
        %v1311 = vrot.slane %v216, 5
        %v1312 = vsel %vm1235, %v1310, %v1311
        %v1313 = vrot.slane %v1196, 5
        %v1314 = vrot.slane %v1313, 4
        %v1315 = vrot.slane %v193, 5
        %v1316 = vsel %vm1235, %v1314, %v1315
        %v1317 = vrot.slane %v1315, 4
        %v1318 = vrot.slane %v217, 5
        %v1319 = vsel %vm1235, %v1317, %v1318
        %v1320 = vrot.slane %v1197, 5
        %v1321 = vrot.slane %v1320, 4
        %v1322 = vrot.slane %v195, 5
        %v1323 = vsel %vm1235, %v1321, %v1322
        %v1324 = vrot.slane %v1322, 4
        %v1325 = vrot.slane %v218, 5
        %v1326 = vsel %vm1235, %v1324, %v1325
        %v1327 = vrot.slane %v1198, 5
        %v1328 = vrot.slane %v1327, 4
        %v1329 = vrot.slane %v197, 5
        %v1330 = vsel %vm1235, %v1328, %v1329
        %v1331 = vrot.slane %v1329, 4
        %v1332 = vrot.slane %v219, 5
        %v1333 = vsel %vm1235, %v1331, %v1332
        %v1334 = vrot.slane %v1199, 5
        %v1335 = vrot.slane %v1334, 4
        %v1336 = vrot.slane %v199, 5
        %v1337 = vsel %vm1235, %v1335, %v1336
        %v1338 = vrot.slane %v1336, 4
        %v1339 = vrot.slane %v220, 5
        %v1340 = vsel %vm1235, %v1338, %v1339
        %v1341 = vrot.slane %v1200, 5
        %v1342 = vrot.slane %v1341, 4
        %v1343 = vrot.slane %v201, 5
        %v1344 = vsel %vm1235, %v1342, %v1343
        %v1345 = vrot.slane %v1343, 4
        %v1346 = vrot.slane %v221, 5
        %v1347 = vsel %vm1235, %v1345, %v1346
        %s1348 = scalar_lea.vmem %s1, 32
        %v1349 = vld [vmem:[%s1348] sm:$0xf]
        %v1350 = vld [vmem:[%s1348 + $0x4] sm:$0xf]
        %v1351 = vld [vmem:[%s1348 + $0x8] sm:$0xf]
        %v1352 = vld [vmem:[%s1348 + $0xc] sm:$0xf]
        %v1353 = vunpack.c.l.b16 %v1239
        %v1354 = vunpack.c.l.b16 %v1242
        %v1355 = vunpack.c.l.b16 %v1246
        %v1356 = vunpack.c.l.b16 %v1249
        %v1357 = vunpack.c.l.b16 %v1253
        %v1358 = vunpack.c.l.b16 %v1256
        %v1359 = vunpack.c.l.b16 %v1260
        %v1360 = vunpack.c.l.b16 %v1263
        %v1361 = vunpack.c.l.b16 %v1267
        %v1362 = vunpack.c.l.b16 %v1270
        %v1363 = vunpack.c.l.b16 %v1274
        %v1364 = vunpack.c.l.b16 %v1277
        %v1365 = vunpack.c.l.b16 %v1281
        %v1366 = vunpack.c.l.b16 %v1284
        %v1367 = vunpack.c.l.b16 %v1288
        %v1368 = vunpack.c.l.b16 %v1291
        %v1369 = vunpack.c.l.b16 %v1295
        %v1370 = vunpack.c.l.b16 %v1298
        %v1371 = vunpack.c.l.b16 %v1302
        %v1372 = vunpack.c.l.b16 %v1305
        %v1373 = vunpack.c.l.b16 %v1309
        %v1374 = vunpack.c.l.b16 %v1312
        %v1375 = vunpack.c.l.b16 %v1316
        %v1376 = vunpack.c.l.b16 %v1319
        %v1377 = vunpack.c.l.b16 %v1323
        %v1378 = vunpack.c.l.b16 %v1326
        %v1379 = vunpack.c.l.b16 %v1330
        %v1380 = vunpack.c.l.b16 %v1333
        %v1381 = vunpack.c.l.b16 %v1337
        %v1382 = vunpack.c.l.b16 %v1340
        %v1383 = vunpack.c.l.b16 %v1344
        %v1384 = vunpack.c.l.b16 %v1347
        %v1385 = vpack.c.b16 %v1354, %v1353
        %v1386 = vpack.c.b16 %v1356, %v1355
        %v1387 = vpack.c.b16 %v1358, %v1357
        %v1388 = vpack.c.b16 %v1360, %v1359
        %v1389 = vpack.c.b16 %v1362, %v1361
        %v1390 = vpack.c.b16 %v1364, %v1363
        %v1391 = vpack.c.b16 %v1366, %v1365
        %v1392 = vpack.c.b16 %v1368, %v1367
        %v1393 = vpack.c.b16 %v1370, %v1369
        %v1394 = vpack.c.b16 %v1372, %v1371
        %v1395 = vpack.c.b16 %v1374, %v1373
        %v1396 = vpack.c.b16 %v1376, %v1375
        %v1397 = vpack.c.b16 %v1378, %v1377
        %v1398 = vpack.c.b16 %v1380, %v1379
        %v1399 = vpack.c.b16 %v1382, %v1381
        %v1400 = vpack.c.b16 %v1384, %v1383
        %v1405 = vunpack.c.l.b16 %v1349
        %v1406 = vunpack.c.l.b16 %v1350
        %v1407 = vunpack.c.l.b16 %v1351
        %v1408 = vunpack.c.l.b16 %v1352
        %v1409 = vpack.c.b16 %v1406, %v1405
        %v1410 = vpack.c.b16 %v1408, %v1407
        %v1414 = vsel %vm674, %v1385, 0
        %v1417 = vsel %vm674, %v1386, 0
        %v1420 = vsel %vm674, %v1387, 0
        %v1423 = vsel %vm674, %v1388, 0
        %v1426 = vsel %vm674, %v1389, 0
        %v1429 = vsel %vm674, %v1390, 0
        %v1432 = vsel %vm674, %v1391, 0
        %v1435 = vsel %vm674, %v1392, 0
        %v1438 = vsel %vm674, %v1393, 0
        %v1441 = vsel %vm674, %v1394, 0
        %v1444 = vsel %vm674, %v1395, 0
        %v1447 = vsel %vm674, %v1396, 0
        %v1450 = vsel %vm674, %v1397, 0
        %v1453 = vsel %vm674, %v1398, 0
        %v1456 = vsel %vm674, %v1399, 0
        %v1459 = vsel %vm674, %v1400, 0
        %1461 = vmatprep.subr.bf16.mxu0 0
        %1462 = vmatpush1.bf16.msra.mxu0 %v1409
        %1463 = vmatprep.subr.bf16.mxu0 0
        %1464 = vmatpush1.bf16.msra.mxu0 %v1410
        %1465 = vmatprep.subr.bf16.mxu0 0
        %1466 = vmatpush1.bf16.msra.mxu0 0
        %1467 = vmatprep.subr.bf16.mxu0 0
        %1468 = vmatpush1.bf16.msra.mxu0 0
        %1469 = vmatprep.subr.bf16.mxu0 0
        %1470 = vmatpush1.bf16.msra.mxu0 0
        %1471 = vmatprep.subr.bf16.mxu0 0
        %1472 = vmatpush1.bf16.msra.mxu0 0
        %1473 = vmatprep.subr.bf16.mxu0 0
        %1474 = vmatpush1.bf16.msra.mxu0 0
        %1475 = vmatprep.subr.bf16.mxu0 0
        %1476 = vmatpush1.bf16.msra.mxu0 0
        %1477 = vmatprep.subr.bf16.mxu0 0
        %1478 = vmatpush1.bf16.msra.mxu0 0
        %1479 = vmatprep.subr.bf16.mxu0 0
        %1480 = vmatpush1.bf16.msra.mxu0 0
        %1481 = vmatprep.subr.bf16.mxu0 0
        %1482 = vmatpush1.bf16.msra.mxu0 0
        %1483 = vmatprep.subr.bf16.mxu0 0
        %1484 = vmatpush1.bf16.msra.mxu0 0
        %1485 = vmatprep.subr.bf16.mxu0 0
        %1486 = vmatpush1.bf16.msra.mxu0 0
        %1487 = vmatprep.subr.bf16.mxu0 0
        %1488 = vmatpush1.bf16.msra.mxu0 0
        %1489 = vmatprep.subr.bf16.mxu0 0
        %1490 = vmatpush1.bf16.msra.mxu0 0
        %1491 = vmatprep.subr.bf16.mxu0 0
        %1492 = vmatpush1.bf16.msra.mxu0 0
        %1493 = vmatprep.mubr.bf16.mxu0 0
        %1494 = vmatmul.mubr.bf16.gmra.mrb[0].mxu0 %v1414
        %v1495 = vpop.f32.mrb[0].mxu0
        %v1496 = vadd.f32 0.0, %v1495
        %v1497 = vpop.f32.mrb[0].mxu0
        %v1498 = vpop.f32.mrb[0].mxu0
        %v1499 = vadd.f32 0.0, %v1498
        %v1500 = vpop.f32.mrb[0].mxu0
        %1501 = vmatprep.mubr.bf16.mxu0 0
        %1502 = vmatmul.mubr.bf16.gmra.mrb[0].mxu0 %v1417
        %v1503 = vpop.f32.mrb[0].mxu0
        %v1504 = vadd.f32 0.0, %v1503
        %v1505 = vpop.f32.mrb[0].mxu0
        %v1506 = vpop.f32.mrb[0].mxu0
        %v1507 = vadd.f32 0.0, %v1506
        %v1508 = vpop.f32.mrb[0].mxu0
        %1509 = vmatprep.mubr.bf16.mxu0 0
        %1510 = vmatmul.mubr.bf16.gmra.mrb[0].mxu0 %v1420
        %v1511 = vpop.f32.mrb[0].mxu0
        %v1512 = vadd.f32 0.0, %v1511
        %v1513 = vpop.f32.mrb[0].mxu0
        %v1514 = vpop.f32.mrb[0].mxu0
        %v1515 = vadd.f32 0.0, %v1514
        %v1516 = vpop.f32.mrb[0].mxu0
        %1517 = vmatprep.mubr.bf16.mxu0 0
        %1518 = vmatmul.mubr.bf16.gmra.mrb[0].mxu0 %v1423
        %v1519 = vpop.f32.mrb[0].mxu0
        %v1520 = vadd.f32 0.0, %v1519
        %v1521 = vpop.f32.mrb[0].mxu0
        %v1522 = vpop.f32.mrb[0].mxu0
        %v1523 = vadd.f32 0.0, %v1522
        %v1524 = vpop.f32.mrb[0].mxu0
        %1525 = vmatprep.mubr.bf16.mxu0 0
        %1526 = vmatmul.mubr.bf16.gmra.mrb[0].mxu0 %v1426
        %v1527 = vpop.f32.mrb[0].mxu0
        %v1528 = vadd.f32 0.0, %v1527
        %v1529 = vpop.f32.mrb[0].mxu0
        %v1530 = vpop.f32.mrb[0].mxu0
        %v1531 = vadd.f32 0.0, %v1530
        %v1532 = vpop.f32.mrb[0].mxu0
        %1533 = vmatprep.mubr.bf16.mxu0 0
        %1534 = vmatmul.mubr.bf16.gmra.mrb[0].mxu0 %v1429
        %v1535 = vpop.f32.mrb[0].mxu0
        %v1536 = vadd.f32 0.0, %v1535
        %v1537 = vpop.f32.mrb[0].mxu0
        %v1538 = vpop.f32.mrb[0].mxu0
        %v1539 = vadd.f32 0.0, %v1538
        %v1540 = vpop.f32.mrb[0].mxu0
        %1541 = vmatprep.mubr.bf16.mxu0 0
        %1542 = vmatmul.mubr.bf16.gmra.mrb[0].mxu0 %v1432
        %v1543 = vpop.f32.mrb[0].mxu0
        %v1544 = vadd.f32 0.0, %v1543
        %v1545 = vpop.f32.mrb[0].mxu0
        %v1546 = vpop.f32.mrb[0].mxu0
        %v1547 = vadd.f32 0.0, %v1546
        %v1548 = vpop.f32.mrb[0].mxu0
        %1549 = vmatprep.mubr.bf16.mxu0 0
        %1550 = vmatmul.mubr.bf16.gmra.mrb[0].mxu0 %v1435
        %v1551 = vpop.f32.mrb[0].mxu0
        %v1552 = vadd.f32 0.0, %v1551
        %v1553 = vpop.f32.mrb[0].mxu0
        %v1554 = vpop.f32.mrb[0].mxu0
        %v1555 = vadd.f32 0.0, %v1554
        %v1556 = vpop.f32.mrb[0].mxu0
        %1557 = vmatprep.mubr.bf16.mxu0 0
        %1558 = vmatmul.mubr.bf16.gmra.mrb[0].mxu0 %v1438
        %v1559 = vpop.f32.mrb[0].mxu0
        %v1560 = vadd.f32 0.0, %v1559
        %v1561 = vpop.f32.mrb[0].mxu0
        %v1562 = vpop.f32.mrb[0].mxu0
        %v1563 = vadd.f32 0.0, %v1562
        %v1564 = vpop.f32.mrb[0].mxu0
        %1565 = vmatprep.mubr.bf16.mxu0 0
        %1566 = vmatmul.mubr.bf16.gmra.mrb[0].mxu0 %v1441
        %v1567 = vpop.f32.mrb[0].mxu0
        %v1568 = vadd.f32 0.0, %v1567
        %v1569 = vpop.f32.mrb[0].mxu0
        %v1570 = vpop.f32.mrb[0].mxu0
        %v1571 = vadd.f32 0.0, %v1570
        %v1572 = vpop.f32.mrb[0].mxu0
        %1573 = vmatprep.mubr.bf16.mxu0 0
        %1574 = vmatmul.mubr.bf16.gmra.mrb[0].mxu0 %v1444
        %v1575 = vpop.f32.mrb[0].mxu0
        %v1576 = vadd.f32 0.0, %v1575
        %v1577 = vpop.f32.mrb[0].mxu0
        %v1578 = vpop.f32.mrb[0].mxu0
        %v1579 = vadd.f32 0.0, %v1578
        %v1580 = vpop.f32.mrb[0].mxu0
        %1581 = vmatprep.mubr.bf16.mxu0 0
        %1582 = vmatmul.mubr.bf16.gmra.mrb[0].mxu0 %v1447
        %v1583 = vpop.f32.mrb[0].mxu0
        %v1584 = vadd.f32 0.0, %v1583
        %v1585 = vpop.f32.mrb[0].mxu0
        %v1586 = vpop.f32.mrb[0].mxu0
        %v1587 = vadd.f32 0.0, %v1586
        %v1588 = vpop.f32.mrb[0].mxu0
        %1589 = vmatprep.mubr.bf16.mxu0 0
        %1590 = vmatmul.mubr.bf16.gmra.mrb[0].mxu0 %v1450
        %v1591 = vpop.f32.mrb[0].mxu0
        %v1592 = vadd.f32 0.0, %v1591
        %v1593 = vpop.f32.mrb[0].mxu0
        %v1594 = vpop.f32.mrb[0].mxu0
        %v1595 = vadd.f32 0.0, %v1594
        %v1596 = vpop.f32.mrb[0].mxu0
        %1597 = vmatprep.mubr.bf16.mxu0 0
        %1598 = vmatmul.mubr.bf16.gmra.mrb[0].mxu0 %v1453
        %v1599 = vpop.f32.mrb[0].mxu0
        %v1600 = vadd.f32 0.0, %v1599
        %v1601 = vpop.f32.mrb[0].mxu0
        %v1602 = vpop.f32.mrb[0].mxu0
        %v1603 = vadd.f32 0.0, %v1602
        %v1604 = vpop.f32.mrb[0].mxu0
        %1605 = vmatprep.mubr.bf16.mxu0 0
        %1606 = vmatmul.mubr.bf16.gmra.mrb[0].mxu0 %v1456
        %v1607 = vpop.f32.mrb[0].mxu0
        %v1608 = vadd.f32 0.0, %v1607
        %v1609 = vpop.f32.mrb[0].mxu0
        %v1610 = vpop.f32.mrb[0].mxu0
        %v1611 = vadd.f32 0.0, %v1610
        %v1612 = vpop.f32.mrb[0].mxu0
        %1613 = vmatprep.mubr.bf16.mxu0 0
        %1614 = vmatmul.mubr.bf16.gmra.mrb[0].mxu0 %v1459
        %v1615 = vpop.f32.mrb[0].mxu0
        %v1616 = vadd.f32 0.0, %v1615
        %v1617 = vpop.f32.mrb[0].mxu0
        %v1618 = vpop.f32.mrb[0].mxu0
        %v1619 = vadd.f32 0.0, %v1618
        %v1620 = vpop.f32.mrb[0].mxu0
        %1621 = vdwg.mxu0
        %v1622 = vadd.f32 %v1059, %v1496
        %v1623 = vadd.f32 %v1062, %v1499
        %v1624 = vadd.f32 %v1067, %v1504
        %v1625 = vadd.f32 %v1070, %v1507
        %v1626 = vadd.f32 %v1075, %v1512
        %v1627 = vadd.f32 %v1078, %v1515
        %v1628 = vadd.f32 %v1083, %v1520
        %v1629 = vadd.f32 %v1086, %v1523
        %v1630 = vadd.f32 %v1091, %v1528
        %v1631 = vadd.f32 %v1094, %v1531
        %v1632 = vadd.f32 %v1099, %v1536
        %v1633 = vadd.f32 %v1102, %v1539
        %v1634 = vadd.f32 %v1107, %v1544
        %v1635 = vadd.f32 %v1110, %v1547
        %v1636 = vadd.f32 %v1115, %v1552
        %v1637 = vadd.f32 %v1118, %v1555
        %v1638 = vadd.f32 %v1123, %v1560
        %v1639 = vadd.f32 %v1126, %v1563
        %v1640 = vadd.f32 %v1131, %v1568
        %v1641 = vadd.f32 %v1134, %v1571
        %v1642 = vadd.f32 %v1139, %v1576
        %v1643 = vadd.f32 %v1142, %v1579
        %v1644 = vadd.f32 %v1147, %v1584
        %v1645 = vadd.f32 %v1150, %v1587
        %v1646 = vadd.f32 %v1155, %v1592
        %v1647 = vadd.f32 %v1158, %v1595
        %v1648 = vadd.f32 %v1163, %v1600
        %v1649 = vadd.f32 %v1166, %v1603
        %v1650 = vadd.f32 %v1171, %v1608
        %v1651 = vadd.f32 %v1174, %v1611
        %v1652 = vadd.f32 %v1179, %v1616
        %v1653 = vadd.f32 %v1182, %v1619
        %s1654 = scalar_lea.vmem %s168, 12
        %v1655 = vld [vmem:[%s1654] sm:$0xf]
        %v1656 = vld [vmem:[%s1654 + $0x4] sm:$0xf]
        %v1657 = vld [vmem:[%s1654 + $0xc] sm:$0xf]
        %v1658 = vld [vmem:[%s1654 + $0x10] sm:$0xf]
        %v1659 = vld [vmem:[%s1654 + $0x18] sm:$0xf]
        %v1660 = vld [vmem:[%s1654 + $0x1c] sm:$0xf]
        %v1661 = vld [vmem:[%s1654 + $0x24] sm:$0xf]
        %v1662 = vld [vmem:[%s1654 + $0x28] sm:$0xf]
        %v1663 = vld [vmem:[%s1654 + $0x30] sm:$0xf]
        %v1664 = vld [vmem:[%s1654 + $0x34] sm:$0xf]
        %v1665 = vld [vmem:[%s1654 + $0x3c] sm:$0xf]
        %v1666 = vld [vmem:[%s1654 + $0x40] sm:$0xf]
        %v1667 = vld [vmem:[%s1654 + $0x48] sm:$0xf]
        %v1668 = vld [vmem:[%s1654 + $0x4c] sm:$0xf]
        %v1669 = vld [vmem:[%s1654 + $0x54] sm:$0xf]
        %v1670 = vld [vmem:[%s1654 + $0x58] sm:$0xf]
        %v1671 = vld [vmem:[%s1654 + $0x60] sm:$0xf]
        %v1672 = vld [vmem:[%s1654 + $0x64] sm:$0xf]
        %v1673 = vld [vmem:[%s1654 + $0x6c] sm:$0xf]
        %v1674 = vld [vmem:[%s1654 + $0x70] sm:$0xf]
        %v1675 = vld [vmem:[%s1654 + $0x78] sm:$0xf]
        %v1676 = vld [vmem:[%s1654 + $0x7c] sm:$0xf]
        %v1677 = vld [vmem:[%s1654 + $0x84] sm:$0xf]
        %v1678 = vld [vmem:[%s1654 + $0x88] sm:$0xf]
        %v1679 = vld [vmem:[%s1654 + $0x90] sm:$0xf]
        %v1680 = vld [vmem:[%s1654 + $0x94] sm:$0xf]
        %v1681 = vld [vmem:[%s1654 + $0x9c] sm:$0xf]
        %v1682 = vld [vmem:[%s1654 + $0xa0] sm:$0xf]
        %v1683 = vld [vmem:[%s1654 + $0xa8] sm:$0xf]
        %v1684 = vld [vmem:[%s1654 + $0xac] sm:$0xf]
        %v1685 = vld [vmem:[%s1654 + $0xb4] sm:$0xf]
        %v1686 = vld [vmem:[%s1654 + $0xb8] sm:$0xf]
        %s1687 = scalar_lea.vmem %s1, 48
        %v1688 = vld [vmem:[%s1687] sm:$0xf]
        %v1689 = vld [vmem:[%s1687 + $0x4] sm:$0xf]
        %v1690 = vld [vmem:[%s1687 + $0x8] sm:$0xf]
        %v1691 = vld [vmem:[%s1687 + $0xc] sm:$0xf]
        %v1724 = vunpack.c.l.b16 %v1655
        %v1725 = vunpack.c.l.b16 %v1656
        %v1726 = vunpack.c.l.b16 %v1657
        %v1727 = vunpack.c.l.b16 %v1658
        %v1728 = vunpack.c.l.b16 %v1659
        %v1729 = vunpack.c.l.b16 %v1660
        %v1730 = vunpack.c.l.b16 %v1661
        %v1731 = vunpack.c.l.b16 %v1662
        %v1732 = vunpack.c.l.b16 %v1663
        %v1733 = vunpack.c.l.b16 %v1664
        %v1734 = vunpack.c.l.b16 %v1665
        %v1735 = vunpack.c.l.b16 %v1666
        %v1736 = vunpack.c.l.b16 %v1667
        %v1737 = vunpack.c.l.b16 %v1668
        %v1738 = vunpack.c.l.b16 %v1669
        %v1739 = vunpack.c.l.b16 %v1670
        %v1740 = vunpack.c.l.b16 %v1671
        %v1741 = vunpack.c.l.b16 %v1672
        %v1742 = vunpack.c.l.b16 %v1673
        %v1743 = vunpack.c.l.b16 %v1674
        %v1744 = vunpack.c.l.b16 %v1675
        %v1745 = vunpack.c.l.b16 %v1676
        %v1746 = vunpack.c.l.b16 %v1677
        %v1747 = vunpack.c.l.b16 %v1678
        %v1748 = vunpack.c.l.b16 %v1679
        %v1749 = vunpack.c.l.b16 %v1680
        %v1750 = vunpack.c.l.b16 %v1681
        %v1751 = vunpack.c.l.b16 %v1682
        %v1752 = vunpack.c.l.b16 %v1683
        %v1753 = vunpack.c.l.b16 %v1684
        %v1754 = vunpack.c.l.b16 %v1685
        %v1755 = vunpack.c.l.b16 %v1686
        %v1756 = vpack.c.b16 %v1725, %v1724
        %v1757 = vpack.c.b16 %v1727, %v1726
        %v1758 = vpack.c.b16 %v1729, %v1728
        %v1759 = vpack.c.b16 %v1731, %v1730
        %v1760 = vpack.c.b16 %v1733, %v1732
        %v1761 = vpack.c.b16 %v1735, %v1734
        %v1762 = vpack.c.b16 %v1737, %v1736
        %v1763 = vpack.c.b16 %v1739, %v1738
        %v1764 = vpack.c.b16 %v1741, %v1740
        %v1765 = vpack.c.b16 %v1743, %v1742
        %v1766 = vpack.c.b16 %v1745, %v1744
        %v1767 = vpack.c.b16 %v1747, %v1746
        %v1768 = vpack.c.b16 %v1749, %v1748
        %v1769 = vpack.c.b16 %v1751, %v1750
        %v1770 = vpack.c.b16 %v1753, %v1752
        %v1771 = vpack.c.b16 %v1755, %v1754
        %v1776 = vunpack.c.l.b16 %v1688
        %v1777 = vunpack.c.l.b16 %v1689
        %v1778 = vunpack.c.l.b16 %v1690
        %v1779 = vunpack.c.l.b16 %v1691
        %v1780 = vpack.c.b16 %v1777, %v1776
        %v1781 = vpack.c.b16 %v1779, %v1778
        %v1785 = vsel %vm674, %v1756, 0
        %v1788 = vsel %vm674, %v1757, 0
        %v1791 = vsel %vm674, %v1758, 0
        %v1794 = vsel %vm674, %v1759, 0
        %v1797 = vsel %vm674, %v1760, 0
        %v1800 = vsel %vm674, %v1761, 0
        %v1803 = vsel %vm674, %v1762, 0
        %v1806 = vsel %vm674, %v1763, 0
        %v1809 = vsel %vm674, %v1764, 0
        %v1812 = vsel %vm674, %v1765, 0
        %v1815 = vsel %vm674, %v1766, 0
        %v1818 = vsel %vm674, %v1767, 0
        %v1821 = vsel %vm674, %v1768, 0
        %v1824 = vsel %vm674, %v1769, 0
        %v1827 = vsel %vm674, %v1770, 0
        %v1830 = vsel %vm674, %v1771, 0
        %1832 = vmatprep.subr.bf16.mxu0 0
        %1833 = vmatpush1.bf16.msra.mxu0 %v1780
        %1834 = vmatprep.subr.bf16.mxu0 0
        %1835 = vmatpush1.bf16.msra.mxu0 %v1781
        %1836 = vmatprep.subr.bf16.mxu0 0
        %1837 = vmatpush1.bf16.msra.mxu0 0
        %1838 = vmatprep.subr.bf16.mxu0 0
        %1839 = vmatpush1.bf16.msra.mxu0 0
        %1840 = vmatprep.subr.bf16.mxu0 0
        %1841 = vmatpush1.bf16.msra.mxu0 0
        %1842 = vmatprep.subr.bf16.mxu0 0
        %1843 = vmatpush1.bf16.msra.mxu0 0
        %1844 = vmatprep.subr.bf16.mxu0 0
        %1845 = vmatpush1.bf16.msra.mxu0 0
        %1846 = vmatprep.subr.bf16.mxu0 0
        %1847 = vmatpush1.bf16.msra.mxu0 0
        %1848 = vmatprep.subr.bf16.mxu0 0
        %1849 = vmatpush1.bf16.msra.mxu0 0
        %1850 = vmatprep.subr.bf16.mxu0 0
        %1851 = vmatpush1.bf16.msra.mxu0 0
        %1852 = vmatprep.subr.bf16.mxu0 0
        %1853 = vmatpush1.bf16.msra.mxu0 0
        %1854 = vmatprep.subr.bf16.mxu0 0
        %1855 = vmatpush1.bf16.msra.mxu0 0
        %1856 = vmatprep.subr.bf16.mxu0 0
        %1857 = vmatpush1.bf16.msra.mxu0 0
        %1858 = vmatprep.subr.bf16.mxu0 0
        %1859 = vmatpush1.bf16.msra.mxu0 0
        %1860 = vmatprep.subr.bf16.mxu0 0
        %1861 = vmatpush1.bf16.msra.mxu0 0
        %1862 = vmatprep.subr.bf16.mxu0 0
        %1863 = vmatpush1.bf16.msra.mxu0 0
        %1864 = vmatprep.mubr.bf16.mxu0 0
        %1865 = vmatmul.mubr.bf16.gmra.mrb[0].mxu0 %v1785
        %v1866 = vpop.f32.mrb[0].mxu0
        %v1867 = vadd.f32 0.0, %v1866
        %v1868 = vpop.f32.mrb[0].mxu0
        %v1869 = vpop.f32.mrb[0].mxu0
        %v1870 = vadd.f32 0.0, %v1869
        %v1871 = vpop.f32.mrb[0].mxu0
        %1872 = vmatprep.mubr.bf16.mxu0 0
        %1873 = vmatmul.mubr.bf16.gmra.mrb[0].mxu0 %v1788
        %v1874 = vpop.f32.mrb[0].mxu0
        %v1875 = vadd.f32 0.0, %v1874
        %v1876 = vpop.f32.mrb[0].mxu0
        %v1877 = vpop.f32.mrb[0].mxu0
        %v1878 = vadd.f32 0.0, %v1877
        %v1879 = vpop.f32.mrb[0].mxu0
        %1880 = vmatprep.mubr.bf16.mxu0 0
        %1881 = vmatmul.mubr.bf16.gmra.mrb[0].mxu0 %v1791
        %v1882 = vpop.f32.mrb[0].mxu0
        %v1883 = vadd.f32 0.0, %v1882
        %v1884 = vpop.f32.mrb[0].mxu0
        %v1885 = vpop.f32.mrb[0].mxu0
        %v1886 = vadd.f32 0.0, %v1885
        %v1887 = vpop.f32.mrb[0].mxu0
        %1888 = vmatprep.mubr.bf16.mxu0 0
        %1889 = vmatmul.mubr.bf16.gmra.mrb[0].mxu0 %v1794
        %v1890 = vpop.f32.mrb[0].mxu0
        %v1891 = vadd.f32 0.0, %v1890
        %v1892 = vpop.f32.mrb[0].mxu0
        %v1893 = vpop.f32.mrb[0].mxu0
        %v1894 = vadd.f32 0.0, %v1893
        %v1895 = vpop.f32.mrb[0].mxu0
        %1896 = vmatprep.mubr.bf16.mxu0 0
        %1897 = vmatmul.mubr.bf16.gmra.mrb[0].mxu0 %v1797
        %v1898 = vpop.f32.mrb[0].mxu0
        %v1899 = vadd.f32 0.0, %v1898
        %v1900 = vpop.f32.mrb[0].mxu0
        %v1901 = vpop.f32.mrb[0].mxu0
        %v1902 = vadd.f32 0.0, %v1901
        %v1903 = vpop.f32.mrb[0].mxu0
        %1904 = vmatprep.mubr.bf16.mxu0 0
        %1905 = vmatmul.mubr.bf16.gmra.mrb[0].mxu0 %v1800
        %v1906 = vpop.f32.mrb[0].mxu0
        %v1907 = vadd.f32 0.0, %v1906
        %v1908 = vpop.f32.mrb[0].mxu0
        %v1909 = vpop.f32.mrb[0].mxu0
        %v1910 = vadd.f32 0.0, %v1909
        %v1911 = vpop.f32.mrb[0].mxu0
        %1912 = vmatprep.mubr.bf16.mxu0 0
        %1913 = vmatmul.mubr.bf16.gmra.mrb[0].mxu0 %v1803
        %v1914 = vpop.f32.mrb[0].mxu0
        %v1915 = vadd.f32 0.0, %v1914
        %v1916 = vpop.f32.mrb[0].mxu0
        %v1917 = vpop.f32.mrb[0].mxu0
        %v1918 = vadd.f32 0.0, %v1917
        %v1919 = vpop.f32.mrb[0].mxu0
        %1920 = vmatprep.mubr.bf16.mxu0 0
        %1921 = vmatmul.mubr.bf16.gmra.mrb[0].mxu0 %v1806
        %v1922 = vpop.f32.mrb[0].mxu0
        %v1923 = vadd.f32 0.0, %v1922
        %v1924 = vpop.f32.mrb[0].mxu0
        %v1925 = vpop.f32.mrb[0].mxu0
        %v1926 = vadd.f32 0.0, %v1925
        %v1927 = vpop.f32.mrb[0].mxu0
        %1928 = vmatprep.mubr.bf16.mxu0 0
        %1929 = vmatmul.mubr.bf16.gmra.mrb[0].mxu0 %v1809
        %v1930 = vpop.f32.mrb[0].mxu0
        %v1931 = vadd.f32 0.0, %v1930
        %v1932 = vpop.f32.mrb[0].mxu0
        %v1933 = vpop.f32.mrb[0].mxu0
        %v1934 = vadd.f32 0.0, %v1933
        %v1935 = vpop.f32.mrb[0].mxu0
        %1936 = vmatprep.mubr.bf16.mxu0 0
        %1937 = vmatmul.mubr.bf16.gmra.mrb[0].mxu0 %v1812
        %v1938 = vpop.f32.mrb[0].mxu0
        %v1939 = vadd.f32 0.0, %v1938
        %v1940 = vpop.f32.mrb[0].mxu0
        %v1941 = vpop.f32.mrb[0].mxu0
        %v1942 = vadd.f32 0.0, %v1941
        %v1943 = vpop.f32.mrb[0].mxu0
        %1944 = vmatprep.mubr.bf16.mxu0 0
        %1945 = vmatmul.mubr.bf16.gmra.mrb[0].mxu0 %v1815
        %v1946 = vpop.f32.mrb[0].mxu0
        %v1947 = vadd.f32 0.0, %v1946
        %v1948 = vpop.f32.mrb[0].mxu0
        %v1949 = vpop.f32.mrb[0].mxu0
        %v1950 = vadd.f32 0.0, %v1949
        %v1951 = vpop.f32.mrb[0].mxu0
        %1952 = vmatprep.mubr.bf16.mxu0 0
        %1953 = vmatmul.mubr.bf16.gmra.mrb[0].mxu0 %v1818
        %v1954 = vpop.f32.mrb[0].mxu0
        %v1955 = vadd.f32 0.0, %v1954
        %v1956 = vpop.f32.mrb[0].mxu0
        %v1957 = vpop.f32.mrb[0].mxu0
        %v1958 = vadd.f32 0.0, %v1957
        %v1959 = vpop.f32.mrb[0].mxu0
        %1960 = vmatprep.mubr.bf16.mxu0 0
        %1961 = vmatmul.mubr.bf16.gmra.mrb[0].mxu0 %v1821
        %v1962 = vpop.f32.mrb[0].mxu0
        %v1963 = vadd.f32 0.0, %v1962
        %v1964 = vpop.f32.mrb[0].mxu0
        %v1965 = vpop.f32.mrb[0].mxu0
        %v1966 = vadd.f32 0.0, %v1965
        %v1967 = vpop.f32.mrb[0].mxu0
        %1968 = vmatprep.mubr.bf16.mxu0 0
        %1969 = vmatmul.mubr.bf16.gmra.mrb[0].mxu0 %v1824
        %v1970 = vpop.f32.mrb[0].mxu0
        %v1971 = vadd.f32 0.0, %v1970
        %v1972 = vpop.f32.mrb[0].mxu0
        %v1973 = vpop.f32.mrb[0].mxu0
        %v1974 = vadd.f32 0.0, %v1973
        %v1975 = vpop.f32.mrb[0].mxu0
        %1976 = vmatprep.mubr.bf16.mxu0 0
        %1977 = vmatmul.mubr.bf16.gmra.mrb[0].mxu0 %v1827
        %v1978 = vpop.f32.mrb[0].mxu0
        %v1979 = vadd.f32 0.0, %v1978
        %v1980 = vpop.f32.mrb[0].mxu0
        %v1981 = vpop.f32.mrb[0].mxu0
        %v1982 = vadd.f32 0.0, %v1981
        %v1983 = vpop.f32.mrb[0].mxu0
        %1984 = vmatprep.mubr.bf16.mxu0 0
        %1985 = vmatmul.mubr.bf16.gmra.mrb[0].mxu0 %v1830
        %v1986 = vpop.f32.mrb[0].mxu0
        %v1987 = vadd.f32 0.0, %v1986
        %v1988 = vpop.f32.mrb[0].mxu0
        %v1989 = vpop.f32.mrb[0].mxu0
        %v1990 = vadd.f32 0.0, %v1989
        %v1991 = vpop.f32.mrb[0].mxu0
        %1992 = vdwg.mxu0
        %v1993 = vadd.f32 %v1622, %v1867
        %v1994 = vadd.f32 %v1623, %v1870
        %v1995 = vadd.f32 %v1624, %v1875
        %v1996 = vadd.f32 %v1625, %v1878
        %v1997 = vadd.f32 %v1626, %v1883
        %v1998 = vadd.f32 %v1627, %v1886
        %v1999 = vadd.f32 %v1628, %v1891
        %v2000 = vadd.f32 %v1629, %v1894
        %v2001 = vadd.f32 %v1630, %v1899
        %v2002 = vadd.f32 %v1631, %v1902
        %v2003 = vadd.f32 %v1632, %v1907
        %v2004 = vadd.f32 %v1633, %v1910
        %v2005 = vadd.f32 %v1634, %v1915
        %v2006 = vadd.f32 %v1635, %v1918
        %v2007 = vadd.f32 %v1636, %v1923
        %v2008 = vadd.f32 %v1637, %v1926
        %v2009 = vadd.f32 %v1638, %v1931
        %v2010 = vadd.f32 %v1639, %v1934
        %v2011 = vadd.f32 %v1640, %v1939
        %v2012 = vadd.f32 %v1641, %v1942
        %v2013 = vadd.f32 %v1642, %v1947
        %v2014 = vadd.f32 %v1643, %v1950
        %v2015 = vadd.f32 %v1644, %v1955
        %v2016 = vadd.f32 %v1645, %v1958
        %v2017 = vadd.f32 %v1646, %v1963
        %v2018 = vadd.f32 %v1647, %v1966
        %v2019 = vadd.f32 %v1648, %v1971
        %v2020 = vadd.f32 %v1649, %v1974
        %v2021 = vadd.f32 %v1650, %v1979
        %v2022 = vadd.f32 %v1651, %v1982
        %v2023 = vadd.f32 %v1652, %v1987
        %v2024 = vadd.f32 %v1653, %v1990
        %v2025 = vld [vmem:[%s1654] sm:$0xf]
        %v2026 = vld [vmem:[%s1654 + $0x4] sm:$0xf]
        %v2027 = vld [vmem:[%s1654 + $0x8] sm:$0x1]
        %v2028 = vld [vmem:[%s1654 + $0xc] sm:$0xf]
        %v2029 = vld [vmem:[%s1654 + $0x10] sm:$0xf]
        %v2030 = vld [vmem:[%s1654 + $0x14] sm:$0x1]
        %v2031 = vld [vmem:[%s1654 + $0x18] sm:$0xf]
        %v2032 = vld [vmem:[%s1654 + $0x1c] sm:$0xf]
        %v2033 = vld [vmem:[%s1654 + $0x20] sm:$0x1]
        %v2034 = vld [vmem:[%s1654 + $0x24] sm:$0xf]
        %v2035 = vld [vmem:[%s1654 + $0x28] sm:$0xf]
        %v2036 = vld [vmem:[%s1654 + $0x2c] sm:$0x1]
        %v2037 = vld [vmem:[%s1654 + $0x30] sm:$0xf]
        %v2038 = vld [vmem:[%s1654 + $0x34] sm:$0xf]
        %v2039 = vld [vmem:[%s1654 + $0x38] sm:$0x1]
        %v2040 = vld [vmem:[%s1654 + $0x3c] sm:$0xf]
        %v2041 = vld [vmem:[%s1654 + $0x40] sm:$0xf]
        %v2042 = vld [vmem:[%s1654 + $0x44] sm:$0x1]
        %v2043 = vld [vmem:[%s1654 + $0x48] sm:$0xf]
        %v2044 = vld [vmem:[%s1654 + $0x4c] sm:$0xf]
        %v2045 = vld [vmem:[%s1654 + $0x50] sm:$0x1]
        %v2046 = vld [vmem:[%s1654 + $0x54] sm:$0xf]
        %v2047 = vld [vmem:[%s1654 + $0x58] sm:$0xf]
        %v2048 = vld [vmem:[%s1654 + $0x5c] sm:$0x1]
        %v2049 = vld [vmem:[%s1654 + $0x60] sm:$0xf]
        %v2050 = vld [vmem:[%s1654 + $0x64] sm:$0xf]
        %v2051 = vld [vmem:[%s1654 + $0x68] sm:$0x1]
        %v2052 = vld [vmem:[%s1654 + $0x6c] sm:$0xf]
        %v2053 = vld [vmem:[%s1654 + $0x70] sm:$0xf]
        %v2054 = vld [vmem:[%s1654 + $0x74] sm:$0x1]
        %v2055 = vld [vmem:[%s1654 + $0x78] sm:$0xf]
        %v2056 = vld [vmem:[%s1654 + $0x7c] sm:$0xf]
        %v2057 = vld [vmem:[%s1654 + $0x80] sm:$0x1]
        %v2058 = vld [vmem:[%s1654 + $0x84] sm:$0xf]
        %v2059 = vld [vmem:[%s1654 + $0x88] sm:$0xf]
        %v2060 = vld [vmem:[%s1654 + $0x8c] sm:$0x1]
        %v2061 = vld [vmem:[%s1654 + $0x90] sm:$0xf]
        %v2062 = vld [vmem:[%s1654 + $0x94] sm:$0xf]
        %v2063 = vld [vmem:[%s1654 + $0x98] sm:$0x1]
        %v2064 = vld [vmem:[%s1654 + $0x9c] sm:$0xf]
        %v2065 = vld [vmem:[%s1654 + $0xa0] sm:$0xf]
        %v2066 = vld [vmem:[%s1654 + $0xa4] sm:$0x1]
        %v2067 = vld [vmem:[%s1654 + $0xa8] sm:$0xf]
        %v2068 = vld [vmem:[%s1654 + $0xac] sm:$0xf]
        %v2069 = vld [vmem:[%s1654 + $0xb0] sm:$0x1]
        %v2070 = vld [vmem:[%s1654 + $0xb4] sm:$0xf]
        %v2071 = vld [vmem:[%s1654 + $0xb8] sm:$0xf]
        %v2072 = vld [vmem:[%s1654 + $0xbc] sm:$0x1]
        %v2074 = vshrl.u32 %v2025, 16
        %v2076 = vrot.slane %v2074, 4
        %v2077 = vshll.u32 %v2025, 16
        %v2079 = vrot.slane %v2077, 5
        %v2080 = vor.u32 %v2076, %v2079
        %v2081 = vrot.slane %v2080, 4
        %v2083 = vshll.u32 %v2026, 16
        %v2085 = vrot.slane %v2083, 5
        %v2086 = vsel %vm224, %v2081, %v2085
        %v2087 = vshrl.u32 %v2026, 16
        %v2089 = vrot.slane %v2087, 4
        %v2090 = vor.u32 %v2089, %v2085
        %v2091 = vrot.slane %v2090, 4
        %v2093 = vshll.u32 %v2027, 16
        %v2095 = vrot.slane %v2093, 5
        %v2096 = vsel %vm224, %v2091, %v2095
        %v2098 = vshrl.u32 %v2028, 16
        %v2100 = vrot.slane %v2098, 4
        %v2101 = vshll.u32 %v2028, 16
        %v2103 = vrot.slane %v2101, 5
        %v2104 = vor.u32 %v2100, %v2103
        %v2105 = vrot.slane %v2104, 4
        %v2107 = vshll.u32 %v2029, 16
        %v2109 = vrot.slane %v2107, 5
        %v2110 = vsel %vm224, %v2105, %v2109
        %v2111 = vshrl.u32 %v2029, 16
        %v2113 = vrot.slane %v2111, 4
        %v2114 = vor.u32 %v2113, %v2109
        %v2115 = vrot.slane %v2114, 4
        %v2117 = vshll.u32 %v2030, 16
        %v2119 = vrot.slane %v2117, 5
        %v2120 = vsel %vm224, %v2115, %v2119
        %v2122 = vshrl.u32 %v2031, 16
        %v2124 = vrot.slane %v2122, 4
        %v2125 = vshll.u32 %v2031, 16
        %v2127 = vrot.slane %v2125, 5
        %v2128 = vor.u32 %v2124, %v2127
        %v2129 = vrot.slane %v2128, 4
        %v2131 = vshll.u32 %v2032, 16
        %v2133 = vrot.slane %v2131, 5
        %v2134 = vsel %vm224, %v2129, %v2133
        %v2135 = vshrl.u32 %v2032, 16
        %v2137 = vrot.slane %v2135, 4
        %v2138 = vor.u32 %v2137, %v2133
        %v2139 = vrot.slane %v2138, 4
        %v2141 = vshll.u32 %v2033, 16
        %v2143 = vrot.slane %v2141, 5
        %v2144 = vsel %vm224, %v2139, %v2143
        %v2146 = vshrl.u32 %v2034, 16
        %v2148 = vrot.slane %v2146, 4
        %v2149 = vshll.u32 %v2034, 16
        %v2151 = vrot.slane %v2149, 5
        %v2152 = vor.u32 %v2148, %v2151
        %v2153 = vrot.slane %v2152, 4
        %v2155 = vshll.u32 %v2035, 16
        %v2157 = vrot.slane %v2155, 5
        %v2158 = vsel %vm224, %v2153, %v2157
        %v2159 = vshrl.u32 %v2035, 16
        %v2161 = vrot.slane %v2159, 4
        %v2162 = vor.u32 %v2161, %v2157
        %v2163 = vrot.slane %v2162, 4
        %v2165 = vshll.u32 %v2036, 16
        %v2167 = vrot.slane %v2165, 5
        %v2168 = vsel %vm224, %v2163, %v2167
        %v2170 = vshrl.u32 %v2037, 16
        %v2172 = vrot.slane %v2170, 4
        %v2173 = vshll.u32 %v2037, 16
        %v2175 = vrot.slane %v2173, 5
        %v2176 = vor.u32 %v2172, %v2175
        %v2177 = vrot.slane %v2176, 4
        %v2179 = vshll.u32 %v2038, 16
        %v2181 = vrot.slane %v2179, 5
        %v2182 = vsel %vm224, %v2177, %v2181
        %v2183 = vshrl.u32 %v2038, 16
        %v2185 = vrot.slane %v2183, 4
        %v2186 = vor.u32 %v2185, %v2181
        %v2187 = vrot.slane %v2186, 4
        %v2189 = vshll.u32 %v2039, 16
        %v2191 = vrot.slane %v2189, 5
        %v2192 = vsel %vm224, %v2187, %v2191
        %v2194 = vshrl.u32 %v2040, 16
        %v2196 = vrot.slane %v2194, 4
        %v2197 = vshll.u32 %v2040, 16
        %v2199 = vrot.slane %v2197, 5
        %v2200 = vor.u32 %v2196, %v2199
        %v2201 = vrot.slane %v2200, 4
        %v2203 = vshll.u32 %v2041, 16
        %v2205 = vrot.slane %v2203, 5
        %v2206 = vsel %vm224, %v2201, %v2205
        %v2207 = vshrl.u32 %v2041, 16
        %v2209 = vrot.slane %v2207, 4
        %v2210 = vor.u32 %v2209, %v2205
        %v2211 = vrot.slane %v2210, 4
        %v2213 = vshll.u32 %v2042, 16
        %v2215 = vrot.slane %v2213, 5
        %v2216 = vsel %vm224, %v2211, %v2215
        %v2218 = vshrl.u32 %v2043, 16
        %v2220 = vrot.slane %v2218, 4
        %v2221 = vshll.u32 %v2043, 16
        %v2223 = vrot.slane %v2221, 5
        %v2224 = vor.u32 %v2220, %v2223
        %v2225 = vrot.slane %v2224, 4
        %v2227 = vshll.u32 %v2044, 16
        %v2229 = vrot.slane %v2227, 5
        %v2230 = vsel %vm224, %v2225, %v2229
        %v2231 = vshrl.u32 %v2044, 16
        %v2233 = vrot.slane %v2231, 4
        %v2234 = vor.u32 %v2233, %v2229
        %v2235 = vrot.slane %v2234, 4
        %v2237 = vshll.u32 %v2045, 16
        %v2239 = vrot.slane %v2237, 5
        %v2240 = vsel %vm224, %v2235, %v2239
        %v2242 = vshrl.u32 %v2046, 16
        %v2244 = vrot.slane %v2242, 4
        %v2245 = vshll.u32 %v2046, 16
        %v2247 = vrot.slane %v2245, 5
        %v2248 = vor.u32 %v2244, %v2247
        %v2249 = vrot.slane %v2248, 4
        %v2251 = vshll.u32 %v2047, 16
        %v2253 = vrot.slane %v2251, 5
        %v2254 = vsel %vm224, %v2249, %v2253
        %v2255 = vshrl.u32 %v2047, 16
        %v2257 = vrot.slane %v2255, 4
        %v2258 = vor.u32 %v2257, %v2253
        %v2259 = vrot.slane %v2258, 4
        %v2261 = vshll.u32 %v2048, 16
        %v2263 = vrot.slane %v2261, 5
        %v2264 = vsel %vm224, %v2259, %v2263
        %v2266 = vshrl.u32 %v2049, 16
        %v2268 = vrot.slane %v2266, 4
        %v2269 = vshll.u32 %v2049, 16
        %v2271 = vrot.slane %v2269, 5
        %v2272 = vor.u32 %v2268, %v2271
        %v2273 = vrot.slane %v2272, 4
        %v2275 = vshll.u32 %v2050, 16
        %v2277 = vrot.slane %v2275, 5
        %v2278 = vsel %vm224, %v2273, %v2277
        %v2279 = vshrl.u32 %v2050, 16
        %v2281 = vrot.slane %v2279, 4
        %v2282 = vor.u32 %v2281, %v2277
        %v2283 = vrot.slane %v2282, 4
        %v2285 = vshll.u32 %v2051, 16
        %v2287 = vrot.slane %v2285, 5
        %v2288 = vsel %vm224, %v2283, %v2287
        %v2290 = vshrl.u32 %v2052, 16
        %v2292 = vrot.slane %v2290, 4
        %v2293 = vshll.u32 %v2052, 16
        %v2295 = vrot.slane %v2293, 5
        %v2296 = vor.u32 %v2292, %v2295
        %v2297 = vrot.slane %v2296, 4
        %v2299 = vshll.u32 %v2053, 16
        %v2301 = vrot.slane %v2299, 5
        %v2302 = vsel %vm224, %v2297, %v2301
        %v2303 = vshrl.u32 %v2053, 16
        %v2305 = vrot.slane %v2303, 4
        %v2306 = vor.u32 %v2305, %v2301
        %v2307 = vrot.slane %v2306, 4
        %v2309 = vshll.u32 %v2054, 16
        %v2311 = vrot.slane %v2309, 5
        %v2312 = vsel %vm224, %v2307, %v2311
        %v2314 = vshrl.u32 %v2055, 16
        %v2316 = vrot.slane %v2314, 4
        %v2317 = vshll.u32 %v2055, 16
        %v2319 = vrot.slane %v2317, 5
        %v2320 = vor.u32 %v2316, %v2319
        %v2321 = vrot.slane %v2320, 4
        %v2323 = vshll.u32 %v2056, 16
        %v2325 = vrot.slane %v2323, 5
        %v2326 = vsel %vm224, %v2321, %v2325
        %v2327 = vshrl.u32 %v2056, 16
        %v2329 = vrot.slane %v2327, 4
        %v2330 = vor.u32 %v2329, %v2325
        %v2331 = vrot.slane %v2330, 4
        %v2333 = vshll.u32 %v2057, 16
        %v2335 = vrot.slane %v2333, 5
        %v2336 = vsel %vm224, %v2331, %v2335
        %v2338 = vshrl.u32 %v2058, 16
        %v2340 = vrot.slane %v2338, 4
        %v2341 = vshll.u32 %v2058, 16
        %v2343 = vrot.slane %v2341, 5
        %v2344 = vor.u32 %v2340, %v2343
        %v2345 = vrot.slane %v2344, 4
        %v2347 = vshll.u32 %v2059, 16
        %v2349 = vrot.slane %v2347, 5
        %v2350 = vsel %vm224, %v2345, %v2349
        %v2351 = vshrl.u32 %v2059, 16
        %v2353 = vrot.slane %v2351, 4
        %v2354 = vor.u32 %v2353, %v2349
        %v2355 = vrot.slane %v2354, 4
        %v2357 = vshll.u32 %v2060, 16
        %v2359 = vrot.slane %v2357, 5
        %v2360 = vsel %vm224, %v2355, %v2359
        %v2362 = vshrl.u32 %v2061, 16
        %v2364 = vrot.slane %v2362, 4
        %v2365 = vshll.u32 %v2061, 16
        %v2367 = vrot.slane %v2365, 5
        %v2368 = vor.u32 %v2364, %v2367
        %v2369 = vrot.slane %v2368, 4
        %v2371 = vshll.u32 %v2062, 16
        %v2373 = vrot.slane %v2371, 5
        %v2374 = vsel %vm224, %v2369, %v2373
        %v2375 = vshrl.u32 %v2062, 16
        %v2377 = vrot.slane %v2375, 4
        %v2378 = vor.u32 %v2377, %v2373
        %v2379 = vrot.slane %v2378, 4
        %v2381 = vshll.u32 %v2063, 16
        %v2383 = vrot.slane %v2381, 5
        %v2384 = vsel %vm224, %v2379, %v2383
        %v2386 = vshrl.u32 %v2064, 16
        %v2388 = vrot.slane %v2386, 4
        %v2389 = vshll.u32 %v2064, 16
        %v2391 = vrot.slane %v2389, 5
        %v2392 = vor.u32 %v2388, %v2391
        %v2393 = vrot.slane %v2392, 4
        %v2395 = vshll.u32 %v2065, 16
        %v2397 = vrot.slane %v2395, 5
        %v2398 = vsel %vm224, %v2393, %v2397
        %v2399 = vshrl.u32 %v2065, 16
        %v2401 = vrot.slane %v2399, 4
        %v2402 = vor.u32 %v2401, %v2397
        %v2403 = vrot.slane %v2402, 4
        %v2405 = vshll.u32 %v2066, 16
        %v2407 = vrot.slane %v2405, 5
        %v2408 = vsel %vm224, %v2403, %v2407
        %v2410 = vshrl.u32 %v2067, 16
        %v2412 = vrot.slane %v2410, 4
        %v2413 = vshll.u32 %v2067, 16
        %v2415 = vrot.slane %v2413, 5
        %v2416 = vor.u32 %v2412, %v2415
        %v2417 = vrot.slane %v2416, 4
        %v2419 = vshll.u32 %v2068, 16
        %v2421 = vrot.slane %v2419, 5
        %v2422 = vsel %vm224, %v2417, %v2421
        %v2423 = vshrl.u32 %v2068, 16
        %v2425 = vrot.slane %v2423, 4
        %v2426 = vor.u32 %v2425, %v2421
        %v2427 = vrot.slane %v2426, 4
        %v2429 = vshll.u32 %v2069, 16
        %v2431 = vrot.slane %v2429, 5
        %v2432 = vsel %vm224, %v2427, %v2431
        %v2434 = vshrl.u32 %v2070, 16
        %v2436 = vrot.slane %v2434, 4
        %v2437 = vshll.u32 %v2070, 16
        %v2439 = vrot.slane %v2437, 5
        %v2440 = vor.u32 %v2436, %v2439
        %v2441 = vrot.slane %v2440, 4
        %v2443 = vshll.u32 %v2071, 16
        %v2445 = vrot.slane %v2443, 5
        %v2446 = vsel %vm224, %v2441, %v2445
        %v2447 = vshrl.u32 %v2071, 16
        %v2449 = vrot.slane %v2447, 4
        %v2450 = vor.u32 %v2449, %v2445
        %v2451 = vrot.slane %v2450, 4
        %v2453 = vshll.u32 %v2072, 16
        %v2455 = vrot.slane %v2453, 5
        %v2456 = vsel %vm224, %v2451, %v2455
        %s2457 = scalar_lea.vmem %s1, 64
        %v2458 = vld [vmem:[%s2457] sm:$0xf]
        %v2459 = vld [vmem:[%s2457 + $0x4] sm:$0xf]
        %v2460 = vld [vmem:[%s2457 + $0x8] sm:$0xf]
        %v2461 = vld [vmem:[%s2457 + $0xc] sm:$0xf]
        %v2462 = vunpack.c.l.b16 %v2086
        %v2463 = vunpack.c.l.b16 %v2096
        %v2464 = vunpack.c.l.b16 %v2110
        %v2465 = vunpack.c.l.b16 %v2120
        %v2466 = vunpack.c.l.b16 %v2134
        %v2467 = vunpack.c.l.b16 %v2144
        %v2468 = vunpack.c.l.b16 %v2158
        %v2469 = vunpack.c.l.b16 %v2168
        %v2470 = vunpack.c.l.b16 %v2182
        %v2471 = vunpack.c.l.b16 %v2192
        %v2472 = vunpack.c.l.b16 %v2206
        %v2473 = vunpack.c.l.b16 %v2216
        %v2474 = vunpack.c.l.b16 %v2230
        %v2475 = vunpack.c.l.b16 %v2240
        %v2476 = vunpack.c.l.b16 %v2254
        %v2477 = vunpack.c.l.b16 %v2264
        %v2478 = vunpack.c.l.b16 %v2278
        %v2479 = vunpack.c.l.b16 %v2288
        %v2480 = vunpack.c.l.b16 %v2302
        %v2481 = vunpack.c.l.b16 %v2312
        %v2482 = vunpack.c.l.b16 %v2326
        %v2483 = vunpack.c.l.b16 %v2336
        %v2484 = vunpack.c.l.b16 %v2350
        %v2485 = vunpack.c.l.b16 %v2360
        %v2486 = vunpack.c.l.b16 %v2374
        %v2487 = vunpack.c.l.b16 %v2384
        %v2488 = vunpack.c.l.b16 %v2398
        %v2489 = vunpack.c.l.b16 %v2408
        %v2490 = vunpack.c.l.b16 %v2422
        %v2491 = vunpack.c.l.b16 %v2432
        %v2492 = vunpack.c.l.b16 %v2446
        %v2493 = vunpack.c.l.b16 %v2456
        %v2494 = vpack.c.b16 %v2463, %v2462
        %v2495 = vpack.c.b16 %v2465, %v2464
        %v2496 = vpack.c.b16 %v2467, %v2466
        %v2497 = vpack.c.b16 %v2469, %v2468
        %v2498 = vpack.c.b16 %v2471, %v2470
        %v2499 = vpack.c.b16 %v2473, %v2472
        %v2500 = vpack.c.b16 %v2475, %v2474
        %v2501 = vpack.c.b16 %v2477, %v2476
        %v2502 = vpack.c.b16 %v2479, %v2478
        %v2503 = vpack.c.b16 %v2481, %v2480
        %v2504 = vpack.c.b16 %v2483, %v2482
        %v2505 = vpack.c.b16 %v2485, %v2484
        %v2506 = vpack.c.b16 %v2487, %v2486
        %v2507 = vpack.c.b16 %v2489, %v2488
        %v2508 = vpack.c.b16 %v2491, %v2490
        %v2509 = vpack.c.b16 %v2493, %v2492
        %v2514 = vunpack.c.l.b16 %v2458
        %v2515 = vunpack.c.l.b16 %v2459
        %v2516 = vunpack.c.l.b16 %v2460
        %v2517 = vunpack.c.l.b16 %v2461
        %v2518 = vpack.c.b16 %v2515, %v2514
        %v2519 = vpack.c.b16 %v2517, %v2516
        %v2523 = vsel %vm674, %v2494, 0
        %v2526 = vsel %vm674, %v2495, 0
        %v2529 = vsel %vm674, %v2496, 0
        %v2532 = vsel %vm674, %v2497, 0
        %v2535 = vsel %vm674, %v2498, 0
        %v2538 = vsel %vm674, %v2499, 0
        %v2541 = vsel %vm674, %v2500, 0
        %v2544 = vsel %vm674, %v2501, 0
        %v2547 = vsel %vm674, %v2502, 0
        %v2550 = vsel %vm674, %v2503, 0
        %v2553 = vsel %vm674, %v2504, 0
        %v2556 = vsel %vm674, %v2505, 0
        %v2559 = vsel %vm674, %v2506, 0
        %v2562 = vsel %vm674, %v2507, 0
        %v2565 = vsel %vm674, %v2508, 0
        %v2568 = vsel %vm674, %v2509, 0
        %2570 = vmatprep.subr.bf16.mxu0 0
        %2571 = vmatpush1.bf16.msra.mxu0 %v2518
        %2572 = vmatprep.subr.bf16.mxu0 0
        %2573 = vmatpush1.bf16.msra.mxu0 %v2519
        %2574 = vmatprep.subr.bf16.mxu0 0
        %2575 = vmatpush1.bf16.msra.mxu0 0
        %2576 = vmatprep.subr.bf16.mxu0 0
        %2577 = vmatpush1.bf16.msra.mxu0 0
        %2578 = vmatprep.subr.bf16.mxu0 0
        %2579 = vmatpush1.bf16.msra.mxu0 0
        %2580 = vmatprep.subr.bf16.mxu0 0
        %2581 = vmatpush1.bf16.msra.mxu0 0
        %2582 = vmatprep.subr.bf16.mxu0 0
        %2583 = vmatpush1.bf16.msra.mxu0 0
        %2584 = vmatprep.subr.bf16.mxu0 0
        %2585 = vmatpush1.bf16.msra.mxu0 0
        %2586 = vmatprep.subr.bf16.mxu0 0
        %2587 = vmatpush1.bf16.msra.mxu0 0
        %2588 = vmatprep.subr.bf16.mxu0 0
        %2589 = vmatpush1.bf16.msra.mxu0 0
        %2590 = vmatprep.subr.bf16.mxu0 0
        %2591 = vmatpush1.bf16.msra.mxu0 0
        %2592 = vmatprep.subr.bf16.mxu0 0
        %2593 = vmatpush1.bf16.msra.mxu0 0
        %2594 = vmatprep.subr.bf16.mxu0 0
        %2595 = vmatpush1.bf16.msra.mxu0 0
        %2596 = vmatprep.subr.bf16.mxu0 0
        %2597 = vmatpush1.bf16.msra.mxu0 0
        %2598 = vmatprep.subr.bf16.mxu0 0
        %2599 = vmatpush1.bf16.msra.mxu0 0
        %2600 = vmatprep.subr.bf16.mxu0 0
        %2601 = vmatpush1.bf16.msra.mxu0 0
        %2602 = vmatprep.mubr.bf16.mxu0 0
        %2603 = vmatmul.mubr.bf16.gmra.mrb[0].mxu0 %v2523
        %v2604 = vpop.f32.mrb[0].mxu0
        %v2605 = vadd.f32 0.0, %v2604
        %v2606 = vpop.f32.mrb[0].mxu0
        %v2607 = vpop.f32.mrb[0].mxu0
        %v2608 = vadd.f32 0.0, %v2607
        %v2609 = vpop.f32.mrb[0].mxu0
        %2610 = vmatprep.mubr.bf16.mxu0 0
        %2611 = vmatmul.mubr.bf16.gmra.mrb[0].mxu0 %v2526
        %v2612 = vpop.f32.mrb[0].mxu0
        %v2613 = vadd.f32 0.0, %v2612
        %v2614 = vpop.f32.mrb[0].mxu0
        %v2615 = vpop.f32.mrb[0].mxu0
        %v2616 = vadd.f32 0.0, %v2615
        %v2617 = vpop.f32.mrb[0].mxu0
        %2618 = vmatprep.mubr.bf16.mxu0 0
        %2619 = vmatmul.mubr.bf16.gmra.mrb[0].mxu0 %v2529
        %v2620 = vpop.f32.mrb[0].mxu0
        %v2621 = vadd.f32 0.0, %v2620
        %v2622 = vpop.f32.mrb[0].mxu0
        %v2623 = vpop.f32.mrb[0].mxu0
        %v2624 = vadd.f32 0.0, %v2623
        %v2625 = vpop.f32.mrb[0].mxu0
        %2626 = vmatprep.mubr.bf16.mxu0 0
        %2627 = vmatmul.mubr.bf16.gmra.mrb[0].mxu0 %v2532
        %v2628 = vpop.f32.mrb[0].mxu0
        %v2629 = vadd.f32 0.0, %v2628
        %v2630 = vpop.f32.mrb[0].mxu0
        %v2631 = vpop.f32.mrb[0].mxu0
        %v2632 = vadd.f32 0.0, %v2631
        %v2633 = vpop.f32.mrb[0].mxu0
        %2634 = vmatprep.mubr.bf16.mxu0 0
        %2635 = vmatmul.mubr.bf16.gmra.mrb[0].mxu0 %v2535
        %v2636 = vpop.f32.mrb[0].mxu0
        %v2637 = vadd.f32 0.0, %v2636
        %v2638 = vpop.f32.mrb[0].mxu0
        %v2639 = vpop.f32.mrb[0].mxu0
        %v2640 = vadd.f32 0.0, %v2639
        %v2641 = vpop.f32.mrb[0].mxu0
        %2642 = vmatprep.mubr.bf16.mxu0 0
        %2643 = vmatmul.mubr.bf16.gmra.mrb[0].mxu0 %v2538
        %v2644 = vpop.f32.mrb[0].mxu0
        %v2645 = vadd.f32 0.0, %v2644
        %v2646 = vpop.f32.mrb[0].mxu0
        %v2647 = vpop.f32.mrb[0].mxu0
        %v2648 = vadd.f32 0.0, %v2647
        %v2649 = vpop.f32.mrb[0].mxu0
        %2650 = vmatprep.mubr.bf16.mxu0 0
        %2651 = vmatmul.mubr.bf16.gmra.mrb[0].mxu0 %v2541
        %v2652 = vpop.f32.mrb[0].mxu0
        %v2653 = vadd.f32 0.0, %v2652
        %v2654 = vpop.f32.mrb[0].mxu0
        %v2655 = vpop.f32.mrb[0].mxu0
        %v2656 = vadd.f32 0.0, %v2655
        %v2657 = vpop.f32.mrb[0].mxu0
        %2658 = vmatprep.mubr.bf16.mxu0 0
        %2659 = vmatmul.mubr.bf16.gmra.mrb[0].mxu0 %v2544
        %v2660 = vpop.f32.mrb[0].mxu0
        %v2661 = vadd.f32 0.0, %v2660
        %v2662 = vpop.f32.mrb[0].mxu0
        %v2663 = vpop.f32.mrb[0].mxu0
        %v2664 = vadd.f32 0.0, %v2663
        %v2665 = vpop.f32.mrb[0].mxu0
        %2666 = vmatprep.mubr.bf16.mxu0 0
        %2667 = vmatmul.mubr.bf16.gmra.mrb[0].mxu0 %v2547
        %v2668 = vpop.f32.mrb[0].mxu0
        %v2669 = vadd.f32 0.0, %v2668
        %v2670 = vpop.f32.mrb[0].mxu0
        %v2671 = vpop.f32.mrb[0].mxu0
        %v2672 = vadd.f32 0.0, %v2671
        %v2673 = vpop.f32.mrb[0].mxu0
        %2674 = vmatprep.mubr.bf16.mxu0 0
        %2675 = vmatmul.mubr.bf16.gmra.mrb[0].mxu0 %v2550
        %v2676 = vpop.f32.mrb[0].mxu0
        %v2677 = vadd.f32 0.0, %v2676
        %v2678 = vpop.f32.mrb[0].mxu0
        %v2679 = vpop.f32.mrb[0].mxu0
        %v2680 = vadd.f32 0.0, %v2679
        %v2681 = vpop.f32.mrb[0].mxu0
        %2682 = vmatprep.mubr.bf16.mxu0 0
        %2683 = vmatmul.mubr.bf16.gmra.mrb[0].mxu0 %v2553
        %v2684 = vpop.f32.mrb[0].mxu0
        %v2685 = vadd.f32 0.0, %v2684
        %v2686 = vpop.f32.mrb[0].mxu0
        %v2687 = vpop.f32.mrb[0].mxu0
        %v2688 = vadd.f32 0.0, %v2687
        %v2689 = vpop.f32.mrb[0].mxu0
        %2690 = vmatprep.mubr.bf16.mxu0 0
        %2691 = vmatmul.mubr.bf16.gmra.mrb[0].mxu0 %v2556
        %v2692 = vpop.f32.mrb[0].mxu0
        %v2693 = vadd.f32 0.0, %v2692
        %v2694 = vpop.f32.mrb[0].mxu0
        %v2695 = vpop.f32.mrb[0].mxu0
        %v2696 = vadd.f32 0.0, %v2695
        %v2697 = vpop.f32.mrb[0].mxu0
        %2698 = vmatprep.mubr.bf16.mxu0 0
        %2699 = vmatmul.mubr.bf16.gmra.mrb[0].mxu0 %v2559
        %v2700 = vpop.f32.mrb[0].mxu0
        %v2701 = vadd.f32 0.0, %v2700
        %v2702 = vpop.f32.mrb[0].mxu0
        %v2703 = vpop.f32.mrb[0].mxu0
        %v2704 = vadd.f32 0.0, %v2703
        %v2705 = vpop.f32.mrb[0].mxu0
        %2706 = vmatprep.mubr.bf16.mxu0 0
        %2707 = vmatmul.mubr.bf16.gmra.mrb[0].mxu0 %v2562
        %v2708 = vpop.f32.mrb[0].mxu0
        %v2709 = vadd.f32 0.0, %v2708
        %v2710 = vpop.f32.mrb[0].mxu0
        %v2711 = vpop.f32.mrb[0].mxu0
        %v2712 = vadd.f32 0.0, %v2711
        %v2713 = vpop.f32.mrb[0].mxu0
        %2714 = vmatprep.mubr.bf16.mxu0 0
        %2715 = vmatmul.mubr.bf16.gmra.mrb[0].mxu0 %v2565
        %v2716 = vpop.f32.mrb[0].mxu0
        %v2717 = vadd.f32 0.0, %v2716
        %v2718 = vpop.f32.mrb[0].mxu0
        %v2719 = vpop.f32.mrb[0].mxu0
        %v2720 = vadd.f32 0.0, %v2719
        %v2721 = vpop.f32.mrb[0].mxu0
        %2722 = vmatprep.mubr.bf16.mxu0 0
        %2723 = vmatmul.mubr.bf16.gmra.mrb[0].mxu0 %v2568
        %v2724 = vpop.f32.mrb[0].mxu0
        %v2725 = vadd.f32 0.0, %v2724
        %v2726 = vpop.f32.mrb[0].mxu0
        %v2727 = vpop.f32.mrb[0].mxu0
        %v2728 = vadd.f32 0.0, %v2727
        %v2729 = vpop.f32.mrb[0].mxu0
        %2730 = vdwg.mxu0
        %v2731 = vadd.f32 %v1993, %v2605
        %v2732 = vadd.f32 %v1994, %v2608
        %v2733 = vadd.f32 %v1995, %v2613
        %v2734 = vadd.f32 %v1996, %v2616
        %v2735 = vadd.f32 %v1997, %v2621
        %v2736 = vadd.f32 %v1998, %v2624
        %v2737 = vadd.f32 %v1999, %v2629
        %v2738 = vadd.f32 %v2000, %v2632
        %v2739 = vadd.f32 %v2001, %v2637
        %v2740 = vadd.f32 %v2002, %v2640
        %v2741 = vadd.f32 %v2003, %v2645
        %v2742 = vadd.f32 %v2004, %v2648
        %v2743 = vadd.f32 %v2005, %v2653
        %v2744 = vadd.f32 %v2006, %v2656
        %v2745 = vadd.f32 %v2007, %v2661
        %v2746 = vadd.f32 %v2008, %v2664
        %v2747 = vadd.f32 %v2009, %v2669
        %v2748 = vadd.f32 %v2010, %v2672
        %v2749 = vadd.f32 %v2011, %v2677
        %v2750 = vadd.f32 %v2012, %v2680
        %v2751 = vadd.f32 %v2013, %v2685
        %v2752 = vadd.f32 %v2014, %v2688
        %v2753 = vadd.f32 %v2015, %v2693
        %v2754 = vadd.f32 %v2016, %v2696
        %v2755 = vadd.f32 %v2017, %v2701
        %v2756 = vadd.f32 %v2018, %v2704
        %v2757 = vadd.f32 %v2019, %v2709
        %v2758 = vadd.f32 %v2020, %v2712
        %v2759 = vadd.f32 %v2021, %v2717
        %v2760 = vadd.f32 %v2022, %v2720
        %v2761 = vadd.f32 %v2023, %v2725
        %v2762 = vadd.f32 %v2024, %v2728
        %v2763 = vld [vmem:[%s1654] sm:$0xe]
        %v2764 = vld [vmem:[%s1654 + $0xc] sm:$0xe]
        %v2765 = vld [vmem:[%s1654 + $0x18] sm:$0xe]
        %v2766 = vld [vmem:[%s1654 + $0x24] sm:$0xe]
        %v2767 = vld [vmem:[%s1654 + $0x30] sm:$0xe]
        %v2768 = vld [vmem:[%s1654 + $0x3c] sm:$0xe]
        %v2769 = vld [vmem:[%s1654 + $0x48] sm:$0xe]
        %v2770 = vld [vmem:[%s1654 + $0x54] sm:$0xe]
        %v2771 = vld [vmem:[%s1654 + $0x60] sm:$0xe]
        %v2772 = vld [vmem:[%s1654 + $0x6c] sm:$0xe]
        %v2773 = vld [vmem:[%s1654 + $0x78] sm:$0xe]
        %v2774 = vld [vmem:[%s1654 + $0x84] sm:$0xe]
        %v2775 = vld [vmem:[%s1654 + $0x90] sm:$0xe]
        %v2776 = vld [vmem:[%s1654 + $0x9c] sm:$0xe]
        %v2777 = vld [vmem:[%s1654 + $0xa8] sm:$0xe]
        %v2778 = vld [vmem:[%s1654 + $0xb4] sm:$0xe]
        %v2827 = vrot.slane %v2763, 5
        %v2828 = vrot.slane %v2827, 4
        %v2829 = vrot.slane %v2026, 5
        %v2830 = vsel %vm1235, %v2828, %v2829
        %v2831 = vrot.slane %v2829, 4
        %v2832 = vrot.slane %v2027, 5
        %v2833 = vsel %vm1235, %v2831, %v2832
        %v2834 = vrot.slane %v2764, 5
        %v2835 = vrot.slane %v2834, 4
        %v2836 = vrot.slane %v2029, 5
        %v2837 = vsel %vm1235, %v2835, %v2836
        %v2838 = vrot.slane %v2836, 4
        %v2839 = vrot.slane %v2030, 5
        %v2840 = vsel %vm1235, %v2838, %v2839
        %v2841 = vrot.slane %v2765, 5
        %v2842 = vrot.slane %v2841, 4
        %v2843 = vrot.slane %v2032, 5
        %v2844 = vsel %vm1235, %v2842, %v2843
        %v2845 = vrot.slane %v2843, 4
        %v2846 = vrot.slane %v2033, 5
        %v2847 = vsel %vm1235, %v2845, %v2846
        %v2848 = vrot.slane %v2766, 5
        %v2849 = vrot.slane %v2848, 4
        %v2850 = vrot.slane %v2035, 5
        %v2851 = vsel %vm1235, %v2849, %v2850
        %v2852 = vrot.slane %v2850, 4
        %v2853 = vrot.slane %v2036, 5
        %v2854 = vsel %vm1235, %v2852, %v2853
        %v2855 = vrot.slane %v2767, 5
        %v2856 = vrot.slane %v2855, 4
        %v2857 = vrot.slane %v2038, 5
        %v2858 = vsel %vm1235, %v2856, %v2857
        %v2859 = vrot.slane %v2857, 4
        %v2860 = vrot.slane %v2039, 5
        %v2861 = vsel %vm1235, %v2859, %v2860
        %v2862 = vrot.slane %v2768, 5
        %v2863 = vrot.slane %v2862, 4
        %v2864 = vrot.slane %v2041, 5
        %v2865 = vsel %vm1235, %v2863, %v2864
        %v2866 = vrot.slane %v2864, 4
        %v2867 = vrot.slane %v2042, 5
        %v2868 = vsel %vm1235, %v2866, %v2867
        %v2869 = vrot.slane %v2769, 5
        %v2870 = vrot.slane %v2869, 4
        %v2871 = vrot.slane %v2044, 5
        %v2872 = vsel %vm1235, %v2870, %v2871
        %v2873 = vrot.slane %v2871, 4
        %v2874 = vrot.slane %v2045, 5
        %v2875 = vsel %vm1235, %v2873, %v2874
        %v2876 = vrot.slane %v2770, 5
        %v2877 = vrot.slane %v2876, 4
        %v2878 = vrot.slane %v2047, 5
        %v2879 = vsel %vm1235, %v2877, %v2878
        %v2880 = vrot.slane %v2878, 4
        %v2881 = vrot.slane %v2048, 5
        %v2882 = vsel %vm1235, %v2880, %v2881
        %v2883 = vrot.slane %v2771, 5
        %v2884 = vrot.slane %v2883, 4
        %v2885 = vrot.slane %v2050, 5
        %v2886 = vsel %vm1235, %v2884, %v2885
        %v2887 = vrot.slane %v2885, 4
        %v2888 = vrot.slane %v2051, 5
        %v2889 = vsel %vm1235, %v2887, %v2888
        %v2890 = vrot.slane %v2772, 5
        %v2891 = vrot.slane %v2890, 4
        %v2892 = vrot.slane %v2053, 5
        %v2893 = vsel %vm1235, %v2891, %v2892
        %v2894 = vrot.slane %v2892, 4
        %v2895 = vrot.slane %v2054, 5
        %v2896 = vsel %vm1235, %v2894, %v2895
        %v2897 = vrot.slane %v2773, 5
        %v2898 = vrot.slane %v2897, 4
        %v2899 = vrot.slane %v2056, 5
        %v2900 = vsel %vm1235, %v2898, %v2899
        %v2901 = vrot.slane %v2899, 4
        %v2902 = vrot.slane %v2057, 5
        %v2903 = vsel %vm1235, %v2901, %v2902
        %v2904 = vrot.slane %v2774, 5
        %v2905 = vrot.slane %v2904, 4
        %v2906 = vrot.slane %v2059, 5
        %v2907 = vsel %vm1235, %v2905, %v2906
        %v2908 = vrot.slane %v2906, 4
        %v2909 = vrot.slane %v2060, 5
        %v2910 = vsel %vm1235, %v2908, %v2909
        %v2911 = vrot.slane %v2775, 5
        %v2912 = vrot.slane %v2911, 4
        %v2913 = vrot.slane %v2062, 5
        %v2914 = vsel %vm1235, %v2912, %v2913
        %v2915 = vrot.slane %v2913, 4
        %v2916 = vrot.slane %v2063, 5
        %v2917 = vsel %vm1235, %v2915, %v2916
        %v2918 = vrot.slane %v2776, 5
        %v2919 = vrot.slane %v2918, 4
        %v2920 = vrot.slane %v2065, 5
        %v2921 = vsel %vm1235, %v2919, %v2920
        %v2922 = vrot.slane %v2920, 4
        %v2923 = vrot.slane %v2066, 5
        %v2924 = vsel %vm1235, %v2922, %v2923
        %v2925 = vrot.slane %v2777, 5
        %v2926 = vrot.slane %v2925, 4
        %v2927 = vrot.slane %v2068, 5
        %v2928 = vsel %vm1235, %v2926, %v2927
        %v2929 = vrot.slane %v2927, 4
        %v2930 = vrot.slane %v2069, 5
        %v2931 = vsel %vm1235, %v2929, %v2930
        %v2932 = vrot.slane %v2778, 5
        %v2933 = vrot.slane %v2932, 4
        %v2934 = vrot.slane %v2071, 5
        %v2935 = vsel %vm1235, %v2933, %v2934
        %v2936 = vrot.slane %v2934, 4
        %v2937 = vrot.slane %v2072, 5
        %v2938 = vsel %vm1235, %v2936, %v2937
        %s2939 = scalar_lea.vmem %s1, 80
        %v2940 = vld [vmem:[%s2939] sm:$0xf]
        %v2941 = vld [vmem:[%s2939 + $0x4] sm:$0xf]
        %v2942 = vld [vmem:[%s2939 + $0x8] sm:$0xf]
        %v2943 = vld [vmem:[%s2939 + $0xc] sm:$0xf]
        %v2944 = vunpack.c.l.b16 %v2830
        %v2945 = vunpack.c.l.b16 %v2833
        %v2946 = vunpack.c.l.b16 %v2837
        %v2947 = vunpack.c.l.b16 %v2840
        %v2948 = vunpack.c.l.b16 %v2844
        %v2949 = vunpack.c.l.b16 %v2847
        %v2950 = vunpack.c.l.b16 %v2851
        %v2951 = vunpack.c.l.b16 %v2854
        %v2952 = vunpack.c.l.b16 %v2858
        %v2953 = vunpack.c.l.b16 %v2861
        %v2954 = vunpack.c.l.b16 %v2865
        %v2955 = vunpack.c.l.b16 %v2868
        %v2956 = vunpack.c.l.b16 %v2872
        %v2957 = vunpack.c.l.b16 %v2875
        %v2958 = vunpack.c.l.b16 %v2879
        %v2959 = vunpack.c.l.b16 %v2882
        %v2960 = vunpack.c.l.b16 %v2886
        %v2961 = vunpack.c.l.b16 %v2889
        %v2962 = vunpack.c.l.b16 %v2893
        %v2963 = vunpack.c.l.b16 %v2896
        %v2964 = vunpack.c.l.b16 %v2900
        %v2965 = vunpack.c.l.b16 %v2903
        %v2966 = vunpack.c.l.b16 %v2907
        %v2967 = vunpack.c.l.b16 %v2910
        %v2968 = vunpack.c.l.b16 %v2914
        %v2969 = vunpack.c.l.b16 %v2917
        %v2970 = vunpack.c.l.b16 %v2921
        %v2971 = vunpack.c.l.b16 %v2924
        %v2972 = vunpack.c.l.b16 %v2928
        %v2973 = vunpack.c.l.b16 %v2931
        %v2974 = vunpack.c.l.b16 %v2935
        %v2975 = vunpack.c.l.b16 %v2938
        %v2976 = vpack.c.b16 %v2945, %v2944
        %v2977 = vpack.c.b16 %v2947, %v2946
        %v2978 = vpack.c.b16 %v2949, %v2948
        %v2979 = vpack.c.b16 %v2951, %v2950
        %v2980 = vpack.c.b16 %v2953, %v2952
        %v2981 = vpack.c.b16 %v2955, %v2954
        %v2982 = vpack.c.b16 %v2957, %v2956
        %v2983 = vpack.c.b16 %v2959, %v2958
        %v2984 = vpack.c.b16 %v2961, %v2960
        %v2985 = vpack.c.b16 %v2963, %v2962
        %v2986 = vpack.c.b16 %v2965, %v2964
        %v2987 = vpack.c.b16 %v2967, %v2966
        %v2988 = vpack.c.b16 %v2969, %v2968
        %v2989 = vpack.c.b16 %v2971, %v2970
        %v2990 = vpack.c.b16 %v2973, %v2972
        %v2991 = vpack.c.b16 %v2975, %v2974
        %v2996 = vunpack.c.l.b16 %v2940
        %v2997 = vunpack.c.l.b16 %v2941
        %v2998 = vunpack.c.l.b16 %v2942
        %v2999 = vunpack.c.l.b16 %v2943
        %v3000 = vpack.c.b16 %v2997, %v2996
        %v3001 = vpack.c.b16 %v2999, %v2998
        %v3005 = vsel %vm674, %v2976, 0
        %v3008 = vsel %vm674, %v2977, 0
        %v3011 = vsel %vm674, %v2978, 0
        %v3014 = vsel %vm674, %v2979, 0
        %v3017 = vsel %vm674, %v2980, 0
        %v3020 = vsel %vm674, %v2981, 0
        %v3023 = vsel %vm674, %v2982, 0
        %v3026 = vsel %vm674, %v2983, 0
        %v3029 = vsel %vm674, %v2984, 0
        %v3032 = vsel %vm674, %v2985, 0
        %v3035 = vsel %vm674, %v2986, 0
        %v3038 = vsel %vm674, %v2987, 0
        %v3041 = vsel %vm674, %v2988, 0
        %v3044 = vsel %vm674, %v2989, 0
        %v3047 = vsel %vm674, %v2990, 0
        %v3050 = vsel %vm674, %v2991, 0
        %3052 = vmatprep.subr.bf16.mxu0 0
        %3053 = vmatpush1.bf16.msra.mxu0 %v3000
        %3054 = vmatprep.subr.bf16.mxu0 0
        %3055 = vmatpush1.bf16.msra.mxu0 %v3001
        %3056 = vmatprep.subr.bf16.mxu0 0
        %3057 = vmatpush1.bf16.msra.mxu0 0
        %3058 = vmatprep.subr.bf16.mxu0 0
        %3059 = vmatpush1.bf16.msra.mxu0 0
        %3060 = vmatprep.subr.bf16.mxu0 0
        %3061 = vmatpush1.bf16.msra.mxu0 0
        %3062 = vmatprep.subr.bf16.mxu0 0
        %3063 = vmatpush1.bf16.msra.mxu0 0
        %3064 = vmatprep.subr.bf16.mxu0 0
        %3065 = vmatpush1.bf16.msra.mxu0 0
        %3066 = vmatprep.subr.bf16.mxu0 0
        %3067 = vmatpush1.bf16.msra.mxu0 0
        %3068 = vmatprep.subr.bf16.mxu0 0
        %3069 = vmatpush1.bf16.msra.mxu0 0
        %3070 = vmatprep.subr.bf16.mxu0 0
        %3071 = vmatpush1.bf16.msra.mxu0 0
        %3072 = vmatprep.subr.bf16.mxu0 0
        %3073 = vmatpush1.bf16.msra.mxu0 0
        %3074 = vmatprep.subr.bf16.mxu0 0
        %3075 = vmatpush1.bf16.msra.mxu0 0
        %3076 = vmatprep.subr.bf16.mxu0 0
        %3077 = vmatpush1.bf16.msra.mxu0 0
        %3078 = vmatprep.subr.bf16.mxu0 0
        %3079 = vmatpush1.bf16.msra.mxu0 0
        %3080 = vmatprep.subr.bf16.mxu0 0
        %3081 = vmatpush1.bf16.msra.mxu0 0
        %3082 = vmatprep.subr.bf16.mxu0 0
        %3083 = vmatpush1.bf16.msra.mxu0 0
        %3084 = vmatprep.mubr.bf16.mxu0 0
        %3085 = vmatmul.mubr.bf16.gmra.mrb[0].mxu0 %v3005
        %v3086 = vpop.f32.mrb[0].mxu0
        %v3087 = vadd.f32 0.0, %v3086
        %v3088 = vpop.f32.mrb[0].mxu0
        %v3089 = vpop.f32.mrb[0].mxu0
        %v3090 = vadd.f32 0.0, %v3089
        %v3091 = vpop.f32.mrb[0].mxu0
        %3092 = vmatprep.mubr.bf16.mxu0 0
        %3093 = vmatmul.mubr.bf16.gmra.mrb[0].mxu0 %v3008
        %v3094 = vpop.f32.mrb[0].mxu0
        %v3095 = vadd.f32 0.0, %v3094
        %v3096 = vpop.f32.mrb[0].mxu0
        %v3097 = vpop.f32.mrb[0].mxu0
        %v3098 = vadd.f32 0.0, %v3097
        %v3099 = vpop.f32.mrb[0].mxu0
        %3100 = vmatprep.mubr.bf16.mxu0 0
        %3101 = vmatmul.mubr.bf16.gmra.mrb[0].mxu0 %v3011
        %v3102 = vpop.f32.mrb[0].mxu0
        %v3103 = vadd.f32 0.0, %v3102
        %v3104 = vpop.f32.mrb[0].mxu0
        %v3105 = vpop.f32.mrb[0].mxu0
        %v3106 = vadd.f32 0.0, %v3105
        %v3107 = vpop.f32.mrb[0].mxu0
        %3108 = vmatprep.mubr.bf16.mxu0 0
        %3109 = vmatmul.mubr.bf16.gmra.mrb[0].mxu0 %v3014
        %v3110 = vpop.f32.mrb[0].mxu0
        %v3111 = vadd.f32 0.0, %v3110
        %v3112 = vpop.f32.mrb[0].mxu0
        %v3113 = vpop.f32.mrb[0].mxu0
        %v3114 = vadd.f32 0.0, %v3113
        %v3115 = vpop.f32.mrb[0].mxu0
        %3116 = vmatprep.mubr.bf16.mxu0 0
        %3117 = vmatmul.mubr.bf16.gmra.mrb[0].mxu0 %v3017
        %v3118 = vpop.f32.mrb[0].mxu0
        %v3119 = vadd.f32 0.0, %v3118
        %v3120 = vpop.f32.mrb[0].mxu0
        %v3121 = vpop.f32.mrb[0].mxu0
        %v3122 = vadd.f32 0.0, %v3121
        %v3123 = vpop.f32.mrb[0].mxu0
        %3124 = vmatprep.mubr.bf16.mxu0 0
        %3125 = vmatmul.mubr.bf16.gmra.mrb[0].mxu0 %v3020
        %v3126 = vpop.f32.mrb[0].mxu0
        %v3127 = vadd.f32 0.0, %v3126
        %v3128 = vpop.f32.mrb[0].mxu0
        %v3129 = vpop.f32.mrb[0].mxu0
        %v3130 = vadd.f32 0.0, %v3129
        %v3131 = vpop.f32.mrb[0].mxu0
        %3132 = vmatprep.mubr.bf16.mxu0 0
        %3133 = vmatmul.mubr.bf16.gmra.mrb[0].mxu0 %v3023
        %v3134 = vpop.f32.mrb[0].mxu0
        %v3135 = vadd.f32 0.0, %v3134
        %v3136 = vpop.f32.mrb[0].mxu0
        %v3137 = vpop.f32.mrb[0].mxu0
        %v3138 = vadd.f32 0.0, %v3137
        %v3139 = vpop.f32.mrb[0].mxu0
        %3140 = vmatprep.mubr.bf16.mxu0 0
        %3141 = vmatmul.mubr.bf16.gmra.mrb[0].mxu0 %v3026
        %v3142 = vpop.f32.mrb[0].mxu0
        %v3143 = vadd.f32 0.0, %v3142
        %v3144 = vpop.f32.mrb[0].mxu0
        %v3145 = vpop.f32.mrb[0].mxu0
        %v3146 = vadd.f32 0.0, %v3145
        %v3147 = vpop.f32.mrb[0].mxu0
        %3148 = vmatprep.mubr.bf16.mxu0 0
        %3149 = vmatmul.mubr.bf16.gmra.mrb[0].mxu0 %v3029
        %v3150 = vpop.f32.mrb[0].mxu0
        %v3151 = vadd.f32 0.0, %v3150
        %v3152 = vpop.f32.mrb[0].mxu0
        %v3153 = vpop.f32.mrb[0].mxu0
        %v3154 = vadd.f32 0.0, %v3153
        %v3155 = vpop.f32.mrb[0].mxu0
        %3156 = vmatprep.mubr.bf16.mxu0 0
        %3157 = vmatmul.mubr.bf16.gmra.mrb[0].mxu0 %v3032
        %v3158 = vpop.f32.mrb[0].mxu0
        %v3159 = vadd.f32 0.0, %v3158
        %v3160 = vpop.f32.mrb[0].mxu0
        %v3161 = vpop.f32.mrb[0].mxu0
        %v3162 = vadd.f32 0.0, %v3161
        %v3163 = vpop.f32.mrb[0].mxu0
        %3164 = vmatprep.mubr.bf16.mxu0 0
        %3165 = vmatmul.mubr.bf16.gmra.mrb[0].mxu0 %v3035
        %v3166 = vpop.f32.mrb[0].mxu0
        %v3167 = vadd.f32 0.0, %v3166
        %v3168 = vpop.f32.mrb[0].mxu0
        %v3169 = vpop.f32.mrb[0].mxu0
        %v3170 = vadd.f32 0.0, %v3169
        %v3171 = vpop.f32.mrb[0].mxu0
        %3172 = vmatprep.mubr.bf16.mxu0 0
        %3173 = vmatmul.mubr.bf16.gmra.mrb[0].mxu0 %v3038
        %v3174 = vpop.f32.mrb[0].mxu0
        %v3175 = vadd.f32 0.0, %v3174
        %v3176 = vpop.f32.mrb[0].mxu0
        %v3177 = vpop.f32.mrb[0].mxu0
        %v3178 = vadd.f32 0.0, %v3177
        %v3179 = vpop.f32.mrb[0].mxu0
        %3180 = vmatprep.mubr.bf16.mxu0 0
        %3181 = vmatmul.mubr.bf16.gmra.mrb[0].mxu0 %v3041
        %v3182 = vpop.f32.mrb[0].mxu0
        %v3183 = vadd.f32 0.0, %v3182
        %v3184 = vpop.f32.mrb[0].mxu0
        %v3185 = vpop.f32.mrb[0].mxu0
        %v3186 = vadd.f32 0.0, %v3185
        %v3187 = vpop.f32.mrb[0].mxu0
        %3188 = vmatprep.mubr.bf16.mxu0 0
        %3189 = vmatmul.mubr.bf16.gmra.mrb[0].mxu0 %v3044
        %v3190 = vpop.f32.mrb[0].mxu0
        %v3191 = vadd.f32 0.0, %v3190
        %v3192 = vpop.f32.mrb[0].mxu0
        %v3193 = vpop.f32.mrb[0].mxu0
        %v3194 = vadd.f32 0.0, %v3193
        %v3195 = vpop.f32.mrb[0].mxu0
        %3196 = vmatprep.mubr.bf16.mxu0 0
        %3197 = vmatmul.mubr.bf16.gmra.mrb[0].mxu0 %v3047
        %v3198 = vpop.f32.mrb[0].mxu0
        %v3199 = vadd.f32 0.0, %v3198
        %v3200 = vpop.f32.mrb[0].mxu0
        %v3201 = vpop.f32.mrb[0].mxu0
        %v3202 = vadd.f32 0.0, %v3201
        %v3203 = vpop.f32.mrb[0].mxu0
        %3204 = vmatprep.mubr.bf16.mxu0 0
        %3205 = vmatmul.mubr.bf16.gmra.mrb[0].mxu0 %v3050
        %v3206 = vpop.f32.mrb[0].mxu0
        %v3207 = vadd.f32 0.0, %v3206
        %v3208 = vpop.f32.mrb[0].mxu0
        %v3209 = vpop.f32.mrb[0].mxu0
        %v3210 = vadd.f32 0.0, %v3209
        %v3211 = vpop.f32.mrb[0].mxu0
        %3212 = vdwg.mxu0
        %v3213 = vadd.f32 %v2731, %v3087
        %v3214 = vadd.f32 %v2732, %v3090
        %v3215 = vadd.f32 %v2733, %v3095
        %v3216 = vadd.f32 %v2734, %v3098
        %v3217 = vadd.f32 %v2735, %v3103
        %v3218 = vadd.f32 %v2736, %v3106
        %v3219 = vadd.f32 %v2737, %v3111
        %v3220 = vadd.f32 %v2738, %v3114
        %v3221 = vadd.f32 %v2739, %v3119
        %v3222 = vadd.f32 %v2740, %v3122
        %v3223 = vadd.f32 %v2741, %v3127
        %v3224 = vadd.f32 %v2742, %v3130
        %v3225 = vadd.f32 %v2743, %v3135
        %v3226 = vadd.f32 %v2744, %v3138
        %v3227 = vadd.f32 %v2745, %v3143
        %v3228 = vadd.f32 %v2746, %v3146
        %v3229 = vadd.f32 %v2747, %v3151
        %v3230 = vadd.f32 %v2748, %v3154
        %v3231 = vadd.f32 %v2749, %v3159
        %v3232 = vadd.f32 %v2750, %v3162
        %v3233 = vadd.f32 %v2751, %v3167
        %v3234 = vadd.f32 %v2752, %v3170
        %v3235 = vadd.f32 %v2753, %v3175
        %v3236 = vadd.f32 %v2754, %v3178
        %v3237 = vadd.f32 %v2755, %v3183
        %v3238 = vadd.f32 %v2756, %v3186
        %v3239 = vadd.f32 %v2757, %v3191
        %v3240 = vadd.f32 %v2758, %v3194
        %v3241 = vadd.f32 %v2759, %v3199
        %v3242 = vadd.f32 %v2760, %v3202
        %v3243 = vadd.f32 %v2761, %v3207
        %v3244 = vadd.f32 %v2762, %v3210
        %s3245 = scalar_lea.vmem %s168, 24
        %v3246 = vld [vmem:[%s3245] sm:$0xf]
        %v3247 = vld [vmem:[%s3245 + $0x4] sm:$0xf]
        %v3248 = vld [vmem:[%s3245 + $0xc] sm:$0xf]
        %v3249 = vld [vmem:[%s3245 + $0x10] sm:$0xf]
        %v3250 = vld [vmem:[%s3245 + $0x18] sm:$0xf]
        %v3251 = vld [vmem:[%s3245 + $0x1c] sm:$0xf]
        %v3252 = vld [vmem:[%s3245 + $0x24] sm:$0xf]
        %v3253 = vld [vmem:[%s3245 + $0x28] sm:$0xf]
        %v3254 = vld [vmem:[%s3245 + $0x30] sm:$0xf]
        %v3255 = vld [vmem:[%s3245 + $0x34] sm:$0xf]
        %v3256 = vld [vmem:[%s3245 + $0x3c] sm:$0xf]
        %v3257 = vld [vmem:[%s3245 + $0x40] sm:$0xf]
        %v3258 = vld [vmem:[%s3245 + $0x48] sm:$0xf]
        %v3259 = vld [vmem:[%s3245 + $0x4c] sm:$0xf]
        %v3260 = vld [vmem:[%s3245 + $0x54] sm:$0xf]
        %v3261 = vld [vmem:[%s3245 + $0x58] sm:$0xf]
        %v3262 = vld [vmem:[%s3245 + $0x60] sm:$0xf]
        %v3263 = vld [vmem:[%s3245 + $0x64] sm:$0xf]
        %v3264 = vld [vmem:[%s3245 + $0x6c] sm:$0xf]
        %v3265 = vld [vmem:[%s3245 + $0x70] sm:$0xf]
        %v3266 = vld [vmem:[%s3245 + $0x78] sm:$0xf]
        %v3267 = vld [vmem:[%s3245 + $0x7c] sm:$0xf]
        %v3268 = vld [vmem:[%s3245 + $0x84] sm:$0xf]
        %v3269 = vld [vmem:[%s3245 + $0x88] sm:$0xf]
        %v3270 = vld [vmem:[%s3245 + $0x90] sm:$0xf]
        %v3271 = vld [vmem:[%s3245 + $0x94] sm:$0xf]
        %v3272 = vld [vmem:[%s3245 + $0x9c] sm:$0xf]
        %v3273 = vld [vmem:[%s3245 + $0xa0] sm:$0xf]
        %v3274 = vld [vmem:[%s3245 + $0xa8] sm:$0xf]
        %v3275 = vld [vmem:[%s3245 + $0xac] sm:$0xf]
        %v3276 = vld [vmem:[%s3245 + $0xb4] sm:$0xf]
        %v3277 = vld [vmem:[%s3245 + $0xb8] sm:$0xf]
        %s3278 = scalar_lea.vmem %s1, 96
        %v3279 = vld [vmem:[%s3278] sm:$0xf]
        %v3280 = vld [vmem:[%s3278 + $0x4] sm:$0xf]
        %v3281 = vld [vmem:[%s3278 + $0x8] sm:$0xf]
        %v3282 = vld [vmem:[%s3278 + $0xc] sm:$0xf]
        %v3315 = vunpack.c.l.b16 %v3246
        %v3316 = vunpack.c.l.b16 %v3247
        %v3317 = vunpack.c.l.b16 %v3248
        %v3318 = vunpack.c.l.b16 %v3249
        %v3319 = vunpack.c.l.b16 %v3250
        %v3320 = vunpack.c.l.b16 %v3251
        %v3321 = vunpack.c.l.b16 %v3252
        %v3322 = vunpack.c.l.b16 %v3253
        %v3323 = vunpack.c.l.b16 %v3254
        %v3324 = vunpack.c.l.b16 %v3255
        %v3325 = vunpack.c.l.b16 %v3256
        %v3326 = vunpack.c.l.b16 %v3257
        %v3327 = vunpack.c.l.b16 %v3258
        %v3328 = vunpack.c.l.b16 %v3259
        %v3329 = vunpack.c.l.b16 %v3260
        %v3330 = vunpack.c.l.b16 %v3261
        %v3331 = vunpack.c.l.b16 %v3262
        %v3332 = vunpack.c.l.b16 %v3263
        %v3333 = vunpack.c.l.b16 %v3264
        %v3334 = vunpack.c.l.b16 %v3265
        %v3335 = vunpack.c.l.b16 %v3266
        %v3336 = vunpack.c.l.b16 %v3267
        %v3337 = vunpack.c.l.b16 %v3268
        %v3338 = vunpack.c.l.b16 %v3269
        %v3339 = vunpack.c.l.b16 %v3270
        %v3340 = vunpack.c.l.b16 %v3271
        %v3341 = vunpack.c.l.b16 %v3272
        %v3342 = vunpack.c.l.b16 %v3273
        %v3343 = vunpack.c.l.b16 %v3274
        %v3344 = vunpack.c.l.b16 %v3275
        %v3345 = vunpack.c.l.b16 %v3276
        %v3346 = vunpack.c.l.b16 %v3277
        %v3347 = vpack.c.b16 %v3316, %v3315
        %v3348 = vpack.c.b16 %v3318, %v3317
        %v3349 = vpack.c.b16 %v3320, %v3319
        %v3350 = vpack.c.b16 %v3322, %v3321
        %v3351 = vpack.c.b16 %v3324, %v3323
        %v3352 = vpack.c.b16 %v3326, %v3325
        %v3353 = vpack.c.b16 %v3328, %v3327
        %v3354 = vpack.c.b16 %v3330, %v3329
        %v3355 = vpack.c.b16 %v3332, %v3331
        %v3356 = vpack.c.b16 %v3334, %v3333
        %v3357 = vpack.c.b16 %v3336, %v3335
        %v3358 = vpack.c.b16 %v3338, %v3337
        %v3359 = vpack.c.b16 %v3340, %v3339
        %v3360 = vpack.c.b16 %v3342, %v3341
        %v3361 = vpack.c.b16 %v3344, %v3343
        %v3362 = vpack.c.b16 %v3346, %v3345
        %v3367 = vunpack.c.l.b16 %v3279
        %v3368 = vunpack.c.l.b16 %v3280
        %v3369 = vunpack.c.l.b16 %v3281
        %v3370 = vunpack.c.l.b16 %v3282
        %v3371 = vpack.c.b16 %v3368, %v3367
        %v3372 = vpack.c.b16 %v3370, %v3369
        %v3376 = vsel %vm674, %v3347, 0
        %v3379 = vsel %vm674, %v3348, 0
        %v3382 = vsel %vm674, %v3349, 0
        %v3385 = vsel %vm674, %v3350, 0
        %v3388 = vsel %vm674, %v3351, 0
        %v3391 = vsel %vm674, %v3352, 0
        %v3394 = vsel %vm674, %v3353, 0
        %v3397 = vsel %vm674, %v3354, 0
        %v3400 = vsel %vm674, %v3355, 0
        %v3403 = vsel %vm674, %v3356, 0
        %v3406 = vsel %vm674, %v3357, 0
        %v3409 = vsel %vm674, %v3358, 0
        %v3412 = vsel %vm674, %v3359, 0
        %v3415 = vsel %vm674, %v3360, 0
        %v3418 = vsel %vm674, %v3361, 0
        %v3421 = vsel %vm674, %v3362, 0
        %3423 = vmatprep.subr.bf16.mxu0 0
        %3424 = vmatpush1.bf16.msra.mxu0 %v3371
        %3425 = vmatprep.subr.bf16.mxu0 0
        %3426 = vmatpush1.bf16.msra.mxu0 %v3372
        %3427 = vmatprep.subr.bf16.mxu0 0
        %3428 = vmatpush1.bf16.msra.mxu0 0
        %3429 = vmatprep.subr.bf16.mxu0 0
        %3430 = vmatpush1.bf16.msra.mxu0 0
        %3431 = vmatprep.subr.bf16.mxu0 0
        %3432 = vmatpush1.bf16.msra.mxu0 0
        %3433 = vmatprep.subr.bf16.mxu0 0
        %3434 = vmatpush1.bf16.msra.mxu0 0
        %3435 = vmatprep.subr.bf16.mxu0 0
        %3436 = vmatpush1.bf16.msra.mxu0 0
        %3437 = vmatprep.subr.bf16.mxu0 0
        %3438 = vmatpush1.bf16.msra.mxu0 0
        %3439 = vmatprep.subr.bf16.mxu0 0
        %3440 = vmatpush1.bf16.msra.mxu0 0
        %3441 = vmatprep.subr.bf16.mxu0 0
        %3442 = vmatpush1.bf16.msra.mxu0 0
        %3443 = vmatprep.subr.bf16.mxu0 0
        %3444 = vmatpush1.bf16.msra.mxu0 0
        %3445 = vmatprep.subr.bf16.mxu0 0
        %3446 = vmatpush1.bf16.msra.mxu0 0
        %3447 = vmatprep.subr.bf16.mxu0 0
        %3448 = vmatpush1.bf16.msra.mxu0 0
        %3449 = vmatprep.subr.bf16.mxu0 0
        %3450 = vmatpush1.bf16.msra.mxu0 0
        %3451 = vmatprep.subr.bf16.mxu0 0
        %3452 = vmatpush1.bf16.msra.mxu0 0
        %3453 = vmatprep.subr.bf16.mxu0 0
        %3454 = vmatpush1.bf16.msra.mxu0 0
        %3455 = vmatprep.mubr.bf16.mxu0 0
        %3456 = vmatmul.mubr.bf16.gmra.mrb[0].mxu0 %v3376
        %v3457 = vpop.f32.mrb[0].mxu0
        %v3458 = vadd.f32 0.0, %v3457
        %v3459 = vpop.f32.mrb[0].mxu0
        %v3460 = vpop.f32.mrb[0].mxu0
        %v3461 = vadd.f32 0.0, %v3460
        %v3462 = vpop.f32.mrb[0].mxu0
        %3463 = vmatprep.mubr.bf16.mxu0 0
        %3464 = vmatmul.mubr.bf16.gmra.mrb[0].mxu0 %v3379
        %v3465 = vpop.f32.mrb[0].mxu0
        %v3466 = vadd.f32 0.0, %v3465
        %v3467 = vpop.f32.mrb[0].mxu0
        %v3468 = vpop.f32.mrb[0].mxu0
        %v3469 = vadd.f32 0.0, %v3468
        %v3470 = vpop.f32.mrb[0].mxu0
        %3471 = vmatprep.mubr.bf16.mxu0 0
        %3472 = vmatmul.mubr.bf16.gmra.mrb[0].mxu0 %v3382
        %v3473 = vpop.f32.mrb[0].mxu0
        %v3474 = vadd.f32 0.0, %v3473
        %v3475 = vpop.f32.mrb[0].mxu0
        %v3476 = vpop.f32.mrb[0].mxu0
        %v3477 = vadd.f32 0.0, %v3476
        %v3478 = vpop.f32.mrb[0].mxu0
        %3479 = vmatprep.mubr.bf16.mxu0 0
        %3480 = vmatmul.mubr.bf16.gmra.mrb[0].mxu0 %v3385
        %v3481 = vpop.f32.mrb[0].mxu0
        %v3482 = vadd.f32 0.0, %v3481
        %v3483 = vpop.f32.mrb[0].mxu0
        %v3484 = vpop.f32.mrb[0].mxu0
        %v3485 = vadd.f32 0.0, %v3484
        %v3486 = vpop.f32.mrb[0].mxu0
        %3487 = vmatprep.mubr.bf16.mxu0 0
        %3488 = vmatmul.mubr.bf16.gmra.mrb[0].mxu0 %v3388
        %v3489 = vpop.f32.mrb[0].mxu0
        %v3490 = vadd.f32 0.0, %v3489
        %v3491 = vpop.f32.mrb[0].mxu0
        %v3492 = vpop.f32.mrb[0].mxu0
        %v3493 = vadd.f32 0.0, %v3492
        %v3494 = vpop.f32.mrb[0].mxu0
        %3495 = vmatprep.mubr.bf16.mxu0 0
        %3496 = vmatmul.mubr.bf16.gmra.mrb[0].mxu0 %v3391
        %v3497 = vpop.f32.mrb[0].mxu0
        %v3498 = vadd.f32 0.0, %v3497
        %v3499 = vpop.f32.mrb[0].mxu0
        %v3500 = vpop.f32.mrb[0].mxu0
        %v3501 = vadd.f32 0.0, %v3500
        %v3502 = vpop.f32.mrb[0].mxu0
        %3503 = vmatprep.mubr.bf16.mxu0 0
        %3504 = vmatmul.mubr.bf16.gmra.mrb[0].mxu0 %v3394
        %v3505 = vpop.f32.mrb[0].mxu0
        %v3506 = vadd.f32 0.0, %v3505
        %v3507 = vpop.f32.mrb[0].mxu0
        %v3508 = vpop.f32.mrb[0].mxu0
        %v3509 = vadd.f32 0.0, %v3508
        %v3510 = vpop.f32.mrb[0].mxu0
        %3511 = vmatprep.mubr.bf16.mxu0 0
        %3512 = vmatmul.mubr.bf16.gmra.mrb[0].mxu0 %v3397
        %v3513 = vpop.f32.mrb[0].mxu0
        %v3514 = vadd.f32 0.0, %v3513
        %v3515 = vpop.f32.mrb[0].mxu0
        %v3516 = vpop.f32.mrb[0].mxu0
        %v3517 = vadd.f32 0.0, %v3516
        %v3518 = vpop.f32.mrb[0].mxu0
        %3519 = vmatprep.mubr.bf16.mxu0 0
        %3520 = vmatmul.mubr.bf16.gmra.mrb[0].mxu0 %v3400
        %v3521 = vpop.f32.mrb[0].mxu0
        %v3522 = vadd.f32 0.0, %v3521
        %v3523 = vpop.f32.mrb[0].mxu0
        %v3524 = vpop.f32.mrb[0].mxu0
        %v3525 = vadd.f32 0.0, %v3524
        %v3526 = vpop.f32.mrb[0].mxu0
        %3527 = vmatprep.mubr.bf16.mxu0 0
        %3528 = vmatmul.mubr.bf16.gmra.mrb[0].mxu0 %v3403
        %v3529 = vpop.f32.mrb[0].mxu0
        %v3530 = vadd.f32 0.0, %v3529
        %v3531 = vpop.f32.mrb[0].mxu0
        %v3532 = vpop.f32.mrb[0].mxu0
        %v3533 = vadd.f32 0.0, %v3532
        %v3534 = vpop.f32.mrb[0].mxu0
        %3535 = vmatprep.mubr.bf16.mxu0 0
        %3536 = vmatmul.mubr.bf16.gmra.mrb[0].mxu0 %v3406
        %v3537 = vpop.f32.mrb[0].mxu0
        %v3538 = vadd.f32 0.0, %v3537
        %v3539 = vpop.f32.mrb[0].mxu0
        %v3540 = vpop.f32.mrb[0].mxu0
        %v3541 = vadd.f32 0.0, %v3540
        %v3542 = vpop.f32.mrb[0].mxu0
        %3543 = vmatprep.mubr.bf16.mxu0 0
        %3544 = vmatmul.mubr.bf16.gmra.mrb[0].mxu0 %v3409
        %v3545 = vpop.f32.mrb[0].mxu0
        %v3546 = vadd.f32 0.0, %v3545
        %v3547 = vpop.f32.mrb[0].mxu0
        %v3548 = vpop.f32.mrb[0].mxu0
        %v3549 = vadd.f32 0.0, %v3548
        %v3550 = vpop.f32.mrb[0].mxu0
        %3551 = vmatprep.mubr.bf16.mxu0 0
        %3552 = vmatmul.mubr.bf16.gmra.mrb[0].mxu0 %v3412
        %v3553 = vpop.f32.mrb[0].mxu0
        %v3554 = vadd.f32 0.0, %v3553
        %v3555 = vpop.f32.mrb[0].mxu0
        %v3556 = vpop.f32.mrb[0].mxu0
        %v3557 = vadd.f32 0.0, %v3556
        %v3558 = vpop.f32.mrb[0].mxu0
        %3559 = vmatprep.mubr.bf16.mxu0 0
        %3560 = vmatmul.mubr.bf16.gmra.mrb[0].mxu0 %v3415
        %v3561 = vpop.f32.mrb[0].mxu0
        %v3562 = vadd.f32 0.0, %v3561
        %v3563 = vpop.f32.mrb[0].mxu0
        %v3564 = vpop.f32.mrb[0].mxu0
        %v3565 = vadd.f32 0.0, %v3564
        %v3566 = vpop.f32.mrb[0].mxu0
        %3567 = vmatprep.mubr.bf16.mxu0 0
        %3568 = vmatmul.mubr.bf16.gmra.mrb[0].mxu0 %v3418
        %v3569 = vpop.f32.mrb[0].mxu0
        %v3570 = vadd.f32 0.0, %v3569
        %v3571 = vpop.f32.mrb[0].mxu0
        %v3572 = vpop.f32.mrb[0].mxu0
        %v3573 = vadd.f32 0.0, %v3572
        %v3574 = vpop.f32.mrb[0].mxu0
        %3575 = vmatprep.mubr.bf16.mxu0 0
        %3576 = vmatmul.mubr.bf16.gmra.mrb[0].mxu0 %v3421
        %v3577 = vpop.f32.mrb[0].mxu0
        %v3578 = vadd.f32 0.0, %v3577
        %v3579 = vpop.f32.mrb[0].mxu0
        %v3580 = vpop.f32.mrb[0].mxu0
        %v3581 = vadd.f32 0.0, %v3580
        %v3582 = vpop.f32.mrb[0].mxu0
        %3583 = vdwg.mxu0
        %v3584 = vadd.f32 %v3213, %v3458
        %v3585 = vadd.f32 %v3214, %v3461
        %v3586 = vadd.f32 %v3215, %v3466
        %v3587 = vadd.f32 %v3216, %v3469
        %v3588 = vadd.f32 %v3217, %v3474
        %v3589 = vadd.f32 %v3218, %v3477
        %v3590 = vadd.f32 %v3219, %v3482
        %v3591 = vadd.f32 %v3220, %v3485
        %v3592 = vadd.f32 %v3221, %v3490
        %v3593 = vadd.f32 %v3222, %v3493
        %v3594 = vadd.f32 %v3223, %v3498
        %v3595 = vadd.f32 %v3224, %v3501
        %v3596 = vadd.f32 %v3225, %v3506
        %v3597 = vadd.f32 %v3226, %v3509
        %v3598 = vadd.f32 %v3227, %v3514
        %v3599 = vadd.f32 %v3228, %v3517
        %v3600 = vadd.f32 %v3229, %v3522
        %v3601 = vadd.f32 %v3230, %v3525
        %v3602 = vadd.f32 %v3231, %v3530
        %v3603 = vadd.f32 %v3232, %v3533
        %v3604 = vadd.f32 %v3233, %v3538
        %v3605 = vadd.f32 %v3234, %v3541
        %v3606 = vadd.f32 %v3235, %v3546
        %v3607 = vadd.f32 %v3236, %v3549
        %v3608 = vadd.f32 %v3237, %v3554
        %v3609 = vadd.f32 %v3238, %v3557
        %v3610 = vadd.f32 %v3239, %v3562
        %v3611 = vadd.f32 %v3240, %v3565
        %v3612 = vadd.f32 %v3241, %v3570
        %v3613 = vadd.f32 %v3242, %v3573
        %v3614 = vadd.f32 %v3243, %v3578
        %v3615 = vadd.f32 %v3244, %v3581
        %v3616 = vld [vmem:[%s3245] sm:$0xf]
        %v3617 = vld [vmem:[%s3245 + $0x4] sm:$0xf]
        %v3618 = vld [vmem:[%s3245 + $0x8] sm:$0x1]
        %v3619 = vld [vmem:[%s3245 + $0xc] sm:$0xf]
        %v3620 = vld [vmem:[%s3245 + $0x10] sm:$0xf]
        %v3621 = vld [vmem:[%s3245 + $0x14] sm:$0x1]
        %v3622 = vld [vmem:[%s3245 + $0x18] sm:$0xf]
        %v3623 = vld [vmem:[%s3245 + $0x1c] sm:$0xf]
        %v3624 = vld [vmem:[%s3245 + $0x20] sm:$0x1]
        %v3625 = vld [vmem:[%s3245 + $0x24] sm:$0xf]
        %v3626 = vld [vmem:[%s3245 + $0x28] sm:$0xf]
        %v3627 = vld [vmem:[%s3245 + $0x2c] sm:$0x1]
        %v3628 = vld [vmem:[%s3245 + $0x30] sm:$0xf]
        %v3629 = vld [vmem:[%s3245 + $0x34] sm:$0xf]
        %v3630 = vld [vmem:[%s3245 + $0x38] sm:$0x1]
        %v3631 = vld [vmem:[%s3245 + $0x3c] sm:$0xf]
        %v3632 = vld [vmem:[%s3245 + $0x40] sm:$0xf]
        %v3633 = vld [vmem:[%s3245 + $0x44] sm:$0x1]
        %v3634 = vld [vmem:[%s3245 + $0x48] sm:$0xf]
        %v3635 = vld [vmem:[%s3245 + $0x4c] sm:$0xf]
        %v3636 = vld [vmem:[%s3245 + $0x50] sm:$0x1]
        %v3637 = vld [vmem:[%s3245 + $0x54] sm:$0xf]
        %v3638 = vld [vmem:[%s3245 + $0x58] sm:$0xf]
        %v3639 = vld [vmem:[%s3245 + $0x5c] sm:$0x1]
        %v3640 = vld [vmem:[%s3245 + $0x60] sm:$0xf]
        %v3641 = vld [vmem:[%s3245 + $0x64] sm:$0xf]
        %v3642 = vld [vmem:[%s3245 + $0x68] sm:$0x1]
        %v3643 = vld [vmem:[%s3245 + $0x6c] sm:$0xf]
        %v3644 = vld [vmem:[%s3245 + $0x70] sm:$0xf]
        %v3645 = vld [vmem:[%s3245 + $0x74] sm:$0x1]
        %v3646 = vld [vmem:[%s3245 + $0x78] sm:$0xf]
        %v3647 = vld [vmem:[%s3245 + $0x7c] sm:$0xf]
        %v3648 = vld [vmem:[%s3245 + $0x80] sm:$0x1]
        %v3649 = vld [vmem:[%s3245 + $0x84] sm:$0xf]
        %v3650 = vld [vmem:[%s3245 + $0x88] sm:$0xf]
        %v3651 = vld [vmem:[%s3245 + $0x8c] sm:$0x1]
        %v3652 = vld [vmem:[%s3245 + $0x90] sm:$0xf]
        %v3653 = vld [vmem:[%s3245 + $0x94] sm:$0xf]
        %v3654 = vld [vmem:[%s3245 + $0x98] sm:$0x1]
        %v3655 = vld [vmem:[%s3245 + $0x9c] sm:$0xf]
        %v3656 = vld [vmem:[%s3245 + $0xa0] sm:$0xf]
        %v3657 = vld [vmem:[%s3245 + $0xa4] sm:$0x1]
        %v3658 = vld [vmem:[%s3245 + $0xa8] sm:$0xf]
        %v3659 = vld [vmem:[%s3245 + $0xac] sm:$0xf]
        %v3660 = vld [vmem:[%s3245 + $0xb0] sm:$0x1]
        %v3661 = vld [vmem:[%s3245 + $0xb4] sm:$0xf]
        %v3662 = vld [vmem:[%s3245 + $0xb8] sm:$0xf]
        %v3663 = vld [vmem:[%s3245 + $0xbc] sm:$0x1]
        %v3665 = vshrl.u32 %v3616, 16
        %v3667 = vrot.slane %v3665, 4
        %v3668 = vshll.u32 %v3616, 16
        %v3670 = vrot.slane %v3668, 5
        %v3671 = vor.u32 %v3667, %v3670
        %v3672 = vrot.slane %v3671, 4
        %v3674 = vshll.u32 %v3617, 16
        %v3676 = vrot.slane %v3674, 5
        %v3677 = vsel %vm224, %v3672, %v3676
        %v3678 = vshrl.u32 %v3617, 16
        %v3680 = vrot.slane %v3678, 4
        %v3681 = vor.u32 %v3680, %v3676
        %v3682 = vrot.slane %v3681, 4
        %v3684 = vshll.u32 %v3618, 16
        %v3686 = vrot.slane %v3684, 5
        %v3687 = vsel %vm224, %v3682, %v3686
        %v3689 = vshrl.u32 %v3619, 16
        %v3691 = vrot.slane %v3689, 4
        %v3692 = vshll.u32 %v3619, 16
        %v3694 = vrot.slane %v3692, 5
        %v3695 = vor.u32 %v3691, %v3694
        %v3696 = vrot.slane %v3695, 4
        %v3698 = vshll.u32 %v3620, 16
        %v3700 = vrot.slane %v3698, 5
        %v3701 = vsel %vm224, %v3696, %v3700
        %v3702 = vshrl.u32 %v3620, 16
        %v3704 = vrot.slane %v3702, 4
        %v3705 = vor.u32 %v3704, %v3700
        %v3706 = vrot.slane %v3705, 4
        %v3708 = vshll.u32 %v3621, 16
        %v3710 = vrot.slane %v3708, 5
        %v3711 = vsel %vm224, %v3706, %v3710
        %v3713 = vshrl.u32 %v3622, 16
        %v3715 = vrot.slane %v3713, 4
        %v3716 = vshll.u32 %v3622, 16
        %v3718 = vrot.slane %v3716, 5
        %v3719 = vor.u32 %v3715, %v3718
        %v3720 = vrot.slane %v3719, 4
        %v3722 = vshll.u32 %v3623, 16
        %v3724 = vrot.slane %v3722, 5
        %v3725 = vsel %vm224, %v3720, %v3724
        %v3726 = vshrl.u32 %v3623, 16
        %v3728 = vrot.slane %v3726, 4
        %v3729 = vor.u32 %v3728, %v3724
        %v3730 = vrot.slane %v3729, 4
        %v3732 = vshll.u32 %v3624, 16
        %v3734 = vrot.slane %v3732, 5
        %v3735 = vsel %vm224, %v3730, %v3734
        %v3737 = vshrl.u32 %v3625, 16
        %v3739 = vrot.slane %v3737, 4
        %v3740 = vshll.u32 %v3625, 16
        %v3742 = vrot.slane %v3740, 5
        %v3743 = vor.u32 %v3739, %v3742
        %v3744 = vrot.slane %v3743, 4
        %v3746 = vshll.u32 %v3626, 16
        %v3748 = vrot.slane %v3746, 5
        %v3749 = vsel %vm224, %v3744, %v3748
        %v3750 = vshrl.u32 %v3626, 16
        %v3752 = vrot.slane %v3750, 4
        %v3753 = vor.u32 %v3752, %v3748
        %v3754 = vrot.slane %v3753, 4
        %v3756 = vshll.u32 %v3627, 16
        %v3758 = vrot.slane %v3756, 5
        %v3759 = vsel %vm224, %v3754, %v3758
        %v3761 = vshrl.u32 %v3628, 16
        %v3763 = vrot.slane %v3761, 4
        %v3764 = vshll.u32 %v3628, 16
        %v3766 = vrot.slane %v3764, 5
        %v3767 = vor.u32 %v3763, %v3766
        %v3768 = vrot.slane %v3767, 4
        %v3770 = vshll.u32 %v3629, 16
        %v3772 = vrot.slane %v3770, 5
        %v3773 = vsel %vm224, %v3768, %v3772
        %v3774 = vshrl.u32 %v3629, 16
        %v3776 = vrot.slane %v3774, 4
        %v3777 = vor.u32 %v3776, %v3772
        %v3778 = vrot.slane %v3777, 4
        %v3780 = vshll.u32 %v3630, 16
        %v3782 = vrot.slane %v3780, 5
        %v3783 = vsel %vm224, %v3778, %v3782
        %v3785 = vshrl.u32 %v3631, 16
        %v3787 = vrot.slane %v3785, 4
        %v3788 = vshll.u32 %v3631, 16
        %v3790 = vrot.slane %v3788, 5
        %v3791 = vor.u32 %v3787, %v3790
        %v3792 = vrot.slane %v3791, 4
        %v3794 = vshll.u32 %v3632, 16
        %v3796 = vrot.slane %v3794, 5
        %v3797 = vsel %vm224, %v3792, %v3796
        %v3798 = vshrl.u32 %v3632, 16
        %v3800 = vrot.slane %v3798, 4
        %v3801 = vor.u32 %v3800, %v3796
        %v3802 = vrot.slane %v3801, 4
        %v3804 = vshll.u32 %v3633, 16
        %v3806 = vrot.slane %v3804, 5
        %v3807 = vsel %vm224, %v3802, %v3806
        %v3809 = vshrl.u32 %v3634, 16
        %v3811 = vrot.slane %v3809, 4
        %v3812 = vshll.u32 %v3634, 16
        %v3814 = vrot.slane %v3812, 5
        %v3815 = vor.u32 %v3811, %v3814
        %v3816 = vrot.slane %v3815, 4
        %v3818 = vshll.u32 %v3635, 16
        %v3820 = vrot.slane %v3818, 5
        %v3821 = vsel %vm224, %v3816, %v3820
        %v3822 = vshrl.u32 %v3635, 16
        %v3824 = vrot.slane %v3822, 4
        %v3825 = vor.u32 %v3824, %v3820
        %v3826 = vrot.slane %v3825, 4
        %v3828 = vshll.u32 %v3636, 16
        %v3830 = vrot.slane %v3828, 5
        %v3831 = vsel %vm224, %v3826, %v3830
        %v3833 = vshrl.u32 %v3637, 16
        %v3835 = vrot.slane %v3833, 4
        %v3836 = vshll.u32 %v3637, 16
        %v3838 = vrot.slane %v3836, 5
        %v3839 = vor.u32 %v3835, %v3838
        %v3840 = vrot.slane %v3839, 4
        %v3842 = vshll.u32 %v3638, 16
        %v3844 = vrot.slane %v3842, 5
        %v3845 = vsel %vm224, %v3840, %v3844
        %v3846 = vshrl.u32 %v3638, 16
        %v3848 = vrot.slane %v3846, 4
        %v3849 = vor.u32 %v3848, %v3844
        %v3850 = vrot.slane %v3849, 4
        %v3852 = vshll.u32 %v3639, 16
        %v3854 = vrot.slane %v3852, 5
        %v3855 = vsel %vm224, %v3850, %v3854
        %v3857 = vshrl.u32 %v3640, 16
        %v3859 = vrot.slane %v3857, 4
        %v3860 = vshll.u32 %v3640, 16
        %v3862 = vrot.slane %v3860, 5
        %v3863 = vor.u32 %v3859, %v3862
        %v3864 = vrot.slane %v3863, 4
        %v3866 = vshll.u32 %v3641, 16
        %v3868 = vrot.slane %v3866, 5
        %v3869 = vsel %vm224, %v3864, %v3868
        %v3870 = vshrl.u32 %v3641, 16
        %v3872 = vrot.slane %v3870, 4
        %v3873 = vor.u32 %v3872, %v3868
        %v3874 = vrot.slane %v3873, 4
        %v3876 = vshll.u32 %v3642, 16
        %v3878 = vrot.slane %v3876, 5
        %v3879 = vsel %vm224, %v3874, %v3878
        %v3881 = vshrl.u32 %v3643, 16
        %v3883 = vrot.slane %v3881, 4
        %v3884 = vshll.u32 %v3643, 16
        %v3886 = vrot.slane %v3884, 5
        %v3887 = vor.u32 %v3883, %v3886
        %v3888 = vrot.slane %v3887, 4
        %v3890 = vshll.u32 %v3644, 16
        %v3892 = vrot.slane %v3890, 5
        %v3893 = vsel %vm224, %v3888, %v3892
        %v3894 = vshrl.u32 %v3644, 16
        %v3896 = vrot.slane %v3894, 4
        %v3897 = vor.u32 %v3896, %v3892
        %v3898 = vrot.slane %v3897, 4
        %v3900 = vshll.u32 %v3645, 16
        %v3902 = vrot.slane %v3900, 5
        %v3903 = vsel %vm224, %v3898, %v3902
        %v3905 = vshrl.u32 %v3646, 16
        %v3907 = vrot.slane %v3905, 4
        %v3908 = vshll.u32 %v3646, 16
        %v3910 = vrot.slane %v3908, 5
        %v3911 = vor.u32 %v3907, %v3910
        %v3912 = vrot.slane %v3911, 4
        %v3914 = vshll.u32 %v3647, 16
        %v3916 = vrot.slane %v3914, 5
        %v3917 = vsel %vm224, %v3912, %v3916
        %v3918 = vshrl.u32 %v3647, 16
        %v3920 = vrot.slane %v3918, 4
        %v3921 = vor.u32 %v3920, %v3916
        %v3922 = vrot.slane %v3921, 4
        %v3924 = vshll.u32 %v3648, 16
        %v3926 = vrot.slane %v3924, 5
        %v3927 = vsel %vm224, %v3922, %v3926
        %v3929 = vshrl.u32 %v3649, 16
        %v3931 = vrot.slane %v3929, 4
        %v3932 = vshll.u32 %v3649, 16
        %v3934 = vrot.slane %v3932, 5
        %v3935 = vor.u32 %v3931, %v3934
        %v3936 = vrot.slane %v3935, 4
        %v3938 = vshll.u32 %v3650, 16
        %v3940 = vrot.slane %v3938, 5
        %v3941 = vsel %vm224, %v3936, %v3940
        %v3942 = vshrl.u32 %v3650, 16
        %v3944 = vrot.slane %v3942, 4
        %v3945 = vor.u32 %v3944, %v3940
        %v3946 = vrot.slane %v3945, 4
        %v3948 = vshll.u32 %v3651, 16
        %v3950 = vrot.slane %v3948, 5
        %v3951 = vsel %vm224, %v3946, %v3950
        %v3953 = vshrl.u32 %v3652, 16
        %v3955 = vrot.slane %v3953, 4
        %v3956 = vshll.u32 %v3652, 16
        %v3958 = vrot.slane %v3956, 5
        %v3959 = vor.u32 %v3955, %v3958
        %v3960 = vrot.slane %v3959, 4
        %v3962 = vshll.u32 %v3653, 16
        %v3964 = vrot.slane %v3962, 5
        %v3965 = vsel %vm224, %v3960, %v3964
        %v3966 = vshrl.u32 %v3653, 16
        %v3968 = vrot.slane %v3966, 4
        %v3969 = vor.u32 %v3968, %v3964
        %v3970 = vrot.slane %v3969, 4
        %v3972 = vshll.u32 %v3654, 16
        %v3974 = vrot.slane %v3972, 5
        %v3975 = vsel %vm224, %v3970, %v3974
        %v3977 = vshrl.u32 %v3655, 16
        %v3979 = vrot.slane %v3977, 4
        %v3980 = vshll.u32 %v3655, 16
        %v3982 = vrot.slane %v3980, 5
        %v3983 = vor.u32 %v3979, %v3982
        %v3984 = vrot.slane %v3983, 4
        %v3986 = vshll.u32 %v3656, 16
        %v3988 = vrot.slane %v3986, 5
        %v3989 = vsel %vm224, %v3984, %v3988
        %v3990 = vshrl.u32 %v3656, 16
        %v3992 = vrot.slane %v3990, 4
        %v3993 = vor.u32 %v3992, %v3988
        %v3994 = vrot.slane %v3993, 4
        %v3996 = vshll.u32 %v3657, 16
        %v3998 = vrot.slane %v3996, 5
        %v3999 = vsel %vm224, %v3994, %v3998
        %v4001 = vshrl.u32 %v3658, 16
        %v4003 = vrot.slane %v4001, 4
        %v4004 = vshll.u32 %v3658, 16
        %v4006 = vrot.slane %v4004, 5
        %v4007 = vor.u32 %v4003, %v4006
        %v4008 = vrot.slane %v4007, 4
        %v4010 = vshll.u32 %v3659, 16
        %v4012 = vrot.slane %v4010, 5
        %v4013 = vsel %vm224, %v4008, %v4012
        %v4014 = vshrl.u32 %v3659, 16
        %v4016 = vrot.slane %v4014, 4
        %v4017 = vor.u32 %v4016, %v4012
        %v4018 = vrot.slane %v4017, 4
        %v4020 = vshll.u32 %v3660, 16
        %v4022 = vrot.slane %v4020, 5
        %v4023 = vsel %vm224, %v4018, %v4022
        %v4025 = vshrl.u32 %v3661, 16
        %v4027 = vrot.slane %v4025, 4
        %v4028 = vshll.u32 %v3661, 16
        %v4030 = vrot.slane %v4028, 5
        %v4031 = vor.u32 %v4027, %v4030
        %v4032 = vrot.slane %v4031, 4
        %v4034 = vshll.u32 %v3662, 16
        %v4036 = vrot.slane %v4034, 5
        %v4037 = vsel %vm224, %v4032, %v4036
        %v4038 = vshrl.u32 %v3662, 16
        %v4040 = vrot.slane %v4038, 4
        %v4041 = vor.u32 %v4040, %v4036
        %v4042 = vrot.slane %v4041, 4
        %v4044 = vshll.u32 %v3663, 16
        %v4046 = vrot.slane %v4044, 5
        %v4047 = vsel %vm224, %v4042, %v4046
        %s4048 = scalar_lea.vmem %s1, 112
        %v4049 = vld [vmem:[%s4048] sm:$0xf]
        %v4050 = vld [vmem:[%s4048 + $0x4] sm:$0xf]
        %v4051 = vld [vmem:[%s4048 + $0x8] sm:$0xf]
        %v4052 = vld [vmem:[%s4048 + $0xc] sm:$0xf]
        %v4053 = vunpack.c.l.b16 %v3677
        %v4054 = vunpack.c.l.b16 %v3687
        %v4055 = vunpack.c.l.b16 %v3701
        %v4056 = vunpack.c.l.b16 %v3711
        %v4057 = vunpack.c.l.b16 %v3725
        %v4058 = vunpack.c.l.b16 %v3735
        %v4059 = vunpack.c.l.b16 %v3749
        %v4060 = vunpack.c.l.b16 %v3759
        %v4061 = vunpack.c.l.b16 %v3773
        %v4062 = vunpack.c.l.b16 %v3783
        %v4063 = vunpack.c.l.b16 %v3797
        %v4064 = vunpack.c.l.b16 %v3807
        %v4065 = vunpack.c.l.b16 %v3821
        %v4066 = vunpack.c.l.b16 %v3831
        %v4067 = vunpack.c.l.b16 %v3845
        %v4068 = vunpack.c.l.b16 %v3855
        %v4069 = vunpack.c.l.b16 %v3869
        %v4070 = vunpack.c.l.b16 %v3879
        %v4071 = vunpack.c.l.b16 %v3893
        %v4072 = vunpack.c.l.b16 %v3903
        %v4073 = vunpack.c.l.b16 %v3917
        %v4074 = vunpack.c.l.b16 %v3927
        %v4075 = vunpack.c.l.b16 %v3941
        %v4076 = vunpack.c.l.b16 %v3951
        %v4077 = vunpack.c.l.b16 %v3965
        %v4078 = vunpack.c.l.b16 %v3975
        %v4079 = vunpack.c.l.b16 %v3989
        %v4080 = vunpack.c.l.b16 %v3999
        %v4081 = vunpack.c.l.b16 %v4013
        %v4082 = vunpack.c.l.b16 %v4023
        %v4083 = vunpack.c.l.b16 %v4037
        %v4084 = vunpack.c.l.b16 %v4047
        %v4085 = vpack.c.b16 %v4054, %v4053
        %v4086 = vpack.c.b16 %v4056, %v4055
        %v4087 = vpack.c.b16 %v4058, %v4057
        %v4088 = vpack.c.b16 %v4060, %v4059
        %v4089 = vpack.c.b16 %v4062, %v4061
        %v4090 = vpack.c.b16 %v4064, %v4063
        %v4091 = vpack.c.b16 %v4066, %v4065
        %v4092 = vpack.c.b16 %v4068, %v4067
        %v4093 = vpack.c.b16 %v4070, %v4069
        %v4094 = vpack.c.b16 %v4072, %v4071
        %v4095 = vpack.c.b16 %v4074, %v4073
        %v4096 = vpack.c.b16 %v4076, %v4075
        %v4097 = vpack.c.b16 %v4078, %v4077
        %v4098 = vpack.c.b16 %v4080, %v4079
        %v4099 = vpack.c.b16 %v4082, %v4081
        %v4100 = vpack.c.b16 %v4084, %v4083
        %v4105 = vunpack.c.l.b16 %v4049
        %v4106 = vunpack.c.l.b16 %v4050
        %v4107 = vunpack.c.l.b16 %v4051
        %v4108 = vunpack.c.l.b16 %v4052
        %v4109 = vpack.c.b16 %v4106, %v4105
        %v4110 = vpack.c.b16 %v4108, %v4107
        %v4114 = vsel %vm674, %v4085, 0
        %v4117 = vsel %vm674, %v4086, 0
        %v4120 = vsel %vm674, %v4087, 0
        %v4123 = vsel %vm674, %v4088, 0
        %v4126 = vsel %vm674, %v4089, 0
        %v4129 = vsel %vm674, %v4090, 0
        %v4132 = vsel %vm674, %v4091, 0
        %v4135 = vsel %vm674, %v4092, 0
        %v4138 = vsel %vm674, %v4093, 0
        %v4141 = vsel %vm674, %v4094, 0
        %v4144 = vsel %vm674, %v4095, 0
        %v4147 = vsel %vm674, %v4096, 0
        %v4150 = vsel %vm674, %v4097, 0
        %v4153 = vsel %vm674, %v4098, 0
        %v4156 = vsel %vm674, %v4099, 0
        %v4159 = vsel %vm674, %v4100, 0
        %4161 = vmatprep.subr.bf16.mxu0 0
        %4162 = vmatpush1.bf16.msra.mxu0 %v4109
        %4163 = vmatprep.subr.bf16.mxu0 0
        %4164 = vmatpush1.bf16.msra.mxu0 %v4110
        %4165 = vmatprep.subr.bf16.mxu0 0
        %4166 = vmatpush1.bf16.msra.mxu0 0
        %4167 = vmatprep.subr.bf16.mxu0 0
        %4168 = vmatpush1.bf16.msra.mxu0 0
        %4169 = vmatprep.subr.bf16.mxu0 0
        %4170 = vmatpush1.bf16.msra.mxu0 0
        %4171 = vmatprep.subr.bf16.mxu0 0
        %4172 = vmatpush1.bf16.msra.mxu0 0
        %4173 = vmatprep.subr.bf16.mxu0 0
        %4174 = vmatpush1.bf16.msra.mxu0 0
        %4175 = vmatprep.subr.bf16.mxu0 0
        %4176 = vmatpush1.bf16.msra.mxu0 0
        %4177 = vmatprep.subr.bf16.mxu0 0
        %4178 = vmatpush1.bf16.msra.mxu0 0
        %4179 = vmatprep.subr.bf16.mxu0 0
        %4180 = vmatpush1.bf16.msra.mxu0 0
        %4181 = vmatprep.subr.bf16.mxu0 0
        %4182 = vmatpush1.bf16.msra.mxu0 0
        %4183 = vmatprep.subr.bf16.mxu0 0
        %4184 = vmatpush1.bf16.msra.mxu0 0
        %4185 = vmatprep.subr.bf16.mxu0 0
        %4186 = vmatpush1.bf16.msra.mxu0 0
        %4187 = vmatprep.subr.bf16.mxu0 0
        %4188 = vmatpush1.bf16.msra.mxu0 0
        %4189 = vmatprep.subr.bf16.mxu0 0
        %4190 = vmatpush1.bf16.msra.mxu0 0
        %4191 = vmatprep.subr.bf16.mxu0 0
        %4192 = vmatpush1.bf16.msra.mxu0 0
        %4193 = vmatprep.mubr.bf16.mxu0 0
        %4194 = vmatmul.mubr.bf16.gmra.mrb[0].mxu0 %v4114
        %v4195 = vpop.f32.mrb[0].mxu0
        %v4196 = vadd.f32 0.0, %v4195
        %v4197 = vpop.f32.mrb[0].mxu0
        %v4198 = vpop.f32.mrb[0].mxu0
        %v4199 = vadd.f32 0.0, %v4198
        %v4200 = vpop.f32.mrb[0].mxu0
        %4201 = vmatprep.mubr.bf16.mxu0 0
        %4202 = vmatmul.mubr.bf16.gmra.mrb[0].mxu0 %v4117
        %v4203 = vpop.f32.mrb[0].mxu0
        %v4204 = vadd.f32 0.0, %v4203
        %v4205 = vpop.f32.mrb[0].mxu0
        %v4206 = vpop.f32.mrb[0].mxu0
        %v4207 = vadd.f32 0.0, %v4206
        %v4208 = vpop.f32.mrb[0].mxu0
        %4209 = vmatprep.mubr.bf16.mxu0 0
        %4210 = vmatmul.mubr.bf16.gmra.mrb[0].mxu0 %v4120
        %v4211 = vpop.f32.mrb[0].mxu0
        %v4212 = vadd.f32 0.0, %v4211
        %v4213 = vpop.f32.mrb[0].mxu0
        %v4214 = vpop.f32.mrb[0].mxu0
        %v4215 = vadd.f32 0.0, %v4214
        %v4216 = vpop.f32.mrb[0].mxu0
        %4217 = vmatprep.mubr.bf16.mxu0 0
        %4218 = vmatmul.mubr.bf16.gmra.mrb[0].mxu0 %v4123
        %v4219 = vpop.f32.mrb[0].mxu0
        %v4220 = vadd.f32 0.0, %v4219
        %v4221 = vpop.f32.mrb[0].mxu0
        %v4222 = vpop.f32.mrb[0].mxu0
        %v4223 = vadd.f32 0.0, %v4222
        %v4224 = vpop.f32.mrb[0].mxu0
        %4225 = vmatprep.mubr.bf16.mxu0 0
        %4226 = vmatmul.mubr.bf16.gmra.mrb[0].mxu0 %v4126
        %v4227 = vpop.f32.mrb[0].mxu0
        %v4228 = vadd.f32 0.0, %v4227
        %v4229 = vpop.f32.mrb[0].mxu0
        %v4230 = vpop.f32.mrb[0].mxu0
        %v4231 = vadd.f32 0.0, %v4230
        %v4232 = vpop.f32.mrb[0].mxu0
        %4233 = vmatprep.mubr.bf16.mxu0 0
        %4234 = vmatmul.mubr.bf16.gmra.mrb[0].mxu0 %v4129
        %v4235 = vpop.f32.mrb[0].mxu0
        %v4236 = vadd.f32 0.0, %v4235
        %v4237 = vpop.f32.mrb[0].mxu0
        %v4238 = vpop.f32.mrb[0].mxu0
        %v4239 = vadd.f32 0.0, %v4238
        %v4240 = vpop.f32.mrb[0].mxu0
        %4241 = vmatprep.mubr.bf16.mxu0 0
        %4242 = vmatmul.mubr.bf16.gmra.mrb[0].mxu0 %v4132
        %v4243 = vpop.f32.mrb[0].mxu0
        %v4244 = vadd.f32 0.0, %v4243
        %v4245 = vpop.f32.mrb[0].mxu0
        %v4246 = vpop.f32.mrb[0].mxu0
        %v4247 = vadd.f32 0.0, %v4246
        %v4248 = vpop.f32.mrb[0].mxu0
        %4249 = vmatprep.mubr.bf16.mxu0 0
        %4250 = vmatmul.mubr.bf16.gmra.mrb[0].mxu0 %v4135
        %v4251 = vpop.f32.mrb[0].mxu0
        %v4252 = vadd.f32 0.0, %v4251
        %v4253 = vpop.f32.mrb[0].mxu0
        %v4254 = vpop.f32.mrb[0].mxu0
        %v4255 = vadd.f32 0.0, %v4254
        %v4256 = vpop.f32.mrb[0].mxu0
        %4257 = vmatprep.mubr.bf16.mxu0 0
        %4258 = vmatmul.mubr.bf16.gmra.mrb[0].mxu0 %v4138
        %v4259 = vpop.f32.mrb[0].mxu0
        %v4260 = vadd.f32 0.0, %v4259
        %v4261 = vpop.f32.mrb[0].mxu0
        %v4262 = vpop.f32.mrb[0].mxu0
        %v4263 = vadd.f32 0.0, %v4262
        %v4264 = vpop.f32.mrb[0].mxu0
        %4265 = vmatprep.mubr.bf16.mxu0 0
        %4266 = vmatmul.mubr.bf16.gmra.mrb[0].mxu0 %v4141
        %v4267 = vpop.f32.mrb[0].mxu0
        %v4268 = vadd.f32 0.0, %v4267
        %v4269 = vpop.f32.mrb[0].mxu0
        %v4270 = vpop.f32.mrb[0].mxu0
        %v4271 = vadd.f32 0.0, %v4270
        %v4272 = vpop.f32.mrb[0].mxu0
        %4273 = vmatprep.mubr.bf16.mxu0 0
        %4274 = vmatmul.mubr.bf16.gmra.mrb[0].mxu0 %v4144
        %v4275 = vpop.f32.mrb[0].mxu0
        %v4276 = vadd.f32 0.0, %v4275
        %v4277 = vpop.f32.mrb[0].mxu0
        %v4278 = vpop.f32.mrb[0].mxu0
        %v4279 = vadd.f32 0.0, %v4278
        %v4280 = vpop.f32.mrb[0].mxu0
        %4281 = vmatprep.mubr.bf16.mxu0 0
        %4282 = vmatmul.mubr.bf16.gmra.mrb[0].mxu0 %v4147
        %v4283 = vpop.f32.mrb[0].mxu0
        %v4284 = vadd.f32 0.0, %v4283
        %v4285 = vpop.f32.mrb[0].mxu0
        %v4286 = vpop.f32.mrb[0].mxu0
        %v4287 = vadd.f32 0.0, %v4286
        %v4288 = vpop.f32.mrb[0].mxu0
        %4289 = vmatprep.mubr.bf16.mxu0 0
        %4290 = vmatmul.mubr.bf16.gmra.mrb[0].mxu0 %v4150
        %v4291 = vpop.f32.mrb[0].mxu0
        %v4292 = vadd.f32 0.0, %v4291
        %v4293 = vpop.f32.mrb[0].mxu0
        %v4294 = vpop.f32.mrb[0].mxu0
        %v4295 = vadd.f32 0.0, %v4294
        %v4296 = vpop.f32.mrb[0].mxu0
        %4297 = vmatprep.mubr.bf16.mxu0 0
        %4298 = vmatmul.mubr.bf16.gmra.mrb[0].mxu0 %v4153
        %v4299 = vpop.f32.mrb[0].mxu0
        %v4300 = vadd.f32 0.0, %v4299
        %v4301 = vpop.f32.mrb[0].mxu0
        %v4302 = vpop.f32.mrb[0].mxu0
        %v4303 = vadd.f32 0.0, %v4302
        %v4304 = vpop.f32.mrb[0].mxu0
        %4305 = vmatprep.mubr.bf16.mxu0 0
        %4306 = vmatmul.mubr.bf16.gmra.mrb[0].mxu0 %v4156
        %v4307 = vpop.f32.mrb[0].mxu0
        %v4308 = vadd.f32 0.0, %v4307
        %v4309 = vpop.f32.mrb[0].mxu0
        %v4310 = vpop.f32.mrb[0].mxu0
        %v4311 = vadd.f32 0.0, %v4310
        %v4312 = vpop.f32.mrb[0].mxu0
        %4313 = vmatprep.mubr.bf16.mxu0 0
        %4314 = vmatmul.mubr.bf16.gmra.mrb[0].mxu0 %v4159
        %v4315 = vpop.f32.mrb[0].mxu0
        %v4316 = vadd.f32 0.0, %v4315
        %v4317 = vpop.f32.mrb[0].mxu0
        %v4318 = vpop.f32.mrb[0].mxu0
        %v4319 = vadd.f32 0.0, %v4318
        %v4320 = vpop.f32.mrb[0].mxu0
        %4321 = vdwg.mxu0
        %v4322 = vadd.f32 %v3584, %v4196
        %v4323 = vadd.f32 %v3585, %v4199
        %v4324 = vadd.f32 %v3586, %v4204
        %v4325 = vadd.f32 %v3587, %v4207
        %v4326 = vadd.f32 %v3588, %v4212
        %v4327 = vadd.f32 %v3589, %v4215
        %v4328 = vadd.f32 %v3590, %v4220
        %v4329 = vadd.f32 %v3591, %v4223
        %v4330 = vadd.f32 %v3592, %v4228
        %v4331 = vadd.f32 %v3593, %v4231
        %v4332 = vadd.f32 %v3594, %v4236
        %v4333 = vadd.f32 %v3595, %v4239
        %v4334 = vadd.f32 %v3596, %v4244
        %v4335 = vadd.f32 %v3597, %v4247
        %v4336 = vadd.f32 %v3598, %v4252
        %v4337 = vadd.f32 %v3599, %v4255
        %v4338 = vadd.f32 %v3600, %v4260
        %v4339 = vadd.f32 %v3601, %v4263
        %v4340 = vadd.f32 %v3602, %v4268
        %v4341 = vadd.f32 %v3603, %v4271
        %v4342 = vadd.f32 %v3604, %v4276
        %v4343 = vadd.f32 %v3605, %v4279
        %v4344 = vadd.f32 %v3606, %v4284
        %v4345 = vadd.f32 %v3607, %v4287
        %v4346 = vadd.f32 %v3608, %v4292
        %v4347 = vadd.f32 %v3609, %v4295
        %v4348 = vadd.f32 %v3610, %v4300
        %v4349 = vadd.f32 %v3611, %v4303
        %v4350 = vadd.f32 %v3612, %v4308
        %v4351 = vadd.f32 %v3613, %v4311
        %v4352 = vadd.f32 %v3614, %v4316
        %v4353 = vadd.f32 %v3615, %v4319
        %v4354 = vld [vmem:[%s3245] sm:$0xe]
        %v4355 = vld [vmem:[%s3245 + $0xc] sm:$0xe]
        %v4356 = vld [vmem:[%s3245 + $0x18] sm:$0xe]
        %v4357 = vld [vmem:[%s3245 + $0x24] sm:$0xe]
        %v4358 = vld [vmem:[%s3245 + $0x30] sm:$0xe]
        %v4359 = vld [vmem:[%s3245 + $0x3c] sm:$0xe]
        %v4360 = vld [vmem:[%s3245 + $0x48] sm:$0xe]
        %v4361 = vld [vmem:[%s3245 + $0x54] sm:$0xe]
        %v4362 = vld [vmem:[%s3245 + $0x60] sm:$0xe]
        %v4363 = vld [vmem:[%s3245 + $0x6c] sm:$0xe]
        %v4364 = vld [vmem:[%s3245 + $0x78] sm:$0xe]
        %v4365 = vld [vmem:[%s3245 + $0x84] sm:$0xe]
        %v4366 = vld [vmem:[%s3245 + $0x90] sm:$0xe]
        %v4367 = vld [vmem:[%s3245 + $0x9c] sm:$0xe]
        %v4368 = vld [vmem:[%s3245 + $0xa8] sm:$0xe]
        %v4369 = vld [vmem:[%s3245 + $0xb4] sm:$0xe]
        %v4418 = vrot.slane %v4354, 5
        %v4419 = vrot.slane %v4418, 4
        %v4420 = vrot.slane %v3617, 5
        %v4421 = vsel %vm1235, %v4419, %v4420
        %v4422 = vrot.slane %v4420, 4
        %v4423 = vrot.slane %v3618, 5
        %v4424 = vsel %vm1235, %v4422, %v4423
        %v4425 = vrot.slane %v4355, 5
        %v4426 = vrot.slane %v4425, 4
        %v4427 = vrot.slane %v3620, 5
        %v4428 = vsel %vm1235, %v4426, %v4427
        %v4429 = vrot.slane %v4427, 4
        %v4430 = vrot.slane %v3621, 5
        %v4431 = vsel %vm1235, %v4429, %v4430
        %v4432 = vrot.slane %v4356, 5
        %v4433 = vrot.slane %v4432, 4
        %v4434 = vrot.slane %v3623, 5
        %v4435 = vsel %vm1235, %v4433, %v4434
        %v4436 = vrot.slane %v4434, 4
        %v4437 = vrot.slane %v3624, 5
        %v4438 = vsel %vm1235, %v4436, %v4437
        %v4439 = vrot.slane %v4357, 5
        %v4440 = vrot.slane %v4439, 4
        %v4441 = vrot.slane %v3626, 5
        %v4442 = vsel %vm1235, %v4440, %v4441
        %v4443 = vrot.slane %v4441, 4
        %v4444 = vrot.slane %v3627, 5
        %v4445 = vsel %vm1235, %v4443, %v4444
        %v4446 = vrot.slane %v4358, 5
        %v4447 = vrot.slane %v4446, 4
        %v4448 = vrot.slane %v3629, 5
        %v4449 = vsel %vm1235, %v4447, %v4448
        %v4450 = vrot.slane %v4448, 4
        %v4451 = vrot.slane %v3630, 5
        %v4452 = vsel %vm1235, %v4450, %v4451
        %v4453 = vrot.slane %v4359, 5
        %v4454 = vrot.slane %v4453, 4
        %v4455 = vrot.slane %v3632, 5
        %v4456 = vsel %vm1235, %v4454, %v4455
        %v4457 = vrot.slane %v4455, 4
        %v4458 = vrot.slane %v3633, 5
        %v4459 = vsel %vm1235, %v4457, %v4458
        %v4460 = vrot.slane %v4360, 5
        %v4461 = vrot.slane %v4460, 4
        %v4462 = vrot.slane %v3635, 5
        %v4463 = vsel %vm1235, %v4461, %v4462
        %v4464 = vrot.slane %v4462, 4
        %v4465 = vrot.slane %v3636, 5
        %v4466 = vsel %vm1235, %v4464, %v4465
        %v4467 = vrot.slane %v4361, 5
        %v4468 = vrot.slane %v4467, 4
        %v4469 = vrot.slane %v3638, 5
        %v4470 = vsel %vm1235, %v4468, %v4469
        %v4471 = vrot.slane %v4469, 4
        %v4472 = vrot.slane %v3639, 5
        %v4473 = vsel %vm1235, %v4471, %v4472
        %v4474 = vrot.slane %v4362, 5
        %v4475 = vrot.slane %v4474, 4
        %v4476 = vrot.slane %v3641, 5
        %v4477 = vsel %vm1235, %v4475, %v4476
        %v4478 = vrot.slane %v4476, 4
        %v4479 = vrot.slane %v3642, 5
        %v4480 = vsel %vm1235, %v4478, %v4479
        %v4481 = vrot.slane %v4363, 5
        %v4482 = vrot.slane %v4481, 4
        %v4483 = vrot.slane %v3644, 5
        %v4484 = vsel %vm1235, %v4482, %v4483
        %v4485 = vrot.slane %v4483, 4
        %v4486 = vrot.slane %v3645, 5
        %v4487 = vsel %vm1235, %v4485, %v4486
        %v4488 = vrot.slane %v4364, 5
        %v4489 = vrot.slane %v4488, 4
        %v4490 = vrot.slane %v3647, 5
        %v4491 = vsel %vm1235, %v4489, %v4490
        %v4492 = vrot.slane %v4490, 4
        %v4493 = vrot.slane %v3648, 5
        %v4494 = vsel %vm1235, %v4492, %v4493
        %v4495 = vrot.slane %v4365, 5
        %v4496 = vrot.slane %v4495, 4
        %v4497 = vrot.slane %v3650, 5
        %v4498 = vsel %vm1235, %v4496, %v4497
        %v4499 = vrot.slane %v4497, 4
        %v4500 = vrot.slane %v3651, 5
        %v4501 = vsel %vm1235, %v4499, %v4500
        %v4502 = vrot.slane %v4366, 5
        %v4503 = vrot.slane %v4502, 4
        %v4504 = vrot.slane %v3653, 5
        %v4505 = vsel %vm1235, %v4503, %v4504
        %v4506 = vrot.slane %v4504, 4
        %v4507 = vrot.slane %v3654, 5
        %v4508 = vsel %vm1235, %v4506, %v4507
        %v4509 = vrot.slane %v4367, 5
        %v4510 = vrot.slane %v4509, 4
        %v4511 = vrot.slane %v3656, 5
        %v4512 = vsel %vm1235, %v4510, %v4511
        %v4513 = vrot.slane %v4511, 4
        %v4514 = vrot.slane %v3657, 5
        %v4515 = vsel %vm1235, %v4513, %v4514
        %v4516 = vrot.slane %v4368, 5
        %v4517 = vrot.slane %v4516, 4
        %v4518 = vrot.slane %v3659, 5
        %v4519 = vsel %vm1235, %v4517, %v4518
        %v4520 = vrot.slane %v4518, 4
        %v4521 = vrot.slane %v3660, 5
        %v4522 = vsel %vm1235, %v4520, %v4521
        %v4523 = vrot.slane %v4369, 5
        %v4524 = vrot.slane %v4523, 4
        %v4525 = vrot.slane %v3662, 5
        %v4526 = vsel %vm1235, %v4524, %v4525
        %v4527 = vrot.slane %v4525, 4
        %v4528 = vrot.slane %v3663, 5
        %v4529 = vsel %vm1235, %v4527, %v4528
        %s4530 = scalar_lea.vmem %s1, 128
        %v4531 = vld [vmem:[%s4530] sm:$0xf]
        %v4532 = vld [vmem:[%s4530 + $0x4] sm:$0xf]
        %v4533 = vld [vmem:[%s4530 + $0x8] sm:$0xf]
        %v4534 = vld [vmem:[%s4530 + $0xc] sm:$0xf]
        %v4535 = vunpack.c.l.b16 %v4421
        %v4536 = vunpack.c.l.b16 %v4424
        %v4537 = vunpack.c.l.b16 %v4428
        %v4538 = vunpack.c.l.b16 %v4431
        %v4539 = vunpack.c.l.b16 %v4435
        %v4540 = vunpack.c.l.b16 %v4438
        %v4541 = vunpack.c.l.b16 %v4442
        %v4542 = vunpack.c.l.b16 %v4445
        %v4543 = vunpack.c.l.b16 %v4449
        %v4544 = vunpack.c.l.b16 %v4452
        %v4545 = vunpack.c.l.b16 %v4456
        %v4546 = vunpack.c.l.b16 %v4459
        %v4547 = vunpack.c.l.b16 %v4463
        %v4548 = vunpack.c.l.b16 %v4466
        %v4549 = vunpack.c.l.b16 %v4470
        %v4550 = vunpack.c.l.b16 %v4473
        %v4551 = vunpack.c.l.b16 %v4477
        %v4552 = vunpack.c.l.b16 %v4480
        %v4553 = vunpack.c.l.b16 %v4484
        %v4554 = vunpack.c.l.b16 %v4487
        %v4555 = vunpack.c.l.b16 %v4491
        %v4556 = vunpack.c.l.b16 %v4494
        %v4557 = vunpack.c.l.b16 %v4498
        %v4558 = vunpack.c.l.b16 %v4501
        %v4559 = vunpack.c.l.b16 %v4505
        %v4560 = vunpack.c.l.b16 %v4508
        %v4561 = vunpack.c.l.b16 %v4512
        %v4562 = vunpack.c.l.b16 %v4515
        %v4563 = vunpack.c.l.b16 %v4519
        %v4564 = vunpack.c.l.b16 %v4522
        %v4565 = vunpack.c.l.b16 %v4526
        %v4566 = vunpack.c.l.b16 %v4529
        %v4567 = vpack.c.b16 %v4536, %v4535
        %v4568 = vpack.c.b16 %v4538, %v4537
        %v4569 = vpack.c.b16 %v4540, %v4539
        %v4570 = vpack.c.b16 %v4542, %v4541
        %v4571 = vpack.c.b16 %v4544, %v4543
        %v4572 = vpack.c.b16 %v4546, %v4545
        %v4573 = vpack.c.b16 %v4548, %v4547
        %v4574 = vpack.c.b16 %v4550, %v4549
        %v4575 = vpack.c.b16 %v4552, %v4551
        %v4576 = vpack.c.b16 %v4554, %v4553
        %v4577 = vpack.c.b16 %v4556, %v4555
        %v4578 = vpack.c.b16 %v4558, %v4557
        %v4579 = vpack.c.b16 %v4560, %v4559
        %v4580 = vpack.c.b16 %v4562, %v4561
        %v4581 = vpack.c.b16 %v4564, %v4563
        %v4582 = vpack.c.b16 %v4566, %v4565
        %v4587 = vunpack.c.l.b16 %v4531
        %v4588 = vunpack.c.l.b16 %v4532
        %v4589 = vunpack.c.l.b16 %v4533
        %v4590 = vunpack.c.l.b16 %v4534
        %v4591 = vpack.c.b16 %v4588, %v4587
        %v4592 = vpack.c.b16 %v4590, %v4589
        %v4596 = vsel %vm674, %v4567, 0
        %v4599 = vsel %vm674, %v4568, 0
        %v4602 = vsel %vm674, %v4569, 0
        %v4605 = vsel %vm674, %v4570, 0
        %v4608 = vsel %vm674, %v4571, 0
        %v4611 = vsel %vm674, %v4572, 0
        %v4614 = vsel %vm674, %v4573, 0
        %v4617 = vsel %vm674, %v4574, 0
        %v4620 = vsel %vm674, %v4575, 0
        %v4623 = vsel %vm674, %v4576, 0
        %v4626 = vsel %vm674, %v4577, 0
        %v4629 = vsel %vm674, %v4578, 0
        %v4632 = vsel %vm674, %v4579, 0
        %v4635 = vsel %vm674, %v4580, 0
        %v4638 = vsel %vm674, %v4581, 0
        %v4641 = vsel %vm674, %v4582, 0
        %4643 = vmatprep.subr.bf16.mxu0 0
        %4644 = vmatpush1.bf16.msra.mxu0 %v4591
        %4645 = vmatprep.subr.bf16.mxu0 0
        %4646 = vmatpush1.bf16.msra.mxu0 %v4592
        %4647 = vmatprep.subr.bf16.mxu0 0
        %4648 = vmatpush1.bf16.msra.mxu0 0
        %4649 = vmatprep.subr.bf16.mxu0 0
        %4650 = vmatpush1.bf16.msra.mxu0 0
        %4651 = vmatprep.subr.bf16.mxu0 0
        %4652 = vmatpush1.bf16.msra.mxu0 0
        %4653 = vmatprep.subr.bf16.mxu0 0
        %4654 = vmatpush1.bf16.msra.mxu0 0
        %4655 = vmatprep.subr.bf16.mxu0 0
        %4656 = vmatpush1.bf16.msra.mxu0 0
        %4657 = vmatprep.subr.bf16.mxu0 0
        %4658 = vmatpush1.bf16.msra.mxu0 0
        %4659 = vmatprep.subr.bf16.mxu0 0
        %4660 = vmatpush1.bf16.msra.mxu0 0
        %4661 = vmatprep.subr.bf16.mxu0 0
        %4662 = vmatpush1.bf16.msra.mxu0 0
        %4663 = vmatprep.subr.bf16.mxu0 0
        %4664 = vmatpush1.bf16.msra.mxu0 0
        %4665 = vmatprep.subr.bf16.mxu0 0
        %4666 = vmatpush1.bf16.msra.mxu0 0
        %4667 = vmatprep.subr.bf16.mxu0 0
        %4668 = vmatpush1.bf16.msra.mxu0 0
        %4669 = vmatprep.subr.bf16.mxu0 0
        %4670 = vmatpush1.bf16.msra.mxu0 0
        %4671 = vmatprep.subr.bf16.mxu0 0
        %4672 = vmatpush1.bf16.msra.mxu0 0
        %4673 = vmatprep.subr.bf16.mxu0 0
        %4674 = vmatpush1.bf16.msra.mxu0 0
        %4675 = vmatprep.mubr.bf16.mxu0 0
        %4676 = vmatmul.mubr.bf16.gmra.mrb[0].mxu0 %v4596
        %v4677 = vpop.f32.mrb[0].mxu0
        %v4678 = vadd.f32 0.0, %v4677
        %v4679 = vpop.f32.mrb[0].mxu0
        %v4680 = vpop.f32.mrb[0].mxu0
        %v4681 = vadd.f32 0.0, %v4680
        %v4682 = vpop.f32.mrb[0].mxu0
        %4683 = vmatprep.mubr.bf16.mxu0 0
        %4684 = vmatmul.mubr.bf16.gmra.mrb[0].mxu0 %v4599
        %v4685 = vpop.f32.mrb[0].mxu0
        %v4686 = vadd.f32 0.0, %v4685
        %v4687 = vpop.f32.mrb[0].mxu0
        %v4688 = vpop.f32.mrb[0].mxu0
        %v4689 = vadd.f32 0.0, %v4688
        %v4690 = vpop.f32.mrb[0].mxu0
        %4691 = vmatprep.mubr.bf16.mxu0 0
        %4692 = vmatmul.mubr.bf16.gmra.mrb[0].mxu0 %v4602
        %v4693 = vpop.f32.mrb[0].mxu0
        %v4694 = vadd.f32 0.0, %v4693
        %v4695 = vpop.f32.mrb[0].mxu0
        %v4696 = vpop.f32.mrb[0].mxu0
        %v4697 = vadd.f32 0.0, %v4696
        %v4698 = vpop.f32.mrb[0].mxu0
        %4699 = vmatprep.mubr.bf16.mxu0 0
        %4700 = vmatmul.mubr.bf16.gmra.mrb[0].mxu0 %v4605
        %v4701 = vpop.f32.mrb[0].mxu0
        %v4702 = vadd.f32 0.0, %v4701
        %v4703 = vpop.f32.mrb[0].mxu0
        %v4704 = vpop.f32.mrb[0].mxu0
        %v4705 = vadd.f32 0.0, %v4704
        %v4706 = vpop.f32.mrb[0].mxu0
        %4707 = vmatprep.mubr.bf16.mxu0 0
        %4708 = vmatmul.mubr.bf16.gmra.mrb[0].mxu0 %v4608
        %v4709 = vpop.f32.mrb[0].mxu0
        %v4710 = vadd.f32 0.0, %v4709
        %v4711 = vpop.f32.mrb[0].mxu0
        %v4712 = vpop.f32.mrb[0].mxu0
        %v4713 = vadd.f32 0.0, %v4712
        %v4714 = vpop.f32.mrb[0].mxu0
        %4715 = vmatprep.mubr.bf16.mxu0 0
        %4716 = vmatmul.mubr.bf16.gmra.mrb[0].mxu0 %v4611
        %v4717 = vpop.f32.mrb[0].mxu0
        %v4718 = vadd.f32 0.0, %v4717
        %v4719 = vpop.f32.mrb[0].mxu0
        %v4720 = vpop.f32.mrb[0].mxu0
        %v4721 = vadd.f32 0.0, %v4720
        %v4722 = vpop.f32.mrb[0].mxu0
        %4723 = vmatprep.mubr.bf16.mxu0 0
        %4724 = vmatmul.mubr.bf16.gmra.mrb[0].mxu0 %v4614
        %v4725 = vpop.f32.mrb[0].mxu0
        %v4726 = vadd.f32 0.0, %v4725
        %v4727 = vpop.f32.mrb[0].mxu0
        %v4728 = vpop.f32.mrb[0].mxu0
        %v4729 = vadd.f32 0.0, %v4728
        %v4730 = vpop.f32.mrb[0].mxu0
        %4731 = vmatprep.mubr.bf16.mxu0 0
        %4732 = vmatmul.mubr.bf16.gmra.mrb[0].mxu0 %v4617
        %v4733 = vpop.f32.mrb[0].mxu0
        %v4734 = vadd.f32 0.0, %v4733
        %v4735 = vpop.f32.mrb[0].mxu0
        %v4736 = vpop.f32.mrb[0].mxu0
        %v4737 = vadd.f32 0.0, %v4736
        %v4738 = vpop.f32.mrb[0].mxu0
        %4739 = vmatprep.mubr.bf16.mxu0 0
        %4740 = vmatmul.mubr.bf16.gmra.mrb[0].mxu0 %v4620
        %v4741 = vpop.f32.mrb[0].mxu0
        %v4742 = vadd.f32 0.0, %v4741
        %v4743 = vpop.f32.mrb[0].mxu0
        %v4744 = vpop.f32.mrb[0].mxu0
        %v4745 = vadd.f32 0.0, %v4744
        %v4746 = vpop.f32.mrb[0].mxu0
        %4747 = vmatprep.mubr.bf16.mxu0 0
        %4748 = vmatmul.mubr.bf16.gmra.mrb[0].mxu0 %v4623
        %v4749 = vpop.f32.mrb[0].mxu0
        %v4750 = vadd.f32 0.0, %v4749
        %v4751 = vpop.f32.mrb[0].mxu0
        %v4752 = vpop.f32.mrb[0].mxu0
        %v4753 = vadd.f32 0.0, %v4752
        %v4754 = vpop.f32.mrb[0].mxu0
        %4755 = vmatprep.mubr.bf16.mxu0 0
        %4756 = vmatmul.mubr.bf16.gmra.mrb[0].mxu0 %v4626
        %v4757 = vpop.f32.mrb[0].mxu0
        %v4758 = vadd.f32 0.0, %v4757
        %v4759 = vpop.f32.mrb[0].mxu0
        %v4760 = vpop.f32.mrb[0].mxu0
        %v4761 = vadd.f32 0.0, %v4760
        %v4762 = vpop.f32.mrb[0].mxu0
        %4763 = vmatprep.mubr.bf16.mxu0 0
        %4764 = vmatmul.mubr.bf16.gmra.mrb[0].mxu0 %v4629
        %v4765 = vpop.f32.mrb[0].mxu0
        %v4766 = vadd.f32 0.0, %v4765
        %v4767 = vpop.f32.mrb[0].mxu0
        %v4768 = vpop.f32.mrb[0].mxu0
        %v4769 = vadd.f32 0.0, %v4768
        %v4770 = vpop.f32.mrb[0].mxu0
        %4771 = vmatprep.mubr.bf16.mxu0 0
        %4772 = vmatmul.mubr.bf16.gmra.mrb[0].mxu0 %v4632
        %v4773 = vpop.f32.mrb[0].mxu0
        %v4774 = vadd.f32 0.0, %v4773
        %v4775 = vpop.f32.mrb[0].mxu0
        %v4776 = vpop.f32.mrb[0].mxu0
        %v4777 = vadd.f32 0.0, %v4776
        %v4778 = vpop.f32.mrb[0].mxu0
        %4779 = vmatprep.mubr.bf16.mxu0 0
        %4780 = vmatmul.mubr.bf16.gmra.mrb[0].mxu0 %v4635
        %v4781 = vpop.f32.mrb[0].mxu0
        %v4782 = vadd.f32 0.0, %v4781
        %v4783 = vpop.f32.mrb[0].mxu0
        %v4784 = vpop.f32.mrb[0].mxu0
        %v4785 = vadd.f32 0.0, %v4784
        %v4786 = vpop.f32.mrb[0].mxu0
        %4787 = vmatprep.mubr.bf16.mxu0 0
        %4788 = vmatmul.mubr.bf16.gmra.mrb[0].mxu0 %v4638
        %v4789 = vpop.f32.mrb[0].mxu0
        %v4790 = vadd.f32 0.0, %v4789
        %v4791 = vpop.f32.mrb[0].mxu0
        %v4792 = vpop.f32.mrb[0].mxu0
        %v4793 = vadd.f32 0.0, %v4792
        %v4794 = vpop.f32.mrb[0].mxu0
        %4795 = vmatprep.mubr.bf16.mxu0 0
        %4796 = vmatmul.mubr.bf16.gmra.mrb[0].mxu0 %v4641
        %v4797 = vpop.f32.mrb[0].mxu0
        %v4798 = vadd.f32 0.0, %v4797
        %v4799 = vpop.f32.mrb[0].mxu0
        %v4800 = vpop.f32.mrb[0].mxu0
        %v4801 = vadd.f32 0.0, %v4800
        %v4802 = vpop.f32.mrb[0].mxu0
        %4803 = vdwg.mxu0
        %v4804 = vadd.f32 %v4322, %v4678
        %v4805 = vadd.f32 %v4323, %v4681
        %v4806 = vadd.f32 %v4324, %v4686
        %v4807 = vadd.f32 %v4325, %v4689
        %v4808 = vadd.f32 %v4326, %v4694
        %v4809 = vadd.f32 %v4327, %v4697
        %v4810 = vadd.f32 %v4328, %v4702
        %v4811 = vadd.f32 %v4329, %v4705
        %v4812 = vadd.f32 %v4330, %v4710
        %v4813 = vadd.f32 %v4331, %v4713
        %v4814 = vadd.f32 %v4332, %v4718
        %v4815 = vadd.f32 %v4333, %v4721
        %v4816 = vadd.f32 %v4334, %v4726
        %v4817 = vadd.f32 %v4335, %v4729
        %v4818 = vadd.f32 %v4336, %v4734
        %v4819 = vadd.f32 %v4337, %v4737
        %v4820 = vadd.f32 %v4338, %v4742
        %v4821 = vadd.f32 %v4339, %v4745
        %v4822 = vadd.f32 %v4340, %v4750
        %v4823 = vadd.f32 %v4341, %v4753
        %v4824 = vadd.f32 %v4342, %v4758
        %v4825 = vadd.f32 %v4343, %v4761
        %v4826 = vadd.f32 %v4344, %v4766
        %v4827 = vadd.f32 %v4345, %v4769
        %v4828 = vadd.f32 %v4346, %v4774
        %v4829 = vadd.f32 %v4347, %v4777
        %v4830 = vadd.f32 %v4348, %v4782
        %v4831 = vadd.f32 %v4349, %v4785
        %v4832 = vadd.f32 %v4350, %v4790
        %v4833 = vadd.f32 %v4351, %v4793
        %v4834 = vadd.f32 %v4352, %v4798
        %v4835 = vadd.f32 %v4353, %v4801
        %v4836 = vld [vmem:[%s2] sm:$0x1]
        %vm4837 = vcmp.ge.f32.partialorder %v4804, 0.0
        %vm4838 = vcmp.ge.f32.partialorder %v4805, 0.0
        %vm4839 = vcmp.ge.f32.partialorder %v4806, 0.0
        %vm4840 = vcmp.ge.f32.partialorder %v4807, 0.0
        %vm4841 = vcmp.ge.f32.partialorder %v4808, 0.0
        %vm4842 = vcmp.ge.f32.partialorder %v4809, 0.0
        %vm4843 = vcmp.ge.f32.partialorder %v4810, 0.0
        %vm4844 = vcmp.ge.f32.partialorder %v4811, 0.0
        %vm4845 = vcmp.ge.f32.partialorder %v4812, 0.0
        %vm4846 = vcmp.ge.f32.partialorder %v4813, 0.0
        %vm4847 = vcmp.ge.f32.partialorder %v4814, 0.0
        %vm4848 = vcmp.ge.f32.partialorder %v4815, 0.0
        %vm4849 = vcmp.ge.f32.partialorder %v4816, 0.0
        %vm4850 = vcmp.ge.f32.partialorder %v4817, 0.0
        %vm4851 = vcmp.ge.f32.partialorder %v4818, 0.0
        %vm4852 = vcmp.ge.f32.partialorder %v4819, 0.0
        %vm4853 = vcmp.ge.f32.partialorder %v4820, 0.0
        %vm4854 = vcmp.ge.f32.partialorder %v4821, 0.0
        %vm4855 = vcmp.ge.f32.partialorder %v4822, 0.0
        %vm4856 = vcmp.ge.f32.partialorder %v4823, 0.0
        %vm4857 = vcmp.ge.f32.partialorder %v4824, 0.0
        %vm4858 = vcmp.ge.f32.partialorder %v4825, 0.0
        %vm4859 = vcmp.ge.f32.partialorder %v4826, 0.0
        %vm4860 = vcmp.ge.f32.partialorder %v4827, 0.0
        %vm4861 = vcmp.ge.f32.partialorder %v4828, 0.0
        %vm4862 = vcmp.ge.f32.partialorder %v4829, 0.0
        %vm4863 = vcmp.ge.f32.partialorder %v4830, 0.0
        %vm4864 = vcmp.ge.f32.partialorder %v4831, 0.0
        %vm4865 = vcmp.ge.f32.partialorder %v4832, 0.0
        %vm4866 = vcmp.ge.f32.partialorder %v4833, 0.0
        %vm4867 = vcmp.ge.f32.partialorder %v4834, 0.0
        %vm4868 = vcmp.ge.f32.partialorder %v4835, 0.0
        %v4870 = vlaneseq
        %v4871 = vshrl.u32 %v4870, 7
        %v4872 = vsub.s32 0, %v4871
        %v4873 = vrot.slane %v4836, %v4872
        %v4875 = vmul.f32 %v4873, %v4804
        %v4876 = vmul.f32 %v4873, %v4805
        %v4877 = vmul.f32 %v4873, %v4806
        %v4878 = vmul.f32 %v4873, %v4807
        %v4879 = vmul.f32 %v4873, %v4808
        %v4880 = vmul.f32 %v4873, %v4809
        %v4881 = vmul.f32 %v4873, %v4810
        %v4882 = vmul.f32 %v4873, %v4811
        %v4883 = vmul.f32 %v4873, %v4812
        %v4884 = vmul.f32 %v4873, %v4813
        %v4885 = vmul.f32 %v4873, %v4814
        %v4886 = vmul.f32 %v4873, %v4815
        %v4887 = vmul.f32 %v4873, %v4816
        %v4888 = vmul.f32 %v4873, %v4817
        %v4889 = vmul.f32 %v4873, %v4818
        %v4890 = vmul.f32 %v4873, %v4819
        %v4891 = vmul.f32 %v4873, %v4820
        %v4892 = vmul.f32 %v4873, %v4821
        %v4893 = vmul.f32 %v4873, %v4822
        %v4894 = vmul.f32 %v4873, %v4823
        %v4895 = vmul.f32 %v4873, %v4824
        %v4896 = vmul.f32 %v4873, %v4825
        %v4897 = vmul.f32 %v4873, %v4826
        %v4898 = vmul.f32 %v4873, %v4827
        %v4899 = vmul.f32 %v4873, %v4828
        %v4900 = vmul.f32 %v4873, %v4829
        %v4901 = vmul.f32 %v4873, %v4830
        %v4902 = vmul.f32 %v4873, %v4831
        %v4903 = vmul.f32 %v4873, %v4832
        %v4904 = vmul.f32 %v4873, %v4833
        %v4905 = vmul.f32 %v4873, %v4834
        %v4906 = vmul.f32 %v4873, %v4835
        %v4907 = vsel %vm4837, %v4804, %v4875
        %v4908 = vsel %vm4838, %v4805, %v4876
        %v4909 = vsel %vm4839, %v4806, %v4877
        %v4910 = vsel %vm4840, %v4807, %v4878
        %v4911 = vsel %vm4841, %v4808, %v4879
        %v4912 = vsel %vm4842, %v4809, %v4880
        %v4913 = vsel %vm4843, %v4810, %v4881
        %v4914 = vsel %vm4844, %v4811, %v4882
        %v4915 = vsel %vm4845, %v4812, %v4883
        %v4916 = vsel %vm4846, %v4813, %v4884
        %v4917 = vsel %vm4847, %v4814, %v4885
        %v4918 = vsel %vm4848, %v4815, %v4886
        %v4919 = vsel %vm4849, %v4816, %v4887
        %v4920 = vsel %vm4850, %v4817, %v4888
        %v4921 = vsel %vm4851, %v4818, %v4889
        %v4922 = vsel %vm4852, %v4819, %v4890
        %v4923 = vsel %vm4853, %v4820, %v4891
        %v4924 = vsel %vm4854, %v4821, %v4892
        %v4925 = vsel %vm4855, %v4822, %v4893
        %v4926 = vsel %vm4856, %v4823, %v4894
        %v4927 = vsel %vm4857, %v4824, %v4895
        %v4928 = vsel %vm4858, %v4825, %v4896
        %v4929 = vsel %vm4859, %v4826, %v4897
        %v4930 = vsel %vm4860, %v4827, %v4898
        %v4931 = vsel %vm4861, %v4828, %v4899
        %v4932 = vsel %vm4862, %v4829, %v4900
        %v4933 = vsel %vm4863, %v4830, %v4901
        %v4934 = vsel %vm4864, %v4831, %v4902
        %v4935 = vsel %vm4865, %v4832, %v4903
        %v4936 = vsel %vm4866, %v4833, %v4904
        %v4937 = vsel %vm4867, %v4834, %v4905
        %v4938 = vsel %vm4868, %v4835, %v4906
        %v4939 = vpack.c.bf16 %v4908, %v4907
        %v4940 = vpack.c.bf16 %v4910, %v4909
        %v4941 = vpack.c.bf16 %v4912, %v4911
        %v4942 = vpack.c.bf16 %v4914, %v4913
        %v4943 = vpack.c.bf16 %v4916, %v4915
        %v4944 = vpack.c.bf16 %v4918, %v4917
        %v4945 = vpack.c.bf16 %v4920, %v4919
        %v4946 = vpack.c.bf16 %v4922, %v4921
        %v4947 = vpack.c.bf16 %v4924, %v4923
        %v4948 = vpack.c.bf16 %v4926, %v4925
        %v4949 = vpack.c.bf16 %v4928, %v4927
        %v4950 = vpack.c.bf16 %v4930, %v4929
        %v4951 = vpack.c.bf16 %v4932, %v4931
        %v4952 = vpack.c.bf16 %v4934, %v4933
        %v4953 = vpack.c.bf16 %v4936, %v4935
        %v4954 = vpack.c.bf16 %v4938, %v4937
        %v4971 = vunpack.c.l.b16 %v4939
        %v4972 = vunpack.c.h.b16 %v4939
        %v4973 = vunpack.c.l.b16 %v4940
        %v4974 = vunpack.c.h.b16 %v4940
        %v4975 = vunpack.c.l.b16 %v4941
        %v4976 = vunpack.c.h.b16 %v4941
        %v4977 = vunpack.c.l.b16 %v4942
        %v4978 = vunpack.c.h.b16 %v4942
        %v4979 = vunpack.c.l.b16 %v4943
        %v4980 = vunpack.c.h.b16 %v4943
        %v4981 = vunpack.c.l.b16 %v4944
        %v4982 = vunpack.c.h.b16 %v4944
        %v4983 = vunpack.c.l.b16 %v4945
        %v4984 = vunpack.c.h.b16 %v4945
        %v4985 = vunpack.c.l.b16 %v4946
        %v4986 = vunpack.c.h.b16 %v4946
        %v4987 = vunpack.c.l.b16 %v4947
        %v4988 = vunpack.c.h.b16 %v4947
        %v4989 = vunpack.c.l.b16 %v4948
        %v4990 = vunpack.c.h.b16 %v4948
        %v4991 = vunpack.c.l.b16 %v4949
        %v4992 = vunpack.c.h.b16 %v4949
        %v4993 = vunpack.c.l.b16 %v4950
        %v4994 = vunpack.c.h.b16 %v4950
        %v4995 = vunpack.c.l.b16 %v4951
        %v4996 = vunpack.c.h.b16 %v4951
        %v4997 = vunpack.c.l.b16 %v4952
        %v4998 = vunpack.c.h.b16 %v4952
        %v4999 = vunpack.c.l.b16 %v4953
        %v5000 = vunpack.c.h.b16 %v4953
        %v5001 = vunpack.c.l.b16 %v4954
        %v5002 = vunpack.c.h.b16 %v4954
        %v5003 = vpack.c.b16 %v4971, %v4971
        %v5004 = vpack.c.b16 %v4972, %v4972
        %v5005 = vpack.c.b16 %v4973, %v4973
        %v5006 = vpack.c.b16 %v4974, %v4974
        %v5007 = vpack.c.b16 %v4975, %v4975
        %v5008 = vpack.c.b16 %v4976, %v4976
        %v5009 = vpack.c.b16 %v4977, %v4977
        %v5010 = vpack.c.b16 %v4978, %v4978
        %v5011 = vpack.c.b16 %v4979, %v4979
        %v5012 = vpack.c.b16 %v4980, %v4980
        %v5013 = vpack.c.b16 %v4981, %v4981
        %v5014 = vpack.c.b16 %v4982, %v4982
        %v5015 = vpack.c.b16 %v4983, %v4983
        %v5016 = vpack.c.b16 %v4984, %v4984
        %v5017 = vpack.c.b16 %v4985, %v4985
        %v5018 = vpack.c.b16 %v4986, %v4986
        %v5019 = vpack.c.b16 %v4987, %v4987
        %v5020 = vpack.c.b16 %v4988, %v4988
        %v5021 = vpack.c.b16 %v4989, %v4989
        %v5022 = vpack.c.b16 %v4990, %v4990
        %v5023 = vpack.c.b16 %v4991, %v4991
        %v5024 = vpack.c.b16 %v4992, %v4992
        %v5025 = vpack.c.b16 %v4993, %v4993
        %v5026 = vpack.c.b16 %v4994, %v4994
        %v5027 = vpack.c.b16 %v4995, %v4995
        %v5028 = vpack.c.b16 %v4996, %v4996
        %v5029 = vpack.c.b16 %v4997, %v4997
        %v5030 = vpack.c.b16 %v4998, %v4998
        %v5031 = vpack.c.b16 %v4999, %v4999
        %v5032 = vpack.c.b16 %v5000, %v5000
        %v5033 = vpack.c.b16 %v5001, %v5001
        %v5034 = vpack.c.b16 %v5002, %v5002
        %vm5067 = vcmask 519168
        %5068 = vst.msk [vmem:[%s163] sm:$0xf] %vm5067, %v5003
        %5069 = vst.msk [vmem:[%s163 + $0x4] sm:$0xf] %vm5067, %v5004
        %5070 = vst.msk [vmem:[%s163 + $0x8] sm:$0xf] %vm5067, %v5005
        %5071 = vst.msk [vmem:[%s163 + $0xc] sm:$0xf] %vm5067, %v5006
        %5072 = vst.msk [vmem:[%s163 + $0x10] sm:$0xf] %vm5067, %v5007
        %5073 = vst.msk [vmem:[%s163 + $0x14] sm:$0xf] %vm5067, %v5008
        %5074 = vst.msk [vmem:[%s163 + $0x18] sm:$0xf] %vm5067, %v5009
        %5075 = vst.msk [vmem:[%s163 + $0x1c] sm:$0xf] %vm5067, %v5010
        %5076 = vst.msk [vmem:[%s163 + $0x20] sm:$0xf] %vm5067, %v5011
        %5077 = vst.msk [vmem:[%s163 + $0x24] sm:$0xf] %vm5067, %v5012
        %5078 = vst.msk [vmem:[%s163 + $0x28] sm:$0xf] %vm5067, %v5013
        %5079 = vst.msk [vmem:[%s163 + $0x2c] sm:$0xf] %vm5067, %v5014
        %5080 = vst.msk [vmem:[%s163 + $0x30] sm:$0xf] %vm5067, %v5015
        %5081 = vst.msk [vmem:[%s163 + $0x34] sm:$0xf] %vm5067, %v5016
        %5082 = vst.msk [vmem:[%s163 + $0x38] sm:$0xf] %vm5067, %v5017
        %5083 = vst.msk [vmem:[%s163 + $0x3c] sm:$0xf] %vm5067, %v5018
        %5084 = vst.msk [vmem:[%s163 + $0x40] sm:$0xf] %vm5067, %v5019
        %5085 = vst.msk [vmem:[%s163 + $0x44] sm:$0xf] %vm5067, %v5020
        %5086 = vst.msk [vmem:[%s163 + $0x48] sm:$0xf] %vm5067, %v5021
        %5087 = vst.msk [vmem:[%s163 + $0x4c] sm:$0xf] %vm5067, %v5022
        %5088 = vst.msk [vmem:[%s163 + $0x50] sm:$0xf] %vm5067, %v5023
        %5089 = vst.msk [vmem:[%s163 + $0x54] sm:$0xf] %vm5067, %v5024
        %5090 = vst.msk [vmem:[%s163 + $0x58] sm:$0xf] %vm5067, %v5025
        %5091 = vst.msk [vmem:[%s163 + $0x5c] sm:$0xf] %vm5067, %v5026
        %5092 = vst.msk [vmem:[%s163 + $0x60] sm:$0xf] %vm5067, %v5027
        %5093 = vst.msk [vmem:[%s163 + $0x64] sm:$0xf] %vm5067, %v5028
        %5094 = vst.msk [vmem:[%s163 + $0x68] sm:$0xf] %vm5067, %v5029
        %5095 = vst.msk [vmem:[%s163 + $0x6c] sm:$0xf] %vm5067, %v5030
        %5096 = vst.msk [vmem:[%s163 + $0x70] sm:$0xf] %vm5067, %v5031
        %5097 = vst.msk [vmem:[%s163 + $0x74] sm:$0xf] %vm5067, %v5032
        %5098 = vst.msk [vmem:[%s163 + $0x78] sm:$0xf] %vm5067, %v5033
        %5099 = vst.msk [vmem:[%s163 + $0x7c] sm:$0xf] %vm5067, %v5034
        %s5100 = sand.u32 %s93, 1
        %s5101 = scalar_lea.sflag [#allocation3], %s5100
        %s5102 = sand.u32 %s93, 1
        %s5103 = smul.addr %s5102, 128
        %s5104 = scalar_lea.vmem [#allocation2], %s5103
        // Predicated region
        $region33: #{tpu_custom_call.1} parent=31 // pred_check
          %p5105 = pneg %p103
        $region34: #{tpu_custom_call.1} parent=31 // pred_check_branch
          %5107 = sbr.rel (%p5105) target = $region36
        $region35: #{tpu_custom_call.1} parent=31 // pred_region
          %s5109 = ssub.s32 2048, 2048
          %5110 = vsyncadd %s5101, %s5109
          %s5111 = smul.addr %s17, 32
          %s5112 = smul.addr %s5111, 64
          %s5113 = scalar_lea.hbm %s3, %s5112
          %s5114 = sshll.u32 %s5104, 4
          %s5115 = int_to_ptr.vmem [resolvable:$true] %s5114
          %5120 = dma.vmem_to_hbm [thread:$0]  %s5115, 2048, %s5113, %s5101, 64, 64, 4
        $region36: #{tpu_custom_call.1} parent=31 // pred_fallthru
          _
      $region32: #{tpu_custom_call.1} parent=5 // pred_fallthru
        _
      %p5121 = scmp.le.s32.totalorder 2, %s12
      // Predicated region
      $region37: #{tpu_custom_call.1} parent=5 // pred_check
        %p5122 = pneg %p5121
      $region38: #{tpu_custom_call.1} parent=5 // pred_check_branch
        %5124 = sbr.rel (%p5122) target = $region40
      $region39: #{tpu_custom_call.1} parent=5 // pred_region
        %s5125 = ssub.s32 %s12, 2
        // Predicated region
        $region41: #{tpu_custom_call.1} parent=39 // pred_check
          %p5126 = pneg %p109
        $region42: #{tpu_custom_call.1} parent=39 // pred_check_branch
          %5128 = sbr.rel (%p5126) target = $region44
        $region43: #{tpu_custom_call.1} parent=39 // pred_region
          %s5129 = sand.u32 %s94, 1
          %s5130 = scalar_lea.sflag [#allocation3], %s5129
          %s5131 = sand.u32 %s94, 1
          %s5132 = smul.addr %s5131, 128
          %s5133 = scalar_lea.vmem [#allocation2], %s5132
          %5134 = dma.done %s5130, 2048
        $region44: #{tpu_custom_call.1} parent=39 // pred_fallthru
          _
      $region40: #{tpu_custom_call.1} parent=5 // pred_fallthru
        _
    $region6: #{tpu_custom_call.1} parent=1 // loop_footer
      %s16 = sadd.s32 1, %s12
    $region7: #{tpu_custom_call.1} parent=1 // loop_footer_branch
      %11 = sbr.rel target = $region3
    $region8: #{tpu_custom_call.1} parent=1 // loop_exit
      _
    %5135 = vsyncpa [#allocation3], 1
    %s5136 = scalar_lea.sflag [#allocation3], 1
    %5137 = vsyncpa %s5136, 1

</llo_original>
